<compile_context>
chip_gen: v7x
topology: tpu7x:2x2x1
jax: 0.10.0
libtpu: 0.0.40
codegen_flags: <defaults>
</compile_context>

<pallas_src>
import numpy as np
import jax
import jax.numpy as jnp
from jax.experimental import pallas as pl
from jax.experimental.pallas import tpu as pltpu


NET_SIZE = 128                 # module always resizes to 128x128 before the net
N_COEFF = 12                   # 3x4 affine coefficients per pixel
COEFF_LANES = N_COEFF * NET_SIZE   # lane-concatenated coeff layout (12*128)


# -----------------------------------------------------------------------------
# Host-side (static-shape) bilinear helpers, align_corners=True
# -----------------------------------------------------------------------------
def _row_taps_np(out_size: int, in_size: int):
    """2-tap bilinear row indices / weights (low, high, frac)."""
    if out_size == 1 or in_size == 1:
        src = np.zeros((out_size,), np.float64)
    else:
        src = np.arange(out_size, dtype=np.float64) * ((in_size - 1) / (out_size - 1))
    lo = np.clip(np.floor(src).astype(np.int32), 0, in_size - 1)
    hi = np.clip(lo + 1, 0, in_size - 1)
    w = (src - lo).astype(np.float32)
    return lo, hi, w


def _interp_matrix_np(out_size: int, in_size: int) -> np.ndarray:
    """Row-stochastic (out_size, in_size) bilinear matrix, align_corners=True."""
    lo, hi, w = _row_taps_np(out_size, in_size)
    m = np.zeros((out_size, in_size), np.float32)
    rows = np.arange(out_size)
    np.add.at(m, (rows, lo), 1.0 - w)
    np.add.at(m, (rows, hi), w)
    return m


# -----------------------------------------------------------------------------
# Per-generation VMEM budget and tile pickers
# -----------------------------------------------------------------------------
def _vmem_limit_bytes() -> int:
    """~3/4 of physical VMEM, capped at 96 MB (v7x ~48 MB, v5e/v6e 96 MB)."""
    phys = 64 << 20
    try:
        info = pltpu.get_tpu_info()
        cap = getattr(info, "vmem_capacity_bytes", None)
        if cap:
            phys = int(cap)
    except Exception:
        pass
    return int(min(phys * 3 // 4, 96 << 20))


def _divisor_tile(n: int, align: int, cap: int) -> int:
    """Largest multiple-of-`align` divisor of n that is <= cap; else n (full)."""
    if n % align != 0:
        return n
    t = (min(cap, n) // align) * align
    while t >= align:
        if n % t == 0:
            return t
        t -= align
    return n


def _pick_b_tiles(H: int, W: int, vmem_limit: int):
    """VMEM-budget-aware (th, tw) for the fused upsample+apply kernel."""
    tw = _divisor_tile(W, 128, 1024)          # lane-dense output tiles
    budget = int(vmem_limit * 0.6)            # headroom for compiler scratch

    def fits(th: int) -> bool:
        blocks = (4 * 3 * th * tw * 4          # x + out blocks, double-buffered, f32
                  + 2 * NET_SIZE * COEFF_LANES * 2   # resident coeff (bf16)
                  + 2 * th * NET_SIZE * 2            # wh tile (bf16)
                  + 2 * NET_SIZE * tw * 2)           # wwT tile (bf16)
        temps = th * COEFF_LANES * 6 + 2 * th * tw * 4   # stage-1 rows + planes
        return blocks + temps <= budget

    if H % 8 != 0:
        # Odd heights can't be row-tiled (sublane constraint); use full extent.
        return H, tw
    t = (min(H, 1024) // 8) * 8
    chosen = 8
    while t >= 8:
        if H % t == 0 and fits(t):
            chosen = t
            break
        t -= 8
    return chosen, tw


# -----------------------------------------------------------------------------
# Kernel A: fused (column downsample W->128) + (1x1 conv 3 -> 12 "net" proxy)
#   Input is the row-gathered/blended (B,3,128,W) bf16 tensor; grid=(B, W tiles)
#   with the W tiles as the only (small) reduction.  One merged-channel matmul
#   per step; finalize applies the 1x1 net with SMEM scalar weights and writes
#   the coeffs lane-concatenated as (B, 128, 12*128) bf16.
# -----------------------------------------------------------------------------
def _down_net_kernel(x_ref, wwT_ref, wb_ref, o_ref, acc_ref):
    c = pl.program_id(1)

    @pl.when(c == 0)
    def _init():
        acc_ref[...] = jnp.zeros_like(acc_ref)

    xf = x_ref[0].reshape(3 * NET_SIZE, -1)                 # (384, tw) bf16
    mid = jnp.dot(xf, wwT_ref[...],
                  preferred_element_type=jnp.float32)       # (384, 128) f32
    acc_ref[...] += mid.reshape(3, NET_SIZE, NET_SIZE)

    @pl.when(c == pl.num_programs(1) - 1)
    def _finalize():
        a0 = acc_ref[0]
        a1 = acc_ref[1]
        a2 = acc_ref[2]
        for j in range(N_COEFF):                            # unrolled VPU FMAs
            plane = (wb_ref[j, 0] * a0 + wb_ref[j, 1] * a1
                     + wb_ref[j, 2] * a2 + wb_ref[j, 3])
            o_ref[0, :, j * NET_SIZE:(j + 1) * NET_SIZE] = plane.astype(o_ref.dtype)


def down_and_net(x, wb, vmem_limit):
    """x: (B,3,H,W) f32, wb: (12,4) [w | bias] -> coeff_cat: (B,128,1536) bf16."""
    B, C, H, W = x.shape
    assert C == 3

    # Sparse 2-tap row downsample (H -> 128): gather+blend only the contributing
    # rows (non-rectangular access, so done as an XLA gather feeding the kernel).
    lo, hi, wr = _row_taps_np(NET_SIZE, H)
    wrj = jnp.asarray(wr)[None, None, :, None]
    x_rows = ((1.0 - wrj) * x[:, :, lo, :]
              + wrj * x[:, :, hi, :]).astype(jnp.bfloat16)            # (B,3,128,W)

    wwT_down = jnp.asarray(_interp_matrix_np(NET_SIZE, W).T,
                           dtype=jnp.bfloat16)                        # (W, 128)

    tw = _divisor_tile(W, 128, 2048)
    n_wc = W // tw

    flops = int(B * 2 * 3 * NET_SIZE * W * NET_SIZE
                + B * N_COEFF * NET_SIZE * NET_SIZE * 7)
    bytes_accessed = int(B * 3 * NET_SIZE * W * 2 + W * NET_SIZE * 2
                         + B * NET_SIZE * COEFF_LANES * 2 + N_COEFF * 4 * 4)

    return pl.pallas_call(
        _down_net_kernel,
        out_shape=jax.ShapeDtypeStruct((B, NET_SIZE, COEFF_LANES), jnp.bfloat16),
        grid=(B, n_wc),
        in_specs=[
            pl.BlockSpec((1, 3, NET_SIZE, tw), lambda b, c: (b, 0, 0, c)),
            pl.BlockSpec((tw, NET_SIZE), lambda b, c: (c, 0)),
            pl.BlockSpec(memory_space=pltpu.MemorySpace.SMEM),   # (12,4) scalars
        ],
        out_specs=pl.BlockSpec((1, NET_SIZE, COEFF_LANES), lambda b, c: (b, 0, 0)),
        scratch_shapes=[pltpu.VMEM((3, NET_SIZE, NET_SIZE), jnp.float32)],
        compiler_params=pltpu.CompilerParams(
            dimension_semantics=("parallel", "arbitrary"),
            vmem_limit_bytes=vmem_limit),
        cost_estimate=pl.CostEstimate(flops=flops, transcendentals=0,
                                      bytes_accessed=bytes_accessed),
    )(x_rows, wwT_down, wb)


# -----------------------------------------------------------------------------
# Kernel B: fused (coeff upsample to HxW) + ApplyCoeffs
#   grid = (B, H row tiles, W col tiles), all parallel.
#   Stage 1: one (th,128)@(128,1536) bf16 matmul upsamples all 12 coeff planes
#            along H (coeff block is VMEM-resident per batch).
#   Stage 2: per plane, (th,128)@(128,tw) bf16 matmul + unrolled f32 VPU FMAs.
# -----------------------------------------------------------------------------
def _up_apply_kernel(coeff_ref, wh_ref, wwT_ref, x_ref, o_ref):
    rows = jnp.dot(wh_ref[...], coeff_ref[0],
                   preferred_element_type=jnp.float32).astype(jnp.bfloat16)  # (th,1536)
    wwT = wwT_ref[...]                                                       # (128,tw)

    def up(c):
        return jnp.dot(rows[:, c * NET_SIZE:(c + 1) * NET_SIZE], wwT,
                       preferred_element_type=jnp.float32)                   # (th,tw)

    for j in range(3):
        acc = up(4 * j + 3)                                  # bias plane
        for k in range(3):
            acc = acc + x_ref[0, k] * up(4 * j + k)          # unrolled f32 FMAs
        o_ref[0, j] = acc


def upsample_and_apply(coeff_cat, x, vmem_limit):
    """coeff_cat: (B,128,1536) bf16, x: (B,3,H,W) f32  ->  (B,3,H,W) f32."""
    B, _, H, W = x.shape
    th, tw = _pick_b_tiles(H, W, vmem_limit)
    n_rh, n_wc = H // th, W // tw

    wh_up = jnp.asarray(_interp_matrix_np(H, NET_SIZE), dtype=jnp.bfloat16)     # (H,128)
    wwT_up = jnp.asarray(_interp_matrix_np(W, NET_SIZE).T, dtype=jnp.bfloat16)  # (128,W)

    flops = int(B * n_rh * n_wc * 2 * th * NET_SIZE * COEFF_LANES
                + B * 2 * H * NET_SIZE * N_COEFF * W
                + B * 21 * H * W)
    bytes_accessed = int(2 * B * 3 * H * W * 4
                         + B * n_rh * n_wc * NET_SIZE * COEFF_LANES * 2
                         + n_wc * H * NET_SIZE * 2 + n_rh * NET_SIZE * W * 2)

    return pl.pallas_call(
        _up_apply_kernel,
        out_shape=jax.ShapeDtypeStruct((B, 3, H, W), jnp.float32),
        grid=(B, n_rh, n_wc),
        in_specs=[
            pl.BlockSpec((1, NET_SIZE, COEFF_LANES),
                         lambda b, i, j: (b, 0, 0)),     # resident across tiles
            pl.BlockSpec((th, NET_SIZE), lambda b, i, j: (i, 0)),
            pl.BlockSpec((NET_SIZE, tw), lambda b, i, j: (0, j)),
            pl.BlockSpec((1, 3, th, tw), lambda b, i, j: (b, 0, i, j)),
        ],
        out_specs=pl.BlockSpec((1, 3, th, tw), lambda b, i, j: (b, 0, i, j)),
        compiler_params=pltpu.CompilerParams(
            dimension_semantics=("parallel", "parallel", "parallel"),
            vmem_limit_bytes=vmem_limit),
        cost_estimate=pl.CostEstimate(flops=flops, transcendentals=0,
                                      bytes_accessed=bytes_accessed),
    )(coeff_cat, wh_up, wwT_up, x)


# -----------------------------------------------------------------------------
# Zero_Net forward
# -----------------------------------------------------------------------------
@jax.jit
def zero_net_forward(x, wb):
    """x: (B, 3, H, W) float32 NCHW; wb: (12, 4) net weights|bias."""
    vmem_limit = _vmem_limit_bytes()
    coeff_cat = down_and_net(x, wb, vmem_limit)      # fused resize->128 + 1x1 "net"
    return upsample_and_apply(coeff_cat, x, vmem_limit)  # fused upsample + ApplyCoeffs


# -----------------------------------------------------------------------------
# Pure-JAX f32 reference (same 1x1-conv UNet proxy) for a correctness check
# -----------------------------------------------------------------------------
def _reference_forward(x, w, b):
    B, _, H, W = x.shape
    wh_d = jnp.asarray(_interp_matrix_np(NET_SIZE, H))
    ww_d = jnp.asarray(_interp_matrix_np(NET_SIZE, W))
    x128 = jnp.einsum('oh,bchw,pw->bcop', wh_d, x, ww_d)
    coeff128 = jnp.einsum('jc,bchw->bjhw', w, x128) + b[None, :, None, None]
    wh_u = jnp.asarray(_interp_matrix_np(H, NET_SIZE))
    ww_u = jnp.asarray(_interp_matrix_np(W, NET_SIZE))
    coeff = jnp.einsum('oh,bjhw,pw->bjop', wh_u, coeff128, ww_u)
    r = jnp.sum(x * coeff[:, 0:3], axis=1, keepdims=True) + coeff[:, 3:4]
    g = jnp.sum(x * coeff[:, 4:7], axis=1, keepdims=True) + coeff[:, 7:8]
    bl = jnp.sum(x * coeff[:, 8:11], axis=1, keepdims=True) + coeff[:, 11:12]
    return jnp.concatenate([r, g, bl], axis=1)


if __name__ == "__main__":
    key = jax.random.PRNGKey(0)
    kx, kw, kb = jax.random.split(key, 3)
    x = jax.random.uniform(kx, (2, 3, 16, 16), jnp.float32)      # small NCHW input
    w = jax.random.normal(kw, (N_COEFF, 3), jnp.float32) * 0.1   # 1x1 conv 3->12
    b = jax.random.normal(kb, (N_COEFF,), jnp.float32) * 0.01
    wb = jnp.concatenate([w, b[:, None]], axis=1)                # (12, 4) SMEM table

    out = zero_net_forward(x, wb)
    jax.block_until_ready(out)

    assert out.shape == (2, 3, 16, 16), out.shape
    assert out.dtype == jnp.float32
    ref = _reference_forward(x, w, b)
    # bf16 matmul operands (f32 accumulation) -> relaxed tolerance vs f32 ref.
    err = float(jnp.max(jnp.abs(out - ref)))
    assert jnp.allclose(out, ref, atol=5e-2, rtol=5e-2), err
    print("KERNEL_OK")
</pallas_src>

<mosaic_0001>
module attributes {stable_mosaic.version = 11 : i64} {
  func.func @_down_net_kernel(%arg0: i32, %arg1: i32, %arg2: memref<1x3x128x16xbf16, #tpu.memory_space<vmem>>, %arg3: memref<16x128xbf16, #tpu.memory_space<vmem>>, %arg4: memref<12x4xf32, #tpu.memory_space<smem>>, %arg5: memref<1x128x1536xbf16, #tpu.memory_space<vmem>>, %arg6: memref<3x128x128xf32, #tpu.memory_space<vmem>>) attributes {dimension_semantics = [#tpu.dimension_semantics<parallel>, #tpu.dimension_semantics<arbitrary>], iteration_bounds = array<i64: 2, 1>, scalar_prefetch = 0 : i64, scratch_operands = 1 : i64, tpu.core_type = #tpu.core_type<tc>, window_params = [{transform_indices = @transform_0, window_bounds = array<i64: 1, 3, 128, 16>}, {transform_indices = @transform_1, window_bounds = array<i64: 16, 128>}, {transform_indices = @transform_2, window_bounds = array<i64: 12, 4>}, {transform_indices = @transform_3, window_bounds = array<i64: 1, 128, 1536>}]} {
    %c0_i32 = arith.constant 0 : i32
    %0 = arith.cmpi eq, %arg1, %c0_i32 : i32
    %1 = arith.extui %0 : i1 to i32
    %c0_i32_0 = arith.constant 0 : i32
    %2 = arith.cmpi ne, %1, %c0_i32_0 : i32
    scf.if %2 {
      %cst_14 = arith.constant 0.000000e+00 : f32
      %15 = vector.broadcast %cst_14 : f32 to vector<3x128x128xf32>
      %c0_15 = arith.constant 0 : index
      %c0_16 = arith.constant 0 : index
      %c0_17 = arith.constant 0 : index
      %16 = vector.load %arg6[%c0_15, %c0_16, %c0_17] : memref<3x128x128xf32, #tpu.memory_space<vmem>>, vector<3x128x128xf32>
      tpu.vector_store %arg6[%c0_15, %c0_16, %c0_17], %15 {strides = array<i32>} : memref<3x128x128xf32, #tpu.memory_space<vmem>>, vector<3x128x128xf32>,
    } else {
    }
    %c0 = arith.constant 0 : index
    %c0_1 = arith.constant 0 : index
    %c0_2 = arith.constant 0 : index
    %c0_3 = arith.constant 0 : index
    %3 = vector.load %arg2[%c0, %c0_1, %c0_2, %c0_3] : memref<1x3x128x16xbf16, #tpu.memory_space<vmem>>, vector<1x3x128x16xbf16>
    %4 = vector.shape_cast %3 : vector<1x3x128x16xbf16> to vector<3x128x16xbf16>
    %5 = vector.shape_cast %4 : vector<3x128x16xbf16> to vector<384x16xbf16>
    %c0_4 = arith.constant 0 : index
    %c0_5 = arith.constant 0 : index
    %6 = vector.load %arg3[%c0_4, %c0_5] : memref<16x128xbf16, #tpu.memory_space<vmem>>, vector<16x128xbf16>
    %cst = arith.constant dense<0.000000e+00> : vector<384x128xf32>
    %7 = tpu.matmul %5, %6, %cst {dimension_numbers = #tpu.dot_dimension_numbers<[1], [0], [0], [1], [0, 0, 1, 1], [], []>} : vector<384x16xbf16>, vector<16x128xbf16>, vector<384x128xf32> -> vector<384x128xf32>
    %c0_6 = arith.constant 0 : index
    %c0_7 = arith.constant 0 : index
    %c0_8 = arith.constant 0 : index
    %8 = vector.load %arg6[%c0_6, %c0_7, %c0_8] : memref<3x128x128xf32, #tpu.memory_space<vmem>>, vector<3x128x128xf32>
    %9 = vector.shape_cast %7 : vector<384x128xf32> to vector<3x128x128xf32>
    %10 = arith.addf %8, %9 : vector<3x128x128xf32>
    %c0_9 = arith.constant 0 : index
    %c0_10 = arith.constant 0 : index
    %c0_11 = arith.constant 0 : index
    %11 = vector.load %arg6[%c0_9, %c0_10, %c0_11] : memref<3x128x128xf32, #tpu.memory_space<vmem>>, vector<3x128x128xf32>
    tpu.vector_store %arg6[%c0_9, %c0_10, %c0_11], %10 {strides = array<i32>} : memref<3x128x128xf32, #tpu.memory_space<vmem>>, vector<3x128x128xf32>,
    %c0_i32_12 = arith.constant 0 : i32
    %12 = arith.cmpi eq, %arg1, %c0_i32_12 : i32
    %13 = arith.extui %12 : i1 to i32
    %c0_i32_13 = arith.constant 0 : i32
    %14 = arith.cmpi ne, %13, %c0_i32_13 : i32
    scf.if %14 {
      %c0_14 = arith.constant 0 : index
      %c0_15 = arith.constant 0 : index
      %c0_16 = arith.constant 0 : index
      %15 = vector.load %arg6[%c0_14, %c0_15, %c0_16] : memref<3x128x128xf32, #tpu.memory_space<vmem>>, vector<1x128x128xf32>
      %16 = vector.shape_cast %15 : vector<1x128x128xf32> to vector<128x128xf32>
      %c1 = arith.constant 1 : index
      %c0_17 = arith.constant 0 : index
      %c0_18 = arith.constant 0 : index
      %17 = vector.load %arg6[%c1, %c0_17, %c0_18] : memref<3x128x128xf32, #tpu.memory_space<vmem>>, vector<1x128x128xf32>
      %18 = vector.shape_cast %17 : vector<1x128x128xf32> to vector<128x128xf32>
      %c2 = arith.constant 2 : index
      %c0_19 = arith.constant 0 : index
      %c0_20 = arith.constant 0 : index
      %19 = vector.load %arg6[%c2, %c0_19, %c0_20] : memref<3x128x128xf32, #tpu.memory_space<vmem>>, vector<1x128x128xf32>
      %20 = vector.shape_cast %19 : vector<1x128x128xf32> to vector<128x128xf32>
      %c0_21 = arith.constant 0 : index
      %c0_22 = arith.constant 0 : index
      %21 = memref.load %arg4[%c0_21, %c0_22] : memref<12x4xf32, #tpu.memory_space<smem>>
      %22 = vector.broadcast %21 : f32 to vector<128x128xf32>
      %23 = arith.mulf %22, %16 : vector<128x128xf32>
      %c0_23 = arith.constant 0 : index
      %c1_24 = arith.constant 1 : index
      %24 = memref.load %arg4[%c0_23, %c1_24] : memref<12x4xf32, #tpu.memory_space<smem>>
      %25 = vector.broadcast %24 : f32 to vector<128x128xf32>
      %26 = arith.mulf %25, %18 : vector<128x128xf32>
      %27 = arith.addf %23, %26 : vector<128x128xf32>
      %c0_25 = arith.constant 0 : index
      %c2_26 = arith.constant 2 : index
      %28 = memref.load %arg4[%c0_25, %c2_26] : memref<12x4xf32, #tpu.memory_space<smem>>
      %29 = vector.broadcast %28 : f32 to vector<128x128xf32>
      %30 = arith.mulf %29, %20 : vector<128x128xf32>
      %31 = arith.addf %27, %30 : vector<128x128xf32>
      %c0_27 = arith.constant 0 : index
      %c3 = arith.constant 3 : index
      %32 = memref.load %arg4[%c0_27, %c3] : memref<12x4xf32, #tpu.memory_space<smem>>
      %33 = vector.broadcast %32 : f32 to vector<128x128xf32>
      %34 = arith.addf %31, %33 : vector<128x128xf32>
      %35 = arith.truncf %34 : vector<128x128xf32> to vector<128x128xbf16>
      %c0_28 = arith.constant 0 : index
      %c0_29 = arith.constant 0 : index
      %c0_30 = arith.constant 0 : index
      %36 = vector.load %arg5[%c0_28, %c0_29, %c0_30] : memref<1x128x1536xbf16, #tpu.memory_space<vmem>>, vector<1x128x128xbf16>
      %37 = vector.shape_cast %36 : vector<1x128x128xbf16> to vector<128x128xbf16>
      %38 = vector.shape_cast %35 : vector<128x128xbf16> to vector<1x128x128xbf16>
      tpu.vector_store %arg5[%c0_28, %c0_29, %c0_30], %38 {strides = array<i32>} : memref<1x128x1536xbf16, #tpu.memory_space<vmem>>, vector<1x128x128xbf16>,
      %c1_31 = arith.constant 1 : index
      %c0_32 = arith.constant 0 : index
      %39 = memref.load %arg4[%c1_31, %c0_32] : memref<12x4xf32, #tpu.memory_space<smem>>
      %40 = vector.broadcast %39 : f32 to vector<128x128xf32>
      %41 = arith.mulf %40, %16 : vector<128x128xf32>
      %c1_33 = arith.constant 1 : index
      %c1_34 = arith.constant 1 : index
      %42 = memref.load %arg4[%c1_33, %c1_34] : memref<12x4xf32, #tpu.memory_space<smem>>
      %43 = vector.broadcast %42 : f32 to vector<128x128xf32>
      %44 = arith.mulf %43, %18 : vector<128x128xf32>
      %45 = arith.addf %41, %44 : vector<128x128xf32>
      %c1_35 = arith.constant 1 : index
      %c2_36 = arith.constant 2 : index
      %46 = memref.load %arg4[%c1_35, %c2_36] : memref<12x4xf32, #tpu.memory_space<smem>>
      %47 = vector.broadcast %46 : f32 to vector<128x128xf32>
      %48 = arith.mulf %47, %20 : vector<128x128xf32>
      %49 = arith.addf %45, %48 : vector<128x128xf32>
      %c1_37 = arith.constant 1 : index
      %c3_38 = arith.constant 3 : index
      %50 = memref.load %arg4[%c1_37, %c3_38] : memref<12x4xf32, #tpu.memory_space<smem>>
      %51 = vector.broadcast %50 : f32 to vector<128x128xf32>
      %52 = arith.addf %49, %51 : vector<128x128xf32>
      %53 = arith.truncf %52 : vector<128x128xf32> to vector<128x128xbf16>
      %c0_39 = arith.constant 0 : index
      %c0_40 = arith.constant 0 : index
      %c128 = arith.constant 128 : index
      %54 = vector.load %arg5[%c0_39, %c0_40, %c128] : memref<1x128x1536xbf16, #tpu.memory_space<vmem>>, vector<1x128x128xbf16>
      %55 = vector.shape_cast %54 : vector<1x128x128xbf16> to vector<128x128xbf16>
      %56 = vector.shape_cast %53 : vector<128x128xbf16> to vector<1x128x128xbf16>
      tpu.vector_store %arg5[%c0_39, %c0_40, %c128], %56 {strides = array<i32>} : memref<1x128x1536xbf16, #tpu.memory_space<vmem>>, vector<1x128x128xbf16>,
      %c2_41 = arith.constant 2 : index
      %c0_42 = arith.constant 0 : index
      %57 = memref.load %arg4[%c2_41, %c0_42] : memref<12x4xf32, #tpu.memory_space<smem>>
      %58 = vector.broadcast %57 : f32 to vector<128x128xf32>
      %59 = arith.mulf %58, %16 : vector<128x128xf32>
      %c2_43 = arith.constant 2 : index
      %c1_44 = arith.constant 1 : index
      %60 = memref.load %arg4[%c2_43, %c1_44] : memref<12x4xf32, #tpu.memory_space<smem>>
      %61 = vector.broadcast %60 : f32 to vector<128x128xf32>
      %62 = arith.mulf %61, %18 : vector<128x128xf32>
      %63 = arith.addf %59, %62 : vector<128x128xf32>
      %c2_45 = arith.constant 2 : index
      %c2_46 = arith.constant 2 : index
      %64 = memref.load %arg4[%c2_45, %c2_46] : memref<12x4xf32, #tpu.memory_space<smem>>
      %65 = vector.broadcast %64 : f32 to vector<128x128xf32>
      %66 = arith.mulf %65, %20 : vector<128x128xf32>
      %67 = arith.addf %63, %66 : vector<128x128xf32>
      %c2_47 = arith.constant 2 : index
      %c3_48 = arith.constant 3 : index
      %68 = memref.load %arg4[%c2_47, %c3_48] : memref<12x4xf32, #tpu.memory_space<smem>>
      %69 = vector.broadcast %68 : f32 to vector<128x128xf32>
      %70 = arith.addf %67, %69 : vector<128x128xf32>
      %71 = arith.truncf %70 : vector<128x128xf32> to vector<128x128xbf16>
      %c0_49 = arith.constant 0 : index
      %c0_50 = arith.constant 0 : index
      %c256 = arith.constant 256 : index
      %72 = vector.load %arg5[%c0_49, %c0_50, %c256] : memref<1x128x1536xbf16, #tpu.memory_space<vmem>>, vector<1x128x128xbf16>
      %73 = vector.shape_cast %72 : vector<1x128x128xbf16> to vector<128x128xbf16>
      %74 = vector.shape_cast %71 : vector<128x128xbf16> to vector<1x128x128xbf16>
      tpu.vector_store %arg5[%c0_49, %c0_50, %c256], %74 {strides = array<i32>} : memref<1x128x1536xbf16, #tpu.memory_space<vmem>>, vector<1x128x128xbf16>,
      %c3_51 = arith.constant 3 : index
      %c0_52 = arith.constant 0 : index
      %75 = memref.load %arg4[%c3_51, %c0_52] : memref<12x4xf32, #tpu.memory_space<smem>>
      %76 = vector.broadcast %75 : f32 to vector<128x128xf32>
      %77 = arith.mulf %76, %16 : vector<128x128xf32>
      %c3_53 = arith.constant 3 : index
      %c1_54 = arith.constant 1 : index
      %78 = memref.load %arg4[%c3_53, %c1_54] : memref<12x4xf32, #tpu.memory_space<smem>>
      %79 = vector.broadcast %78 : f32 to vector<128x128xf32>
      %80 = arith.mulf %79, %18 : vector<128x128xf32>
      %81 = arith.addf %77, %80 : vector<128x128xf32>
      %c3_55 = arith.constant 3 : index
      %c2_56 = arith.constant 2 : index
      %82 = memref.load %arg4[%c3_55, %c2_56] : memref<12x4xf32, #tpu.memory_space<smem>>
      %83 = vector.broadcast %82 : f32 to vector<128x128xf32>
      %84 = arith.mulf %83, %20 : vector<128x128xf32>
      %85 = arith.addf %81, %84 : vector<128x128xf32>
      %c3_57 = arith.constant 3 : index
      %c3_58 = arith.constant 3 : index
      %86 = memref.load %arg4[%c3_57, %c3_58] : memref<12x4xf32, #tpu.memory_space<smem>>
      %87 = vector.broadcast %86 : f32 to vector<128x128xf32>
      %88 = arith.addf %85, %87 : vector<128x128xf32>
      %89 = arith.truncf %88 : vector<128x128xf32> to vector<128x128xbf16>
      %c0_59 = arith.constant 0 : index
      %c0_60 = arith.constant 0 : index
      %c384 = arith.constant 384 : index
      %90 = vector.load %arg5[%c0_59, %c0_60, %c384] : memref<1x128x1536xbf16, #tpu.memory_space<vmem>>, vector<1x128x128xbf16>
      %91 = vector.shape_cast %90 : vector<1x128x128xbf16> to vector<128x128xbf16>
      %92 = vector.shape_cast %89 : vector<128x128xbf16> to vector<1x128x128xbf16>
      tpu.vector_store %arg5[%c0_59, %c0_60, %c384], %92 {strides = array<i32>} : memref<1x128x1536xbf16, #tpu.memory_space<vmem>>, vector<1x128x128xbf16>,
      %c4 = arith.constant 4 : index
      %c0_61 = arith.constant 0 : index
      %93 = memref.load %arg4[%c4, %c0_61] : memref<12x4xf32, #tpu.memory_space<smem>>
      %94 = vector.broadcast %93 : f32 to vector<128x128xf32>
      %95 = arith.mulf %94, %16 : vector<128x128xf32>
      %c4_62 = arith.constant 4 : index
      %c1_63 = arith.constant 1 : index
      %96 = memref.load %arg4[%c4_62, %c1_63] : memref<12x4xf32, #tpu.memory_space<smem>>
      %97 = vector.broadcast %96 : f32 to vector<128x128xf32>
      %98 = arith.mulf %97, %18 : vector<128x128xf32>
      %99 = arith.addf %95, %98 : vector<128x128xf32>
      %c4_64 = arith.constant 4 : index
      %c2_65 = arith.constant 2 : index
      %100 = memref.load %arg4[%c4_64, %c2_65] : memref<12x4xf32, #tpu.memory_space<smem>>
      %101 = vector.broadcast %100 : f32 to vector<128x128xf32>
      %102 = arith.mulf %101, %20 : vector<128x128xf32>
      %103 = arith.addf %99, %102 : vector<128x128xf32>
      %c4_66 = arith.constant 4 : index
      %c3_67 = arith.constant 3 : index
      %104 = memref.load %arg4[%c4_66, %c3_67] : memref<12x4xf32, #tpu.memory_space<smem>>
      %105 = vector.broadcast %104 : f32 to vector<128x128xf32>
      %106 = arith.addf %103, %105 : vector<128x128xf32>
      %107 = arith.truncf %106 : vector<128x128xf32> to vector<128x128xbf16>
      %c0_68 = arith.constant 0 : index
      %c0_69 = arith.constant 0 : index
      %c512 = arith.constant 512 : index
      %108 = vector.load %arg5[%c0_68, %c0_69, %c512] : memref<1x128x1536xbf16, #tpu.memory_space<vmem>>, vector<1x128x128xbf16>
      %109 = vector.shape_cast %108 : vector<1x128x128xbf16> to vector<128x128xbf16>
      %110 = vector.shape_cast %107 : vector<128x128xbf16> to vector<1x128x128xbf16>
      tpu.vector_store %arg5[%c0_68, %c0_69, %c512], %110 {strides = array<i32>} : memref<1x128x1536xbf16, #tpu.memory_space<vmem>>, vector<1x128x128xbf16>,
      %c5 = arith.constant 5 : index
      %c0_70 = arith.constant 0 : index
      %111 = memref.load %arg4[%c5, %c0_70] : memref<12x4xf32, #tpu.memory_space<smem>>
      %112 = vector.broadcast %111 : f32 to vector<128x128xf32>
      %113 = arith.mulf %112, %16 : vector<128x128xf32>
      %c5_71 = arith.constant 5 : index
      %c1_72 = arith.constant 1 : index
      %114 = memref.load %arg4[%c5_71, %c1_72] : memref<12x4xf32, #tpu.memory_space<smem>>
      %115 = vector.broadcast %114 : f32 to vector<128x128xf32>
      %116 = arith.mulf %115, %18 : vector<128x128xf32>
      %117 = arith.addf %113, %116 : vector<128x128xf32>
      %c5_73 = arith.constant 5 : index
      %c2_74 = arith.constant 2 : index
      %118 = memref.load %arg4[%c5_73, %c2_74] : memref<12x4xf32, #tpu.memory_space<smem>>
      %119 = vector.broadcast %118 : f32 to vector<128x128xf32>
      %120 = arith.mulf %119, %20 : vector<128x128xf32>
      %121 = arith.addf %117, %120 : vector<128x128xf32>
      %c5_75 = arith.constant 5 : index
      %c3_76 = arith.constant 3 : index
      %122 = memref.load %arg4[%c5_75, %c3_76] : memref<12x4xf32, #tpu.memory_space<smem>>
      %123 = vector.broadcast %122 : f32 to vector<128x128xf32>
      %124 = arith.addf %121, %123 : vector<128x128xf32>
      %125 = arith.truncf %124 : vector<128x128xf32> to vector<128x128xbf16>
      %c0_77 = arith.constant 0 : index
      %c0_78 = arith.constant 0 : index
      %c640 = arith.constant 640 : index
      %126 = vector.load %arg5[%c0_77, %c0_78, %c640] : memref<1x128x1536xbf16, #tpu.memory_space<vmem>>, vector<1x128x128xbf16>
      %127 = vector.shape_cast %126 : vector<1x128x128xbf16> to vector<128x128xbf16>
      %128 = vector.shape_cast %125 : vector<128x128xbf16> to vector<1x128x128xbf16>
      tpu.vector_store %arg5[%c0_77, %c0_78, %c640], %128 {strides = array<i32>} : memref<1x128x1536xbf16, #tpu.memory_space<vmem>>, vector<1x128x128xbf16>,
      %c6 = arith.constant 6 : index
      %c0_79 = arith.constant 0 : index
      %129 = memref.load %arg4[%c6, %c0_79] : memref<12x4xf32, #tpu.memory_space<smem>>
      %130 = vector.broadcast %129 : f32 to vector<128x128xf32>
      %131 = arith.mulf %130, %16 : vector<128x128xf32>
      %c6_80 = arith.constant 6 : index
      %c1_81 = arith.constant 1 : index
      %132 = memref.load %arg4[%c6_80, %c1_81] : memref<12x4xf32, #tpu.memory_space<smem>>
      %133 = vector.broadcast %132 : f32 to vector<128x128xf32>
      %134 = arith.mulf %133, %18 : vector<128x128xf32>
      %135 = arith.addf %131, %134 : vector<128x128xf32>
      %c6_82 = arith.constant 6 : index
      %c2_83 = arith.constant 2 : index
      %136 = memref.load %arg4[%c6_82, %c2_83] : memref<12x4xf32, #tpu.memory_space<smem>>
      %137 = vector.broadcast %136 : f32 to vector<128x128xf32>
      %138 = arith.mulf %137, %20 : vector<128x128xf32>
      %139 = arith.addf %135, %138 : vector<128x128xf32>
      %c6_84 = arith.constant 6 : index
      %c3_85 = arith.constant 3 : index
      %140 = memref.load %arg4[%c6_84, %c3_85] : memref<12x4xf32, #tpu.memory_space<smem>>
      %141 = vector.broadcast %140 : f32 to vector<128x128xf32>
      %142 = arith.addf %139, %141 : vector<128x128xf32>
      %143 = arith.truncf %142 : vector<128x128xf32> to vector<128x128xbf16>
      %c0_86 = arith.constant 0 : index
      %c0_87 = arith.constant 0 : index
      %c768 = arith.constant 768 : index
      %144 = vector.load %arg5[%c0_86, %c0_87, %c768] : memref<1x128x1536xbf16, #tpu.memory_space<vmem>>, vector<1x128x128xbf16>
      %145 = vector.shape_cast %144 : vector<1x128x128xbf16> to vector<128x128xbf16>
      %146 = vector.shape_cast %143 : vector<128x128xbf16> to vector<1x128x128xbf16>
      tpu.vector_store %arg5[%c0_86, %c0_87, %c768], %146 {strides = array<i32>} : memref<1x128x1536xbf16, #tpu.memory_space<vmem>>, vector<1x128x128xbf16>,
      %c7 = arith.constant 7 : index
      %c0_88 = arith.constant 0 : index
      %147 = memref.load %arg4[%c7, %c0_88] : memref<12x4xf32, #tpu.memory_space<smem>>
      %148 = vector.broadcast %147 : f32 to vector<128x128xf32>
      %149 = arith.mulf %148, %16 : vector<128x128xf32>
      %c7_89 = arith.constant 7 : index
      %c1_90 = arith.constant 1 : index
      %150 = memref.load %arg4[%c7_89, %c1_90] : memref<12x4xf32, #tpu.memory_space<smem>>
      %151 = vector.broadcast %150 : f32 to vector<128x128xf32>
      %152 = arith.mulf %151, %18 : vector<128x128xf32>
      %153 = arith.addf %149, %152 : vector<128x128xf32>
      %c7_91 = arith.constant 7 : index
      %c2_92 = arith.constant 2 : index
      %154 = memref.load %arg4[%c7_91, %c2_92] : memref<12x4xf32, #tpu.memory_space<smem>>
      %155 = vector.broadcast %154 : f32 to vector<128x128xf32>
      %156 = arith.mulf %155, %20 : vector<128x128xf32>
      %157 = arith.addf %153, %156 : vector<128x128xf32>
      %c7_93 = arith.constant 7 : index
      %c3_94 = arith.constant 3 : index
      %158 = memref.load %arg4[%c7_93, %c3_94] : memref<12x4xf32, #tpu.memory_space<smem>>
      %159 = vector.broadcast %158 : f32 to vector<128x128xf32>
      %160 = arith.addf %157, %159 : vector<128x128xf32>
      %161 = arith.truncf %160 : vector<128x128xf32> to vector<128x128xbf16>
      %c0_95 = arith.constant 0 : index
      %c0_96 = arith.constant 0 : index
      %c896 = arith.constant 896 : index
      %162 = vector.load %arg5[%c0_95, %c0_96, %c896] : memref<1x128x1536xbf16, #tpu.memory_space<vmem>>, vector<1x128x128xbf16>
      %163 = vector.shape_cast %162 : vector<1x128x128xbf16> to vector<128x128xbf16>
      %164 = vector.shape_cast %161 : vector<128x128xbf16> to vector<1x128x128xbf16>
      tpu.vector_store %arg5[%c0_95, %c0_96, %c896], %164 {strides = array<i32>} : memref<1x128x1536xbf16, #tpu.memory_space<vmem>>, vector<1x128x128xbf16>,
      %c8 = arith.constant 8 : index
      %c0_97 = arith.constant 0 : index
      %165 = memref.load %arg4[%c8, %c0_97] : memref<12x4xf32, #tpu.memory_space<smem>>
      %166 = vector.broadcast %165 : f32 to vector<128x128xf32>
      %167 = arith.mulf %166, %16 : vector<128x128xf32>
      %c8_98 = arith.constant 8 : index
      %c1_99 = arith.constant 1 : index
      %168 = memref.load %arg4[%c8_98, %c1_99] : memref<12x4xf32, #tpu.memory_space<smem>>
      %169 = vector.broadcast %168 : f32 to vector<128x128xf32>
      %170 = arith.mulf %169, %18 : vector<128x128xf32>
      %171 = arith.addf %167, %170 : vector<128x128xf32>
      %c8_100 = arith.constant 8 : index
      %c2_101 = arith.constant 2 : index
      %172 = memref.load %arg4[%c8_100, %c2_101] : memref<12x4xf32, #tpu.memory_space<smem>>
      %173 = vector.broadcast %172 : f32 to vector<128x128xf32>
      %174 = arith.mulf %173, %20 : vector<128x128xf32>
      %175 = arith.addf %171, %174 : vector<128x128xf32>
      %c8_102 = arith.constant 8 : index
      %c3_103 = arith.constant 3 : index
      %176 = memref.load %arg4[%c8_102, %c3_103] : memref<12x4xf32, #tpu.memory_space<smem>>
      %177 = vector.broadcast %176 : f32 to vector<128x128xf32>
      %178 = arith.addf %175, %177 : vector<128x128xf32>
      %179 = arith.truncf %178 : vector<128x128xf32> to vector<128x128xbf16>
      %c0_104 = arith.constant 0 : index
      %c0_105 = arith.constant 0 : index
      %c1024 = arith.constant 1024 : index
      %180 = vector.load %arg5[%c0_104, %c0_105, %c1024] : memref<1x128x1536xbf16, #tpu.memory_space<vmem>>, vector<1x128x128xbf16>
      %181 = vector.shape_cast %180 : vector<1x128x128xbf16> to vector<128x128xbf16>
      %182 = vector.shape_cast %179 : vector<128x128xbf16> to vector<1x128x128xbf16>
      tpu.vector_store %arg5[%c0_104, %c0_105, %c1024], %182 {strides = array<i32>} : memref<1x128x1536xbf16, #tpu.memory_space<vmem>>, vector<1x128x128xbf16>,
      %c9 = arith.constant 9 : index
      %c0_106 = arith.constant 0 : index
      %183 = memref.load %arg4[%c9, %c0_106] : memref<12x4xf32, #tpu.memory_space<smem>>
      %184 = vector.broadcast %183 : f32 to vector<128x128xf32>
      %185 = arith.mulf %184, %16 : vector<128x128xf32>
      %c9_107 = arith.constant 9 : index
      %c1_108 = arith.constant 1 : index
      %186 = memref.load %arg4[%c9_107, %c1_108] : memref<12x4xf32, #tpu.memory_space<smem>>
      %187 = vector.broadcast %186 : f32 to vector<128x128xf32>
      %188 = arith.mulf %187, %18 : vector<128x128xf32>
      %189 = arith.addf %185, %188 : vector<128x128xf32>
      %c9_109 = arith.constant 9 : index
      %c2_110 = arith.constant 2 : index
      %190 = memref.load %arg4[%c9_109, %c2_110] : memref<12x4xf32, #tpu.memory_space<smem>>
      %191 = vector.broadcast %190 : f32 to vector<128x128xf32>
      %192 = arith.mulf %191, %20 : vector<128x128xf32>
      %193 = arith.addf %189, %192 : vector<128x128xf32>
      %c9_111 = arith.constant 9 : index
      %c3_112 = arith.constant 3 : index
      %194 = memref.load %arg4[%c9_111, %c3_112] : memref<12x4xf32, #tpu.memory_space<smem>>
      %195 = vector.broadcast %194 : f32 to vector<128x128xf32>
      %196 = arith.addf %193, %195 : vector<128x128xf32>
      %197 = arith.truncf %196 : vector<128x128xf32> to vector<128x128xbf16>
      %c0_113 = arith.constant 0 : index
      %c0_114 = arith.constant 0 : index
      %c1152 = arith.constant 1152 : index
      %198 = vector.load %arg5[%c0_113, %c0_114, %c1152] : memref<1x128x1536xbf16, #tpu.memory_space<vmem>>, vector<1x128x128xbf16>
      %199 = vector.shape_cast %198 : vector<1x128x128xbf16> to vector<128x128xbf16>
      %200 = vector.shape_cast %197 : vector<128x128xbf16> to vector<1x128x128xbf16>
      tpu.vector_store %arg5[%c0_113, %c0_114, %c1152], %200 {strides = array<i32>} : memref<1x128x1536xbf16, #tpu.memory_space<vmem>>, vector<1x128x128xbf16>,
      %c10 = arith.constant 10 : index
      %c0_115 = arith.constant 0 : index
      %201 = memref.load %arg4[%c10, %c0_115] : memref<12x4xf32, #tpu.memory_space<smem>>
      %202 = vector.broadcast %201 : f32 to vector<128x128xf32>
      %203 = arith.mulf %202, %16 : vector<128x128xf32>
      %c10_116 = arith.constant 10 : index
      %c1_117 = arith.constant 1 : index
      %204 = memref.load %arg4[%c10_116, %c1_117] : memref<12x4xf32, #tpu.memory_space<smem>>
      %205 = vector.broadcast %204 : f32 to vector<128x128xf32>
      %206 = arith.mulf %205, %18 : vector<128x128xf32>
      %207 = arith.addf %203, %206 : vector<128x128xf32>
      %c10_118 = arith.constant 10 : index
      %c2_119 = arith.constant 2 : index
      %208 = memref.load %arg4[%c10_118, %c2_119] : memref<12x4xf32, #tpu.memory_space<smem>>
      %209 = vector.broadcast %208 : f32 to vector<128x128xf32>
      %210 = arith.mulf %209, %20 : vector<128x128xf32>
      %211 = arith.addf %207, %210 : vector<128x128xf32>
      %c10_120 = arith.constant 10 : index
      %c3_121 = arith.constant 3 : index
      %212 = memref.load %arg4[%c10_120, %c3_121] : memref<12x4xf32, #tpu.memory_space<smem>>
      %213 = vector.broadcast %212 : f32 to vector<128x128xf32>
      %214 = arith.addf %211, %213 : vector<128x128xf32>
      %215 = arith.truncf %214 : vector<128x128xf32> to vector<128x128xbf16>
      %c0_122 = arith.constant 0 : index
      %c0_123 = arith.constant 0 : index
      %c1280 = arith.constant 1280 : index
      %216 = vector.load %arg5[%c0_122, %c0_123, %c1280] : memref<1x128x1536xbf16, #tpu.memory_space<vmem>>, vector<1x128x128xbf16>
      %217 = vector.shape_cast %216 : vector<1x128x128xbf16> to vector<128x128xbf16>
      %218 = vector.shape_cast %215 : vector<128x128xbf16> to vector<1x128x128xbf16>
      tpu.vector_store %arg5[%c0_122, %c0_123, %c1280], %218 {strides = array<i32>} : memref<1x128x1536xbf16, #tpu.memory_space<vmem>>, vector<1x128x128xbf16>,
      %c11 = arith.constant 11 : index
      %c0_124 = arith.constant 0 : index
      %219 = memref.load %arg4[%c11, %c0_124] : memref<12x4xf32, #tpu.memory_space<smem>>
      %220 = vector.broadcast %219 : f32 to vector<128x128xf32>
      %221 = arith.mulf %220, %16 : vector<128x128xf32>
      %c11_125 = arith.constant 11 : index
      %c1_126 = arith.constant 1 : index
      %222 = memref.load %arg4[%c11_125, %c1_126] : memref<12x4xf32, #tpu.memory_space<smem>>
      %223 = vector.broadcast %222 : f32 to vector<128x128xf32>
      %224 = arith.mulf %223, %18 : vector<128x128xf32>
      %225 = arith.addf %221, %224 : vector<128x128xf32>
      %c11_127 = arith.constant 11 : index
      %c2_128 = arith.constant 2 : index
      %226 = memref.load %arg4[%c11_127, %c2_128] : memref<12x4xf32, #tpu.memory_space<smem>>
      %227 = vector.broadcast %226 : f32 to vector<128x128xf32>
      %228 = arith.mulf %227, %20 : vector<128x128xf32>
      %229 = arith.addf %225, %228 : vector<128x128xf32>
      %c11_129 = arith.constant 11 : index
      %c3_130 = arith.constant 3 : index
      %230 = memref.load %arg4[%c11_129, %c3_130] : memref<12x4xf32, #tpu.memory_space<smem>>
      %231 = vector.broadcast %230 : f32 to vector<128x128xf32>
      %232 = arith.addf %229, %231 : vector<128x128xf32>
      %233 = arith.truncf %232 : vector<128x128xf32> to vector<128x128xbf16>
      %c0_131 = arith.constant 0 : index
      %c0_132 = arith.constant 0 : index
      %c1408 = arith.constant 1408 : index
      %234 = vector.load %arg5[%c0_131, %c0_132, %c1408] : memref<1x128x1536xbf16, #tpu.memory_space<vmem>>, vector<1x128x128xbf16>
      %235 = vector.shape_cast %234 : vector<1x128x128xbf16> to vector<128x128xbf16>
      %236 = vector.shape_cast %233 : vector<128x128xbf16> to vector<1x128x128xbf16>
      tpu.vector_store %arg5[%c0_131, %c0_132, %c1408], %236 {strides = array<i32>} : memref<1x128x1536xbf16, #tpu.memory_space<vmem>>, vector<1x128x128xbf16>,
    } else {
    }
    return
  }
  func.func @transform_0(%arg0: i32, %arg1: i32) -> (i32, i32, i32, i32) {
    %c0_i32 = arith.constant 0 : i32
    %c0_i32_0 = arith.constant 0 : i32
    %c0_i32_1 = arith.constant 0 : i32
    return %arg0, %c0_i32, %c0_i32_0, %arg1 : i32, i32, i32, i32
  }
  func.func @transform_1(%arg0: i32, %arg1: i32) -> (i32, i32) {
    %c0_i32 = arith.constant 0 : i32
    %c0_i32_0 = arith.constant 0 : i32
    return %arg1, %c0_i32 : i32, i32
  }
  func.func @transform_2(%arg0: i32, %arg1: i32) -> (i32, i32) {
    %c0_i32 = arith.constant 0 : i32
    %c0_i32_0 = arith.constant 0 : i32
    %c0_i32_1 = arith.constant 0 : i32
    return %c0_i32, %c0_i32_0 : i32, i32
  }
  func.func @transform_3(%arg0: i32, %arg1: i32) -> (i32, i32, i32) {
    %c0_i32 = arith.constant 0 : i32
    %c0_i32_0 = arith.constant 0 : i32
    %c0_i32_1 = arith.constant 0 : i32
    return %arg0, %c0_i32, %c0_i32_0 : i32, i32, i32
  }
}

module attributes {stable_mosaic.version = 11 : i64} {
  func.func @_up_apply_kernel(%arg0: i32, %arg1: i32, %arg2: i32, %arg3: memref<1x128x1536xbf16, #tpu.memory_space<vmem>>, %arg4: memref<16x128xbf16, #tpu.memory_space<vmem>>, %arg5: memref<128x16xbf16, #tpu.memory_space<vmem>>, %arg6: memref<1x3x16x16xf32, #tpu.memory_space<vmem>>, %arg7: memref<1x3x16x16xf32, #tpu.memory_space<vmem>>) attributes {dimension_semantics = [#tpu.dimension_semantics<parallel>, #tpu.dimension_semantics<parallel>, #tpu.dimension_semantics<parallel>], iteration_bounds = array<i64: 2, 1, 1>, scalar_prefetch = 0 : i64, scratch_operands = 0 : i64, tpu.core_type = #tpu.core_type<tc>, window_params = [{transform_indices = @transform_0, window_bounds = array<i64: 1, 128, 1536>}, {transform_indices = @transform_1, window_bounds = array<i64: 16, 128>}, {transform_indices = @transform_2, window_bounds = array<i64: 128, 16>}, {transform_indices = @transform_3, window_bounds = array<i64: 1, 3, 16, 16>}, {transform_indices = @transform_4, window_bounds = array<i64: 1, 3, 16, 16>}]} {
    %c0 = arith.constant 0 : index
    %c0_0 = arith.constant 0 : index
    %0 = vector.load %arg4[%c0, %c0_0] : memref<16x128xbf16, #tpu.memory_space<vmem>>, vector<16x128xbf16>
    %c0_1 = arith.constant 0 : index
    %c0_2 = arith.constant 0 : index
    %c0_3 = arith.constant 0 : index
    %1 = vector.load %arg3[%c0_1, %c0_2, %c0_3] : memref<1x128x1536xbf16, #tpu.memory_space<vmem>>, vector<1x128x1536xbf16>
    %2 = vector.shape_cast %1 : vector<1x128x1536xbf16> to vector<128x1536xbf16>
    %cst = arith.constant dense<0.000000e+00> : vector<16x1536xf32>
    %3 = tpu.matmul %0, %2, %cst {dimension_numbers = #tpu.dot_dimension_numbers<[1], [0], [0], [1], [0, 0, 1, 1], [], []>} : vector<16x128xbf16>, vector<128x1536xbf16>, vector<16x1536xf32> -> vector<16x1536xf32>
    %4 = arith.truncf %3 : vector<16x1536xf32> to vector<16x1536xbf16>
    %c0_4 = arith.constant 0 : index
    %c0_5 = arith.constant 0 : index
    %5 = vector.load %arg5[%c0_4, %c0_5] : memref<128x16xbf16, #tpu.memory_space<vmem>>, vector<128x16xbf16>
    %6 = vector.extract_strided_slice %4 {offsets = [0, 384], sizes = [16, 128], strides = [1, 1]} : vector<16x1536xbf16> to vector<16x128xbf16>
    %cst_6 = arith.constant dense<0.000000e+00> : vector<16x16xf32>
    %7 = tpu.matmul %6, %5, %cst_6 {dimension_numbers = #tpu.dot_dimension_numbers<[1], [0], [0], [1], [0, 0, 1, 1], [], []>} : vector<16x128xbf16>, vector<128x16xbf16>, vector<16x16xf32> -> vector<16x16xf32>
    %c0_7 = arith.constant 0 : index
    %c0_8 = arith.constant 0 : index
    %c0_9 = arith.constant 0 : index
    %c0_10 = arith.constant 0 : index
    %8 = vector.load %arg6[%c0_7, %c0_8, %c0_9, %c0_10] : memref<1x3x16x16xf32, #tpu.memory_space<vmem>>, vector<1x1x16x16xf32>
    %9 = vector.shape_cast %8 : vector<1x1x16x16xf32> to vector<16x16xf32>
    %10 = vector.extract_strided_slice %4 {offsets = [0, 0], sizes = [16, 128], strides = [1, 1]} : vector<16x1536xbf16> to vector<16x128xbf16>
    %cst_11 = arith.constant dense<0.000000e+00> : vector<16x16xf32>
    %11 = tpu.matmul %10, %5, %cst_11 {dimension_numbers = #tpu.dot_dimension_numbers<[1], [0], [0], [1], [0, 0, 1, 1], [], []>} : vector<16x128xbf16>, vector<128x16xbf16>, vector<16x16xf32> -> vector<16x16xf32>
    %12 = arith.mulf %9, %11 : vector<16x16xf32>
    %13 = arith.addf %7, %12 : vector<16x16xf32>
    %c0_12 = arith.constant 0 : index
    %c1 = arith.constant 1 : index
    %c0_13 = arith.constant 0 : index
    %c0_14 = arith.constant 0 : index
    %14 = vector.load %arg6[%c0_12, %c1, %c0_13, %c0_14] : memref<1x3x16x16xf32, #tpu.memory_space<vmem>>, vector<1x1x16x16xf32>
    %15 = vector.shape_cast %14 : vector<1x1x16x16xf32> to vector<16x16xf32>
    %16 = vector.extract_strided_slice %4 {offsets = [0, 128], sizes = [16, 128], strides = [1, 1]} : vector<16x1536xbf16> to vector<16x128xbf16>
    %cst_15 = arith.constant dense<0.000000e+00> : vector<16x16xf32>
    %17 = tpu.matmul %16, %5, %cst_15 {dimension_numbers = #tpu.dot_dimension_numbers<[1], [0], [0], [1], [0, 0, 1, 1], [], []>} : vector<16x128xbf16>, vector<128x16xbf16>, vector<16x16xf32> -> vector<16x16xf32>
    %18 = arith.mulf %15, %17 : vector<16x16xf32>
    %19 = arith.addf %13, %18 : vector<16x16xf32>
    %c0_16 = arith.constant 0 : index
    %c2 = arith.constant 2 : index
    %c0_17 = arith.constant 0 : index
    %c0_18 = arith.constant 0 : index
    %20 = vector.load %arg6[%c0_16, %c2, %c0_17, %c0_18] : memref<1x3x16x16xf32, #tpu.memory_space<vmem>>, vector<1x1x16x16xf32>
    %21 = vector.shape_cast %20 : vector<1x1x16x16xf32> to vector<16x16xf32>
    %22 = vector.extract_strided_slice %4 {offsets = [0, 256], sizes = [16, 128], strides = [1, 1]} : vector<16x1536xbf16> to vector<16x128xbf16>
    %cst_19 = arith.constant dense<0.000000e+00> : vector<16x16xf32>
    %23 = tpu.matmul %22, %5, %cst_19 {dimension_numbers = #tpu.dot_dimension_numbers<[1], [0], [0], [1], [0, 0, 1, 1], [], []>} : vector<16x128xbf16>, vector<128x16xbf16>, vector<16x16xf32> -> vector<16x16xf32>
    %24 = arith.mulf %21, %23 : vector<16x16xf32>
    %25 = arith.addf %19, %24 : vector<16x16xf32>
    %c0_20 = arith.constant 0 : index
    %c0_21 = arith.constant 0 : index
    %c0_22 = arith.constant 0 : index
    %c0_23 = arith.constant 0 : index
    %26 = vector.load %arg7[%c0_20, %c0_21, %c0_22, %c0_23] : memref<1x3x16x16xf32, #tpu.memory_space<vmem>>, vector<1x1x16x16xf32>
    %27 = vector.shape_cast %26 : vector<1x1x16x16xf32> to vector<16x16xf32>
    %28 = vector.shape_cast %25 : vector<16x16xf32> to vector<1x1x16x16xf32>
    tpu.vector_store %arg7[%c0_20, %c0_21, %c0_22, %c0_23], %28 {strides = array<i32>} : memref<1x3x16x16xf32, #tpu.memory_space<vmem>>, vector<1x1x16x16xf32>,
    %29 = vector.extract_strided_slice %4 {offsets = [0, 896], sizes = [16, 128], strides = [1, 1]} : vector<16x1536xbf16> to vector<16x128xbf16>
    %cst_24 = arith.constant dense<0.000000e+00> : vector<16x16xf32>
    %30 = tpu.matmul %29, %5, %cst_24 {dimension_numbers = #tpu.dot_dimension_numbers<[1], [0], [0], [1], [0, 0, 1, 1], [], []>} : vector<16x128xbf16>, vector<128x16xbf16>, vector<16x16xf32> -> vector<16x16xf32>
    %c0_25 = arith.constant 0 : index
    %c0_26 = arith.constant 0 : index
    %c0_27 = arith.constant 0 : index
    %c0_28 = arith.constant 0 : index
    %31 = vector.load %arg6[%c0_25, %c0_26, %c0_27, %c0_28] : memref<1x3x16x16xf32, #tpu.memory_space<vmem>>, vector<1x1x16x16xf32>
    %32 = vector.shape_cast %31 : vector<1x1x16x16xf32> to vector<16x16xf32>
    %33 = vector.extract_strided_slice %4 {offsets = [0, 512], sizes = [16, 128], strides = [1, 1]} : vector<16x1536xbf16> to vector<16x128xbf16>
    %cst_29 = arith.constant dense<0.000000e+00> : vector<16x16xf32>
    %34 = tpu.matmul %33, %5, %cst_29 {dimension_numbers = #tpu.dot_dimension_numbers<[1], [0], [0], [1], [0, 0, 1, 1], [], []>} : vector<16x128xbf16>, vector<128x16xbf16>, vector<16x16xf32> -> vector<16x16xf32>
    %35 = arith.mulf %32, %34 : vector<16x16xf32>
    %36 = arith.addf %30, %35 : vector<16x16xf32>
    %c0_30 = arith.constant 0 : index
    %c1_31 = arith.constant 1 : index
    %c0_32 = arith.constant 0 : index
    %c0_33 = arith.constant 0 : index
    %37 = vector.load %arg6[%c0_30, %c1_31, %c0_32, %c0_33] : memref<1x3x16x16xf32, #tpu.memory_space<vmem>>, vector<1x1x16x16xf32>
    %38 = vector.shape_cast %37 : vector<1x1x16x16xf32> to vector<16x16xf32>
    %39 = vector.extract_strided_slice %4 {offsets = [0, 640], sizes = [16, 128], strides = [1, 1]} : vector<16x1536xbf16> to vector<16x128xbf16>
    %cst_34 = arith.constant dense<0.000000e+00> : vector<16x16xf32>
    %40 = tpu.matmul %39, %5, %cst_34 {dimension_numbers = #tpu.dot_dimension_numbers<[1], [0], [0], [1], [0, 0, 1, 1], [], []>} : vector<16x128xbf16>, vector<128x16xbf16>, vector<16x16xf32> -> vector<16x16xf32>
    %41 = arith.mulf %38, %40 : vector<16x16xf32>
    %42 = arith.addf %36, %41 : vector<16x16xf32>
    %c0_35 = arith.constant 0 : index
    %c2_36 = arith.constant 2 : index
    %c0_37 = arith.constant 0 : index
    %c0_38 = arith.constant 0 : index
    %43 = vector.load %arg6[%c0_35, %c2_36, %c0_37, %c0_38] : memref<1x3x16x16xf32, #tpu.memory_space<vmem>>, vector<1x1x16x16xf32>
    %44 = vector.shape_cast %43 : vector<1x1x16x16xf32> to vector<16x16xf32>
    %45 = vector.extract_strided_slice %4 {offsets = [0, 768], sizes = [16, 128], strides = [1, 1]} : vector<16x1536xbf16> to vector<16x128xbf16>
    %cst_39 = arith.constant dense<0.000000e+00> : vector<16x16xf32>
    %46 = tpu.matmul %45, %5, %cst_39 {dimension_numbers = #tpu.dot_dimension_numbers<[1], [0], [0], [1], [0, 0, 1, 1], [], []>} : vector<16x128xbf16>, vector<128x16xbf16>, vector<16x16xf32> -> vector<16x16xf32>
    %47 = arith.mulf %44, %46 : vector<16x16xf32>
    %48 = arith.addf %42, %47 : vector<16x16xf32>
    %c0_40 = arith.constant 0 : index
    %c1_41 = arith.constant 1 : index
    %c0_42 = arith.constant 0 : index
    %c0_43 = arith.constant 0 : index
    %49 = vector.load %arg7[%c0_40, %c1_41, %c0_42, %c0_43] : memref<1x3x16x16xf32, #tpu.memory_space<vmem>>, vector<1x1x16x16xf32>
    %50 = vector.shape_cast %49 : vector<1x1x16x16xf32> to vector<16x16xf32>
    %51 = vector.shape_cast %48 : vector<16x16xf32> to vector<1x1x16x16xf32>
    tpu.vector_store %arg7[%c0_40, %c1_41, %c0_42, %c0_43], %51 {strides = array<i32>} : memref<1x3x16x16xf32, #tpu.memory_space<vmem>>, vector<1x1x16x16xf32>,
    %52 = vector.extract_strided_slice %4 {offsets = [0, 1408], sizes = [16, 128], strides = [1, 1]} : vector<16x1536xbf16> to vector<16x128xbf16>
    %cst_44 = arith.constant dense<0.000000e+00> : vector<16x16xf32>
    %53 = tpu.matmul %52, %5, %cst_44 {dimension_numbers = #tpu.dot_dimension_numbers<[1], [0], [0], [1], [0, 0, 1, 1], [], []>} : vector<16x128xbf16>, vector<128x16xbf16>, vector<16x16xf32> -> vector<16x16xf32>
    %c0_45 = arith.constant 0 : index
    %c0_46 = arith.constant 0 : index
    %c0_47 = arith.constant 0 : index
    %c0_48 = arith.constant 0 : index
    %54 = vector.load %arg6[%c0_45, %c0_46, %c0_47, %c0_48] : memref<1x3x16x16xf32, #tpu.memory_space<vmem>>, vector<1x1x16x16xf32>
    %55 = vector.shape_cast %54 : vector<1x1x16x16xf32> to vector<16x16xf32>
    %56 = vector.extract_strided_slice %4 {offsets = [0, 1024], sizes = [16, 128], strides = [1, 1]} : vector<16x1536xbf16> to vector<16x128xbf16>
    %cst_49 = arith.constant dense<0.000000e+00> : vector<16x16xf32>
    %57 = tpu.matmul %56, %5, %cst_49 {dimension_numbers = #tpu.dot_dimension_numbers<[1], [0], [0], [1], [0, 0, 1, 1], [], []>} : vector<16x128xbf16>, vector<128x16xbf16>, vector<16x16xf32> -> vector<16x16xf32>
    %58 = arith.mulf %55, %57 : vector<16x16xf32>
    %59 = arith.addf %53, %58 : vector<16x16xf32>
    %c0_50 = arith.constant 0 : index
    %c1_51 = arith.constant 1 : index
    %c0_52 = arith.constant 0 : index
    %c0_53 = arith.constant 0 : index
    %60 = vector.load %arg6[%c0_50, %c1_51, %c0_52, %c0_53] : memref<1x3x16x16xf32, #tpu.memory_space<vmem>>, vector<1x1x16x16xf32>
    %61 = vector.shape_cast %60 : vector<1x1x16x16xf32> to vector<16x16xf32>
    %62 = vector.extract_strided_slice %4 {offsets = [0, 1152], sizes = [16, 128], strides = [1, 1]} : vector<16x1536xbf16> to vector<16x128xbf16>
    %cst_54 = arith.constant dense<0.000000e+00> : vector<16x16xf32>
    %63 = tpu.matmul %62, %5, %cst_54 {dimension_numbers = #tpu.dot_dimension_numbers<[1], [0], [0], [1], [0, 0, 1, 1], [], []>} : vector<16x128xbf16>, vector<128x16xbf16>, vector<16x16xf32> -> vector<16x16xf32>
    %64 = arith.mulf %61, %63 : vector<16x16xf32>
    %65 = arith.addf %59, %64 : vector<16x16xf32>
    %c0_55 = arith.constant 0 : index
    %c2_56 = arith.constant 2 : index
    %c0_57 = arith.constant 0 : index
    %c0_58 = arith.constant 0 : index
    %66 = vector.load %arg6[%c0_55, %c2_56, %c0_57, %c0_58] : memref<1x3x16x16xf32, #tpu.memory_space<vmem>>, vector<1x1x16x16xf32>
    %67 = vector.shape_cast %66 : vector<1x1x16x16xf32> to vector<16x16xf32>
    %68 = vector.extract_strided_slice %4 {offsets = [0, 1280], sizes = [16, 128], strides = [1, 1]} : vector<16x1536xbf16> to vector<16x128xbf16>
    %cst_59 = arith.constant dense<0.000000e+00> : vector<16x16xf32>
    %69 = tpu.matmul %68, %5, %cst_59 {dimension_numbers = #tpu.dot_dimension_numbers<[1], [0], [0], [1], [0, 0, 1, 1], [], []>} : vector<16x128xbf16>, vector<128x16xbf16>, vector<16x16xf32> -> vector<16x16xf32>
    %70 = arith.mulf %67, %69 : vector<16x16xf32>
    %71 = arith.addf %65, %70 : vector<16x16xf32>
    %c0_60 = arith.constant 0 : index
    %c2_61 = arith.constant 2 : index
    %c0_62 = arith.constant 0 : index
    %c0_63 = arith.constant 0 : index
    %72 = vector.load %arg7[%c0_60, %c2_61, %c0_62, %c0_63] : memref<1x3x16x16xf32, #tpu.memory_space<vmem>>, vector<1x1x16x16xf32>
    %73 = vector.shape_cast %72 : vector<1x1x16x16xf32> to vector<16x16xf32>
    %74 = vector.shape_cast %71 : vector<16x16xf32> to vector<1x1x16x16xf32>
    tpu.vector_store %arg7[%c0_60, %c2_61, %c0_62, %c0_63], %74 {strides = array<i32>} : memref<1x3x16x16xf32, #tpu.memory_space<vmem>>, vector<1x1x16x16xf32>,
    return
  }
  func.func @transform_0(%arg0: i32, %arg1: i32, %arg2: i32) -> (i32, i32, i32) {
    %c0_i32 = arith.constant 0 : i32
    %c0_i32_0 = arith.constant 0 : i32
    %c0_i32_1 = arith.constant 0 : i32
    return %arg0, %c0_i32, %c0_i32_0 : i32, i32, i32
  }
  func.func @transform_1(%arg0: i32, %arg1: i32, %arg2: i32) -> (i32, i32) {
    %c0_i32 = arith.constant 0 : i32
    %c0_i32_0 = arith.constant 0 : i32
    return %arg1, %c0_i32 : i32, i32
  }
  func.func @transform_2(%arg0: i32, %arg1: i32, %arg2: i32) -> (i32, i32) {
    %c0_i32 = arith.constant 0 : i32
    %c0_i32_0 = arith.constant 0 : i32
    return %c0_i32, %arg2 : i32, i32
  }
  func.func @transform_3(%arg0: i32, %arg1: i32, %arg2: i32) -> (i32, i32, i32, i32) {
    %c0_i32 = arith.constant 0 : i32
    %c0_i32_0 = arith.constant 0 : i32
    return %arg0, %c0_i32, %arg1, %arg2 : i32, i32, i32, i32
  }
  func.func @transform_4(%arg0: i32, %arg1: i32, %arg2: i32) -> (i32, i32, i32, i32) {
    %c0_i32 = arith.constant 0 : i32
    %c0_i32_0 = arith.constant 0 : i32
    return %arg0, %c0_i32, %arg1, %arg2 : i32, i32, i32, i32
  }
}

</mosaic_0001>

<llo_original>
// kernel: zero_net_forward.3
$region0: #{zero_net_forward.3}
  #allocation0 [shape = 'u32[]', space=smem, size = 0x4, offset = 0x4, fixed_abs, tag = 'smem constant byte address 0x4 - core index']
  #allocation1 [shape = 'u32[144,128]{1,0:T(1,128)}', space=vmem, size = 0x12000, scoped, tag = 'internal scratch']
  %s0 = inlined_call_operand.vmem [shape: bf16[2,128,1536], index: 0, kind: input, shape index: {}]
  %s1 = inlined_call_operand.vmem [shape: bf16[16,128], index: 1, kind: input, shape index: {}]
  %s2 = inlined_call_operand.vmem [shape: bf16[128,16], index: 2, kind: input, shape index: {}]
  %s3 = inlined_call_operand.vmem [shape: f32[2,3,16,16], index: 3, kind: input, shape index: {}]
  %s4 = inlined_call_operand.hbm [shape: f32[2,3,16,16], index: 4, kind: output, shape index: {}]
  %s5 = sld [smem:[#allocation0]]
  $region49: #{zero_net_forward.3} parent=0
    _
  %s7 = ssub.s32 1, %s5
  %s8 = scalar_select 0, %s7, %s5
  $region1: #{zero_net_forward.3} parent=0
    #allocation2 [shape = 'u8[49152]{0}', space=vmem, size = 0xc000, scoped, tag = 'output window, operand 0']
    #allocation3 [shape = 's32[2]{0}', space=sflag, size = 0x8, scoped, tag = 'scoped memory for zero_net_forward.3']
    %9 = vsyncpa [#allocation3], 0
    %s10 = scalar_lea.sflag [#allocation3], 1
    %11 = vsyncpa %s10, 0
    loop: start=0, step=1, limit=4
    $region2: #{zero_net_forward.3} parent=1 // loop_pre_header
      _
    $region3: #{zero_net_forward.3} parent=1 // loop_header
      %s13 = sphi 0, %s17
      %p14 = scmp.ge.s32.totalorder %s13, 4
      %s20 = sphi 0, %s39
      %s21 = sphi 0, %s35
      %s22 = sphi 0, %s31
      %s23 = sphi 0, %s20
      %s24 = sphi 0, %s21
      %s25 = sphi 0, %s22
      %s26 = sphi 0, %s23
      %s27 = sphi 0, %s24
      %s28 = sphi 0, %s25
      %s42 = sphi 0, %s44
      %s45 = sphi 0, %s42
      %s46 = sphi 0, %s45
      %s62 = sphi 0, %s46
      %s68 = sphi 0, %s70
      %s71 = sphi 0, %s68
      %s72 = sphi 0, %s71
      %s88 = sphi 0, %s72
      %s94 = sphi 0, %s96
      %s97 = sphi 0, %s94
      %s98 = sphi 0, %s97
      %s114 = sphi 0, %s98
      %s124 = sphi 0, %s126
      %s127 = sphi 0, %s124
      %s128 = sphi 0, %s127
      %s144 = sphi 0, %s128
      %s154 = sphi 0, %s156
      %s157 = sphi 0, %s154
      %s158 = sphi 0, %s157
      %s174 = sphi 0, %s158
    $region4: #{zero_net_forward.3} parent=1 // loop_header_branch
      %16 = sbr.rel (%p14) target = $region8
    $region5: #{zero_net_forward.3} parent=1 // loop_body
      %s18 = ssub.s32 %s13, 1
      %s19 = ssub.s32 %s13, 2
      %s29 = sadd.s32 1, %s22
      %p30 = scmp.ge.s32.totalorder %s29, 1
      %s31 = scalar_select %p30, 0, %s29
      %s32 = sadd.s32 1, %s21
      %s33 = scalar_select %p30, %s32, %s21
      %p34 = scmp.ge.s32.totalorder %s33, 1
      %s35 = scalar_select %p34, 0, %s33
      %s36 = sadd.s32 1, %s20
      %s37 = scalar_select %p34, %s36, %s20
      %p38 = scmp.ge.s32.totalorder %s37, 2
      %s39 = scalar_select %p38, 0, %s37
      %s40 = ssub.s32 %s20, %s39
      %p41 = scmp.eq.s32.totalorder %s40, 0
      %s43 = sadd.s32 %s42, 1
      %s44 = scalar_select %p41, %s42, %s43
      %p47 = pneg %p41
      %p48 = scmp.eq.s32.totalorder %s13, 1
      %p49 = por %p47, %p48
      %p50 = scmp.ne.s32.totalorder %s42, %s45
      %p51 = scmp.eq.s32.totalorder %s13, 0
      %p52 = por %p50, %p51
      %p53 = scmp.ne.s32.totalorder %s42, %s45
      %p54 = scmp.eq.s32.totalorder %s18, 1
      %p55 = por %p53, %p54
      %p56 = scmp.ne.s32.totalorder %s45, %s46
      %p57 = scmp.eq.s32.totalorder %s18, 0
      %p58 = por %p56, %p57
      %p59 = scmp.ne.s32.totalorder %s45, %s46
      %p60 = scmp.eq.s32.totalorder %s19, 1
      %p61 = por %p59, %p60
      %p63 = scmp.ne.s32.totalorder %s46, %s62
      %p64 = scmp.eq.s32.totalorder %s19, 0
      %p65 = por %p63, %p64
      %s66 = ssub.s32 %s21, %s35
      %p67 = scmp.eq.s32.totalorder %s66, 0
      %s69 = sadd.s32 %s68, 1
      %s70 = scalar_select %p67, %s68, %s69
      %p73 = pneg %p67
      %p74 = scmp.eq.s32.totalorder %s13, 1
      %p75 = por %p73, %p74
      %p76 = scmp.ne.s32.totalorder %s68, %s71
      %p77 = scmp.eq.s32.totalorder %s13, 0
      %p78 = por %p76, %p77
      %p79 = scmp.ne.s32.totalorder %s68, %s71
      %p80 = scmp.eq.s32.totalorder %s18, 1
      %p81 = por %p79, %p80
      %p82 = scmp.ne.s32.totalorder %s71, %s72
      %p83 = scmp.eq.s32.totalorder %s18, 0
      %p84 = por %p82, %p83
      %p85 = scmp.ne.s32.totalorder %s71, %s72
      %p86 = scmp.eq.s32.totalorder %s19, 1
      %p87 = por %p85, %p86
      %p89 = scmp.ne.s32.totalorder %s72, %s88
      %p90 = scmp.eq.s32.totalorder %s19, 0
      %p91 = por %p89, %p90
      %s92 = ssub.s32 %s22, %s31
      %p93 = scmp.eq.s32.totalorder %s92, 0
      %s95 = sadd.s32 %s94, 1
      %s96 = scalar_select %p93, %s94, %s95
      %p99 = pneg %p93
      %p100 = scmp.eq.s32.totalorder %s13, 1
      %p101 = por %p99, %p100
      %p102 = scmp.ne.s32.totalorder %s94, %s97
      %p103 = scmp.eq.s32.totalorder %s13, 0
      %p104 = por %p102, %p103
      %p105 = scmp.ne.s32.totalorder %s94, %s97
      %p106 = scmp.eq.s32.totalorder %s18, 1
      %p107 = por %p105, %p106
      %p108 = scmp.ne.s32.totalorder %s97, %s98
      %p109 = scmp.eq.s32.totalorder %s18, 0
      %p110 = por %p108, %p109
      %p111 = scmp.ne.s32.totalorder %s97, %s98
      %p112 = scmp.eq.s32.totalorder %s19, 1
      %p113 = por %p111, %p112
      %p115 = scmp.ne.s32.totalorder %s98, %s114
      %p116 = scmp.eq.s32.totalorder %s19, 0
      %p117 = por %p115, %p116
      %s118 = ssub.s32 %s20, %s39
      %s119 = ssub.s32 %s21, %s35
      %s120 = sor.u32 %s118, %s119
      %s121 = ssub.s32 %s22, %s31
      %s122 = sor.u32 %s120, %s121
      %p123 = scmp.eq.s32.totalorder %s122, 0
      %s125 = sadd.s32 %s124, 1
      %s126 = scalar_select %p123, %s124, %s125
      %p129 = pneg %p123
      %p130 = scmp.eq.s32.totalorder %s13, 1
      %p131 = por %p129, %p130
      %p132 = scmp.ne.s32.totalorder %s124, %s127
      %p133 = scmp.eq.s32.totalorder %s13, 0
      %p134 = por %p132, %p133
      %p135 = scmp.ne.s32.totalorder %s124, %s127
      %p136 = scmp.eq.s32.totalorder %s18, 1
      %p137 = por %p135, %p136
      %p138 = scmp.ne.s32.totalorder %s127, %s128
      %p139 = scmp.eq.s32.totalorder %s18, 0
      %p140 = por %p138, %p139
      %p141 = scmp.ne.s32.totalorder %s127, %s128
      %p142 = scmp.eq.s32.totalorder %s19, 1
      %p143 = por %p141, %p142
      %p145 = scmp.ne.s32.totalorder %s128, %s144
      %p146 = scmp.eq.s32.totalorder %s19, 0
      %p147 = por %p145, %p146
      %s148 = ssub.s32 %s20, %s39
      %s149 = ssub.s32 %s21, %s35
      %s150 = sor.u32 %s148, %s149
      %s151 = ssub.s32 %s22, %s31
      %s152 = sor.u32 %s150, %s151
      %p153 = scmp.eq.s32.totalorder %s152, 0
      %s155 = sadd.s32 %s154, 1
      %s156 = scalar_select %p153, %s154, %s155
      %p159 = pneg %p153
      %p160 = scmp.eq.s32.totalorder %s13, 1
      %p161 = por %p159, %p160
      %p162 = scmp.ne.s32.totalorder %s154, %s157
      %p163 = scmp.eq.s32.totalorder %s13, 0
      %p164 = por %p162, %p163
      %p165 = scmp.ne.s32.totalorder %s154, %s157
      %p166 = scmp.eq.s32.totalorder %s18, 1
      %p167 = por %p165, %p166
      %p168 = scmp.ne.s32.totalorder %s157, %s158
      %p169 = scmp.eq.s32.totalorder %s18, 0
      %p170 = por %p168, %p169
      %p171 = scmp.ne.s32.totalorder %s157, %s158
      %p172 = scmp.eq.s32.totalorder %s19, 1
      %p173 = por %p171, %p172
      %p175 = scmp.ne.s32.totalorder %s158, %s174
      %p176 = scmp.eq.s32.totalorder %s19, 0
      %p177 = por %p175, %p176
      %p178 = scmp.le.s32.totalorder 1, %s13
      %p179 = scmp.lt.s32.totalorder %s13, 3
      %p180 = pnand %p178, %p179
      %p181 = pneg %p180
      // Predicated region
      $region9: #{zero_net_forward.3} parent=5 // pred_check
        _
      $region10: #{zero_net_forward.3} parent=5 // pred_check_branch
        %183 = sbr.rel (%p180) target = $region12
      $region11: #{zero_net_forward.3} parent=5 // pred_region
        %s184 = ssub.s32 %s13, 1
        // Predicated region
        $region13: #{zero_net_forward.3} parent=11 // pred_check
          %p185 = pneg %p84
        $region14: #{zero_net_forward.3} parent=11 // pred_check_branch
          %187 = sbr.rel (%p185) target = $region16
        $region15: #{zero_net_forward.3} parent=11 // pred_region
          %s188 = smul.u32 2, %s24
          %p189 = scmp.lt.s32.totalorder %s188, 1
          %s190 = scalar_select %p189, %s188, 1
          %s191 = smul.addr %s190, 4
          %s192 = scalar_lea.vmem %s1, %s191
          %s193 = smul.u32 2, %s24
        $region16: #{zero_net_forward.3} parent=11 // pred_fallthru
          _
        // Predicated region
        $region17: #{zero_net_forward.3} parent=11 // pred_check
          %p194 = pneg %p110
        $region18: #{zero_net_forward.3} parent=11 // pred_check_branch
          %196 = sbr.rel (%p194) target = $region20
        $region19: #{zero_net_forward.3} parent=11 // pred_region
          %p197 = scmp.lt.s32.totalorder %s25, 0
          %s198 = scalar_select %p197, %s25, 0
          %s199 = smul.addr %s198, 4
          %s200 = scalar_lea.vmem %s2, %s199
        $region20: #{zero_net_forward.3} parent=11 // pred_fallthru
          _
      $region12: #{zero_net_forward.3} parent=5 // pred_fallthru
        _
      %p201 = scmp.lt.s32.totalorder %s13, 2
      // Predicated region
      $region21: #{zero_net_forward.3} parent=5 // pred_check
        %p202 = pneg %p201
      $region22: #{zero_net_forward.3} parent=5 // pred_check_branch
        %204 = sbr.rel (%p202) target = $region24
      $region23: #{zero_net_forward.3} parent=5 // pred_region
        // Predicated region
        $region25: #{zero_net_forward.3} parent=23 // pred_check
          %p205 = pneg %p52
        $region26: #{zero_net_forward.3} parent=23 // pred_check_branch
          %207 = sbr.rel (%p205) target = $region28
        $region27: #{zero_net_forward.3} parent=23 // pred_region
          %p208 = scmp.lt.s32.totalorder %s20, 1
          %s209 = scalar_select %p208, %s20, 1
          %s210 = smul.addr %s209, 192
          %s211 = smul.addr %s210, 4
          %s212 = scalar_lea.vmem %s0, %s211
        $region28: #{zero_net_forward.3} parent=23 // pred_fallthru
          _
        // Predicated region
        $region29: #{zero_net_forward.3} parent=23 // pred_check
          %p213 = pneg %p134
        $region30: #{zero_net_forward.3} parent=23 // pred_check_branch
          %215 = sbr.rel (%p213) target = $region32
        $region31: #{zero_net_forward.3} parent=23 // pred_region
          %s216 = smul.u32 2, %s21
          %p217 = scmp.lt.s32.totalorder %s20, 1
          %s218 = scalar_select %p217, %s20, 1
          %p219 = scmp.lt.s32.totalorder %s216, 1
          %s220 = scalar_select %p219, %s216, 1
          %p221 = scmp.lt.s32.totalorder %s22, 0
          %s222 = scalar_select %p221, %s22, 0
          %s223 = sadd.s32 %s222, %s220
          %s224 = smul.addr %s218, 6
          %s225 = sadd.s32 %s223, %s224
          %s226 = smul.addr %s225, 8
          %s227 = scalar_lea.vmem %s3, %s226
          %s228 = smul.u32 2, %s21
        $region32: #{zero_net_forward.3} parent=23 // pred_fallthru
          _
      $region24: #{zero_net_forward.3} parent=5 // pred_fallthru
        _
      %p229 = scmp.le.s32.totalorder 1, %s13
      %p230 = scmp.lt.s32.totalorder %s13, 3
      %p231 = pnand %p229, %p230
      %p232 = pneg %p231
      // Predicated region
      $region33: #{zero_net_forward.3} parent=5 // pred_check
        _
      $region34: #{zero_net_forward.3} parent=5 // pred_check_branch
        %234 = sbr.rel (%p231) target = $region36
      $region35: #{zero_net_forward.3} parent=5 // pred_region
        %s235 = ssub.s32 %s13, 1
        %p236 = scmp.lt.s32.totalorder %s23, 1
        %s237 = scalar_select %p236, %s23, 1
        %s238 = smul.addr %s237, 192
        %s239 = smul.addr %s238, 4
        %s240 = scalar_lea.vmem %s0, %s239
        %p241 = pneg %p58
        %p242 = pneg %p55
        %s243 = smul.u32 2, %s24
        %p244 = scmp.lt.s32.totalorder %s243, 1
        %s245 = scalar_select %p244, %s243, 1
        %s246 = smul.addr %s245, 4
        %s247 = scalar_lea.vmem %s1, %s246
        %p248 = pneg %p84
        %p249 = pneg %p81
        %p250 = scmp.lt.s32.totalorder %s25, 0
        %s251 = scalar_select %p250, %s25, 0
        %s252 = smul.addr %s251, 4
        %s253 = scalar_lea.vmem %s2, %s252
        %p254 = pneg %p110
        %p255 = pneg %p107
        %s256 = smul.u32 2, %s24
        %p257 = scmp.lt.s32.totalorder %s23, 1
        %s258 = scalar_select %p257, %s23, 1
        %p259 = scmp.lt.s32.totalorder %s256, 1
        %s260 = scalar_select %p259, %s256, 1
        %p261 = scmp.lt.s32.totalorder %s25, 0
        %s262 = scalar_select %p261, %s25, 0
        %s263 = sadd.s32 %s262, %s260
        %s264 = smul.addr %s258, 6
        %s265 = sadd.s32 %s263, %s264
        %s266 = smul.addr %s265, 8
        %s267 = scalar_lea.vmem %s3, %s266
        %p268 = pneg %p140
        %p269 = pneg %p137
        %p270 = pneg %p170
        %p271 = pneg %p167
        %s272 = sand.u32 %s157, 1
        %s273 = scalar_lea.sflag [#allocation3], %s272
        %s274 = sand.u32 %s157, 1
        %s275 = smul.addr %s274, 48
        %s276 = scalar_lea.vmem [#allocation2], %s275
        %p277 = scmp.lt.s32.totalorder %s23, 1
        %s278 = scalar_select %p277, %s23, 1
        %s279 = smul.addr %s278, 192
        %s280 = smul.addr %s279, 4
        %s281 = scalar_lea.vmem %s0, %s280
        %s282 = smul.u32 2, %s24
        %p283 = scmp.lt.s32.totalorder %s282, 1
        %s284 = scalar_select %p283, %s282, 1
        %s285 = smul.addr %s284, 4
        %s286 = scalar_lea.vmem %s1, %s285
        %s287 = smul.u32 2, %s24
        %p288 = scmp.lt.s32.totalorder %s25, 0
        %s289 = scalar_select %p288, %s25, 0
        %s290 = smul.addr %s289, 4
        %s291 = scalar_lea.vmem %s2, %s290
        %s292 = smul.u32 2, %s24
        %p293 = scmp.lt.s32.totalorder %s23, 1
        %s294 = scalar_select %p293, %s23, 1
        %p295 = scmp.lt.s32.totalorder %s292, 1
        %s296 = scalar_select %p295, %s292, 1
        %p297 = scmp.lt.s32.totalorder %s25, 0
        %s298 = scalar_select %p297, %s25, 0
        %s299 = sadd.s32 %s298, %s296
        %s300 = smul.addr %s294, 6
        %s301 = sadd.s32 %s299, %s300
        %s302 = smul.addr %s301, 8
        %s303 = scalar_lea.vmem %s3, %s302
        %s304 = smul.u32 2, %s24
        %s305 = smul.u32 2, %s24
        %v307 = vld [vmem:[%s286] sm:$0xf]
        %v308 = vld [vmem:[%s286 + $0x4] sm:$0xf]
        %v309 = vld [vmem:[%s281] sm:$0xff]
        %v310 = vld [vmem:[%s281 + $0x8] sm:$0xff]
        %v311 = vld [vmem:[%s281 + $0x10] sm:$0xff]
        %v312 = vld [vmem:[%s281 + $0x18] sm:$0xff]
        %v313 = vld [vmem:[%s281 + $0x20] sm:$0xff]
        %v314 = vld [vmem:[%s281 + $0x28] sm:$0xff]
        %v315 = vld [vmem:[%s281 + $0x30] sm:$0xff]
        %v316 = vld [vmem:[%s281 + $0x38] sm:$0xff]
        %v317 = vld [vmem:[%s281 + $0x40] sm:$0xff]
        %v318 = vld [vmem:[%s281 + $0x48] sm:$0xff]
        %v319 = vld [vmem:[%s281 + $0x50] sm:$0xff]
        %v320 = vld [vmem:[%s281 + $0x58] sm:$0xff]
        %v321 = vld [vmem:[%s281 + $0x60] sm:$0xff]
        %v322 = vld [vmem:[%s281 + $0x68] sm:$0xff]
        %v323 = vld [vmem:[%s281 + $0x70] sm:$0xff]
        %v324 = vld [vmem:[%s281 + $0x78] sm:$0xff]
        %v325 = vld [vmem:[%s281 + $0x80] sm:$0xff]
        %v326 = vld [vmem:[%s281 + $0x88] sm:$0xff]
        %v327 = vld [vmem:[%s281 + $0x90] sm:$0xff]
        %v328 = vld [vmem:[%s281 + $0x98] sm:$0xff]
        %v329 = vld [vmem:[%s281 + $0xa0] sm:$0xff]
        %v330 = vld [vmem:[%s281 + $0xa8] sm:$0xff]
        %v331 = vld [vmem:[%s281 + $0xb0] sm:$0xff]
        %v332 = vld [vmem:[%s281 + $0xb8] sm:$0xff]
        %v333 = vld [vmem:[%s281 + $0xc0] sm:$0xff]
        %v334 = vld [vmem:[%s281 + $0xc8] sm:$0xff]
        %v335 = vld [vmem:[%s281 + $0xd0] sm:$0xff]
        %v336 = vld [vmem:[%s281 + $0xd8] sm:$0xff]
        %v337 = vld [vmem:[%s281 + $0xe0] sm:$0xff]
        %v338 = vld [vmem:[%s281 + $0xe8] sm:$0xff]
        %v339 = vld [vmem:[%s281 + $0xf0] sm:$0xff]
        %v340 = vld [vmem:[%s281 + $0xf8] sm:$0xff]
        %v341 = vld [vmem:[%s281 + $0x100] sm:$0xff]
        %v342 = vld [vmem:[%s281 + $0x108] sm:$0xff]
        %v343 = vld [vmem:[%s281 + $0x110] sm:$0xff]
        %v344 = vld [vmem:[%s281 + $0x118] sm:$0xff]
        %v345 = vld [vmem:[%s281 + $0x120] sm:$0xff]
        %v346 = vld [vmem:[%s281 + $0x128] sm:$0xff]
        %v347 = vld [vmem:[%s281 + $0x130] sm:$0xff]
        %v348 = vld [vmem:[%s281 + $0x138] sm:$0xff]
        %v349 = vld [vmem:[%s281 + $0x140] sm:$0xff]
        %v350 = vld [vmem:[%s281 + $0x148] sm:$0xff]
        %v351 = vld [vmem:[%s281 + $0x150] sm:$0xff]
        %v352 = vld [vmem:[%s281 + $0x158] sm:$0xff]
        %v353 = vld [vmem:[%s281 + $0x160] sm:$0xff]
        %v354 = vld [vmem:[%s281 + $0x168] sm:$0xff]
        %v355 = vld [vmem:[%s281 + $0x170] sm:$0xff]
        %v356 = vld [vmem:[%s281 + $0x178] sm:$0xff]
        %v357 = vld [vmem:[%s281 + $0x180] sm:$0xff]
        %v358 = vld [vmem:[%s281 + $0x188] sm:$0xff]
        %v359 = vld [vmem:[%s281 + $0x190] sm:$0xff]
        %v360 = vld [vmem:[%s281 + $0x198] sm:$0xff]
        %v361 = vld [vmem:[%s281 + $0x1a0] sm:$0xff]
        %v362 = vld [vmem:[%s281 + $0x1a8] sm:$0xff]
        %v363 = vld [vmem:[%s281 + $0x1b0] sm:$0xff]
        %v364 = vld [vmem:[%s281 + $0x1b8] sm:$0xff]
        %v365 = vld [vmem:[%s281 + $0x1c0] sm:$0xff]
        %v366 = vld [vmem:[%s281 + $0x1c8] sm:$0xff]
        %v367 = vld [vmem:[%s281 + $0x1d0] sm:$0xff]
        %v368 = vld [vmem:[%s281 + $0x1d8] sm:$0xff]
        %v369 = vld [vmem:[%s281 + $0x1e0] sm:$0xff]
        %v370 = vld [vmem:[%s281 + $0x1e8] sm:$0xff]
        %v371 = vld [vmem:[%s281 + $0x1f0] sm:$0xff]
        %v372 = vld [vmem:[%s281 + $0x1f8] sm:$0xff]
        %v373 = vld [vmem:[%s281 + $0x200] sm:$0xff]
        %v374 = vld [vmem:[%s281 + $0x208] sm:$0xff]
        %v375 = vld [vmem:[%s281 + $0x210] sm:$0xff]
        %v376 = vld [vmem:[%s281 + $0x218] sm:$0xff]
        %v377 = vld [vmem:[%s281 + $0x220] sm:$0xff]
        %v378 = vld [vmem:[%s281 + $0x228] sm:$0xff]
        %v379 = vld [vmem:[%s281 + $0x230] sm:$0xff]
        %v380 = vld [vmem:[%s281 + $0x238] sm:$0xff]
        %v381 = vld [vmem:[%s281 + $0x240] sm:$0xff]
        %v382 = vld [vmem:[%s281 + $0x248] sm:$0xff]
        %v383 = vld [vmem:[%s281 + $0x250] sm:$0xff]
        %v384 = vld [vmem:[%s281 + $0x258] sm:$0xff]
        %v385 = vld [vmem:[%s281 + $0x260] sm:$0xff]
        %v386 = vld [vmem:[%s281 + $0x268] sm:$0xff]
        %v387 = vld [vmem:[%s281 + $0x270] sm:$0xff]
        %v388 = vld [vmem:[%s281 + $0x278] sm:$0xff]
        %v389 = vld [vmem:[%s281 + $0x280] sm:$0xff]
        %v390 = vld [vmem:[%s281 + $0x288] sm:$0xff]
        %v391 = vld [vmem:[%s281 + $0x290] sm:$0xff]
        %v392 = vld [vmem:[%s281 + $0x298] sm:$0xff]
        %v393 = vld [vmem:[%s281 + $0x2a0] sm:$0xff]
        %v394 = vld [vmem:[%s281 + $0x2a8] sm:$0xff]
        %v395 = vld [vmem:[%s281 + $0x2b0] sm:$0xff]
        %v396 = vld [vmem:[%s281 + $0x2b8] sm:$0xff]
        %v397 = vld [vmem:[%s281 + $0x2c0] sm:$0xff]
        %v398 = vld [vmem:[%s281 + $0x2c8] sm:$0xff]
        %v399 = vld [vmem:[%s281 + $0x2d0] sm:$0xff]
        %v400 = vld [vmem:[%s281 + $0x2d8] sm:$0xff]
        %v401 = vld [vmem:[%s281 + $0x2e0] sm:$0xff]
        %v402 = vld [vmem:[%s281 + $0x2e8] sm:$0xff]
        %v403 = vld [vmem:[%s281 + $0x2f0] sm:$0xff]
        %v404 = vld [vmem:[%s281 + $0x2f8] sm:$0xff]
        %v407 = vunpack.c.l.b16 %v307
        %v408 = vunpack.c.l.b16 %v308
        %v409 = vpack.c.b16 %v408, %v407
        %v507 = vunpack.c.l.b16 %v309
        %v508 = vunpack.c.h.b16 %v309
        %v509 = vunpack.c.l.b16 %v310
        %v510 = vunpack.c.h.b16 %v310
        %v511 = vunpack.c.l.b16 %v311
        %v512 = vunpack.c.h.b16 %v311
        %v513 = vunpack.c.l.b16 %v312
        %v514 = vunpack.c.h.b16 %v312
        %v515 = vunpack.c.l.b16 %v313
        %v516 = vunpack.c.h.b16 %v313
        %v517 = vunpack.c.l.b16 %v314
        %v518 = vunpack.c.h.b16 %v314
        %v519 = vunpack.c.l.b16 %v315
        %v520 = vunpack.c.h.b16 %v315
        %v521 = vunpack.c.l.b16 %v316
        %v522 = vunpack.c.h.b16 %v316
        %v523 = vunpack.c.l.b16 %v317
        %v524 = vunpack.c.h.b16 %v317
        %v525 = vunpack.c.l.b16 %v318
        %v526 = vunpack.c.h.b16 %v318
        %v527 = vunpack.c.l.b16 %v319
        %v528 = vunpack.c.h.b16 %v319
        %v529 = vunpack.c.l.b16 %v320
        %v530 = vunpack.c.h.b16 %v320
        %v531 = vunpack.c.l.b16 %v321
        %v532 = vunpack.c.h.b16 %v321
        %v533 = vunpack.c.l.b16 %v322
        %v534 = vunpack.c.h.b16 %v322
        %v535 = vunpack.c.l.b16 %v323
        %v536 = vunpack.c.h.b16 %v323
        %v537 = vunpack.c.l.b16 %v324
        %v538 = vunpack.c.h.b16 %v324
        %v539 = vunpack.c.l.b16 %v325
        %v540 = vunpack.c.h.b16 %v325
        %v541 = vunpack.c.l.b16 %v326
        %v542 = vunpack.c.h.b16 %v326
        %v543 = vunpack.c.l.b16 %v327
        %v544 = vunpack.c.h.b16 %v327
        %v545 = vunpack.c.l.b16 %v328
        %v546 = vunpack.c.h.b16 %v328
        %v547 = vunpack.c.l.b16 %v329
        %v548 = vunpack.c.h.b16 %v329
        %v549 = vunpack.c.l.b16 %v330
        %v550 = vunpack.c.h.b16 %v330
        %v551 = vunpack.c.l.b16 %v331
        %v552 = vunpack.c.h.b16 %v331
        %v553 = vunpack.c.l.b16 %v332
        %v554 = vunpack.c.h.b16 %v332
        %v555 = vunpack.c.l.b16 %v333
        %v556 = vunpack.c.h.b16 %v333
        %v557 = vunpack.c.l.b16 %v334
        %v558 = vunpack.c.h.b16 %v334
        %v559 = vunpack.c.l.b16 %v335
        %v560 = vunpack.c.h.b16 %v335
        %v561 = vunpack.c.l.b16 %v336
        %v562 = vunpack.c.h.b16 %v336
        %v563 = vunpack.c.l.b16 %v337
        %v564 = vunpack.c.h.b16 %v337
        %v565 = vunpack.c.l.b16 %v338
        %v566 = vunpack.c.h.b16 %v338
        %v567 = vunpack.c.l.b16 %v339
        %v568 = vunpack.c.h.b16 %v339
        %v569 = vunpack.c.l.b16 %v340
        %v570 = vunpack.c.h.b16 %v340
        %v571 = vunpack.c.l.b16 %v341
        %v572 = vunpack.c.h.b16 %v341
        %v573 = vunpack.c.l.b16 %v342
        %v574 = vunpack.c.h.b16 %v342
        %v575 = vunpack.c.l.b16 %v343
        %v576 = vunpack.c.h.b16 %v343
        %v577 = vunpack.c.l.b16 %v344
        %v578 = vunpack.c.h.b16 %v344
        %v579 = vunpack.c.l.b16 %v345
        %v580 = vunpack.c.h.b16 %v345
        %v581 = vunpack.c.l.b16 %v346
        %v582 = vunpack.c.h.b16 %v346
        %v583 = vunpack.c.l.b16 %v347
        %v584 = vunpack.c.h.b16 %v347
        %v585 = vunpack.c.l.b16 %v348
        %v586 = vunpack.c.h.b16 %v348
        %v587 = vunpack.c.l.b16 %v349
        %v588 = vunpack.c.h.b16 %v349
        %v589 = vunpack.c.l.b16 %v350
        %v590 = vunpack.c.h.b16 %v350
        %v591 = vunpack.c.l.b16 %v351
        %v592 = vunpack.c.h.b16 %v351
        %v593 = vunpack.c.l.b16 %v352
        %v594 = vunpack.c.h.b16 %v352
        %v595 = vunpack.c.l.b16 %v353
        %v596 = vunpack.c.h.b16 %v353
        %v597 = vunpack.c.l.b16 %v354
        %v598 = vunpack.c.h.b16 %v354
        %v599 = vunpack.c.l.b16 %v355
        %v600 = vunpack.c.h.b16 %v355
        %v601 = vunpack.c.l.b16 %v356
        %v602 = vunpack.c.h.b16 %v356
        %v603 = vunpack.c.l.b16 %v357
        %v604 = vunpack.c.h.b16 %v357
        %v605 = vunpack.c.l.b16 %v358
        %v606 = vunpack.c.h.b16 %v358
        %v607 = vunpack.c.l.b16 %v359
        %v608 = vunpack.c.h.b16 %v359
        %v609 = vunpack.c.l.b16 %v360
        %v610 = vunpack.c.h.b16 %v360
        %v611 = vunpack.c.l.b16 %v361
        %v612 = vunpack.c.h.b16 %v361
        %v613 = vunpack.c.l.b16 %v362
        %v614 = vunpack.c.h.b16 %v362
        %v615 = vunpack.c.l.b16 %v363
        %v616 = vunpack.c.h.b16 %v363
        %v617 = vunpack.c.l.b16 %v364
        %v618 = vunpack.c.h.b16 %v364
        %v619 = vunpack.c.l.b16 %v365
        %v620 = vunpack.c.h.b16 %v365
        %v621 = vunpack.c.l.b16 %v366
        %v622 = vunpack.c.h.b16 %v366
        %v623 = vunpack.c.l.b16 %v367
        %v624 = vunpack.c.h.b16 %v367
        %v625 = vunpack.c.l.b16 %v368
        %v626 = vunpack.c.h.b16 %v368
        %v627 = vunpack.c.l.b16 %v369
        %v628 = vunpack.c.h.b16 %v369
        %v629 = vunpack.c.l.b16 %v370
        %v630 = vunpack.c.h.b16 %v370
        %v631 = vunpack.c.l.b16 %v371
        %v632 = vunpack.c.h.b16 %v371
        %v633 = vunpack.c.l.b16 %v372
        %v634 = vunpack.c.h.b16 %v372
        %v635 = vunpack.c.l.b16 %v373
        %v636 = vunpack.c.h.b16 %v373
        %v637 = vunpack.c.l.b16 %v374
        %v638 = vunpack.c.h.b16 %v374
        %v639 = vunpack.c.l.b16 %v375
        %v640 = vunpack.c.h.b16 %v375
        %v641 = vunpack.c.l.b16 %v376
        %v642 = vunpack.c.h.b16 %v376
        %v643 = vunpack.c.l.b16 %v377
        %v644 = vunpack.c.h.b16 %v377
        %v645 = vunpack.c.l.b16 %v378
        %v646 = vunpack.c.h.b16 %v378
        %v647 = vunpack.c.l.b16 %v379
        %v648 = vunpack.c.h.b16 %v379
        %v649 = vunpack.c.l.b16 %v380
        %v650 = vunpack.c.h.b16 %v380
        %v651 = vunpack.c.l.b16 %v381
        %v652 = vunpack.c.h.b16 %v381
        %v653 = vunpack.c.l.b16 %v382
        %v654 = vunpack.c.h.b16 %v382
        %v655 = vunpack.c.l.b16 %v383
        %v656 = vunpack.c.h.b16 %v383
        %v657 = vunpack.c.l.b16 %v384
        %v658 = vunpack.c.h.b16 %v384
        %v659 = vunpack.c.l.b16 %v385
        %v660 = vunpack.c.h.b16 %v385
        %v661 = vunpack.c.l.b16 %v386
        %v662 = vunpack.c.h.b16 %v386
        %v663 = vunpack.c.l.b16 %v387
        %v664 = vunpack.c.h.b16 %v387
        %v665 = vunpack.c.l.b16 %v388
        %v666 = vunpack.c.h.b16 %v388
        %v667 = vunpack.c.l.b16 %v389
        %v668 = vunpack.c.h.b16 %v389
        %v669 = vunpack.c.l.b16 %v390
        %v670 = vunpack.c.h.b16 %v390
        %v671 = vunpack.c.l.b16 %v391
        %v672 = vunpack.c.h.b16 %v391
        %v673 = vunpack.c.l.b16 %v392
        %v674 = vunpack.c.h.b16 %v392
        %v675 = vunpack.c.l.b16 %v393
        %v676 = vunpack.c.h.b16 %v393
        %v677 = vunpack.c.l.b16 %v394
        %v678 = vunpack.c.h.b16 %v394
        %v679 = vunpack.c.l.b16 %v395
        %v680 = vunpack.c.h.b16 %v395
        %v681 = vunpack.c.l.b16 %v396
        %v682 = vunpack.c.h.b16 %v396
        %v683 = vunpack.c.l.b16 %v397
        %v684 = vunpack.c.h.b16 %v397
        %v685 = vunpack.c.l.b16 %v398
        %v686 = vunpack.c.h.b16 %v398
        %v687 = vunpack.c.l.b16 %v399
        %v688 = vunpack.c.h.b16 %v399
        %v689 = vunpack.c.l.b16 %v400
        %v690 = vunpack.c.h.b16 %v400
        %v691 = vunpack.c.l.b16 %v401
        %v692 = vunpack.c.h.b16 %v401
        %v693 = vunpack.c.l.b16 %v402
        %v694 = vunpack.c.h.b16 %v402
        %v695 = vunpack.c.l.b16 %v403
        %v696 = vunpack.c.h.b16 %v403
        %v697 = vunpack.c.l.b16 %v404
        %v698 = vunpack.c.h.b16 %v404
        %v699 = vpack.c.b16 %v519, %v507
        %v700 = vpack.c.b16 %v520, %v508
        %v701 = vpack.c.b16 %v521, %v509
        %v702 = vpack.c.b16 %v522, %v510
        %v703 = vpack.c.b16 %v523, %v511
        %v704 = vpack.c.b16 %v524, %v512
        %v705 = vpack.c.b16 %v525, %v513
        %v706 = vpack.c.b16 %v526, %v514
        %v707 = vpack.c.b16 %v527, %v515
        %v708 = vpack.c.b16 %v528, %v516
        %v709 = vpack.c.b16 %v529, %v517
        %v710 = vpack.c.b16 %v530, %v518
        %v711 = vpack.c.b16 %v543, %v531
        %v712 = vpack.c.b16 %v544, %v532
        %v713 = vpack.c.b16 %v545, %v533
        %v714 = vpack.c.b16 %v546, %v534
        %v715 = vpack.c.b16 %v547, %v535
        %v716 = vpack.c.b16 %v548, %v536
        %v717 = vpack.c.b16 %v549, %v537
        %v718 = vpack.c.b16 %v550, %v538
        %v719 = vpack.c.b16 %v551, %v539
        %v720 = vpack.c.b16 %v552, %v540
        %v721 = vpack.c.b16 %v553, %v541
        %v722 = vpack.c.b16 %v554, %v542
        %v723 = vpack.c.b16 %v567, %v555
        %v724 = vpack.c.b16 %v568, %v556
        %v725 = vpack.c.b16 %v569, %v557
        %v726 = vpack.c.b16 %v570, %v558
        %v727 = vpack.c.b16 %v571, %v559
        %v728 = vpack.c.b16 %v572, %v560
        %v729 = vpack.c.b16 %v573, %v561
        %v730 = vpack.c.b16 %v574, %v562
        %v731 = vpack.c.b16 %v575, %v563
        %v732 = vpack.c.b16 %v576, %v564
        %v733 = vpack.c.b16 %v577, %v565
        %v734 = vpack.c.b16 %v578, %v566
        %v735 = vpack.c.b16 %v591, %v579
        %v736 = vpack.c.b16 %v592, %v580
        %v737 = vpack.c.b16 %v593, %v581
        %v738 = vpack.c.b16 %v594, %v582
        %v739 = vpack.c.b16 %v595, %v583
        %v740 = vpack.c.b16 %v596, %v584
        %v741 = vpack.c.b16 %v597, %v585
        %v742 = vpack.c.b16 %v598, %v586
        %v743 = vpack.c.b16 %v599, %v587
        %v744 = vpack.c.b16 %v600, %v588
        %v745 = vpack.c.b16 %v601, %v589
        %v746 = vpack.c.b16 %v602, %v590
        %v747 = vpack.c.b16 %v615, %v603
        %v748 = vpack.c.b16 %v616, %v604
        %v749 = vpack.c.b16 %v617, %v605
        %v750 = vpack.c.b16 %v618, %v606
        %v751 = vpack.c.b16 %v619, %v607
        %v752 = vpack.c.b16 %v620, %v608
        %v753 = vpack.c.b16 %v621, %v609
        %v754 = vpack.c.b16 %v622, %v610
        %v755 = vpack.c.b16 %v623, %v611
        %v756 = vpack.c.b16 %v624, %v612
        %v757 = vpack.c.b16 %v625, %v613
        %v758 = vpack.c.b16 %v626, %v614
        %v759 = vpack.c.b16 %v639, %v627
        %v760 = vpack.c.b16 %v640, %v628
        %v761 = vpack.c.b16 %v641, %v629
        %v762 = vpack.c.b16 %v642, %v630
        %v763 = vpack.c.b16 %v643, %v631
        %v764 = vpack.c.b16 %v644, %v632
        %v765 = vpack.c.b16 %v645, %v633
        %v766 = vpack.c.b16 %v646, %v634
        %v767 = vpack.c.b16 %v647, %v635
        %v768 = vpack.c.b16 %v648, %v636
        %v769 = vpack.c.b16 %v649, %v637
        %v770 = vpack.c.b16 %v650, %v638
        %v771 = vpack.c.b16 %v663, %v651
        %v772 = vpack.c.b16 %v664, %v652
        %v773 = vpack.c.b16 %v665, %v653
        %v774 = vpack.c.b16 %v666, %v654
        %v775 = vpack.c.b16 %v667, %v655
        %v776 = vpack.c.b16 %v668, %v656
        %v777 = vpack.c.b16 %v669, %v657
        %v778 = vpack.c.b16 %v670, %v658
        %v779 = vpack.c.b16 %v671, %v659
        %v780 = vpack.c.b16 %v672, %v660
        %v781 = vpack.c.b16 %v673, %v661
        %v782 = vpack.c.b16 %v674, %v662
        %v783 = vpack.c.b16 %v687, %v675
        %v784 = vpack.c.b16 %v688, %v676
        %v785 = vpack.c.b16 %v689, %v677
        %v786 = vpack.c.b16 %v690, %v678
        %v787 = vpack.c.b16 %v691, %v679
        %v788 = vpack.c.b16 %v692, %v680
        %v789 = vpack.c.b16 %v693, %v681
        %v790 = vpack.c.b16 %v694, %v682
        %v791 = vpack.c.b16 %v695, %v683
        %v792 = vpack.c.b16 %v696, %v684
        %v793 = vpack.c.b16 %v697, %v685
        %v794 = vpack.c.b16 %v698, %v686
        %891 = vmatprep.subr.bf16.mxu0 %v700
        %892 = vmatpush1.bf16.msra.mxu0 %v699
        %893 = vmatprep.subr.bf16.mxu0 %v712
        %894 = vmatpush1.bf16.msra.mxu0 %v711
        %895 = vmatprep.subr.bf16.mxu0 %v724
        %896 = vmatpush1.bf16.msra.mxu0 %v723
        %897 = vmatprep.subr.bf16.mxu0 %v736
        %898 = vmatpush1.bf16.msra.mxu0 %v735
        %899 = vmatprep.subr.bf16.mxu0 %v748
        %900 = vmatpush1.bf16.msra.mxu0 %v747
        %901 = vmatprep.subr.bf16.mxu0 %v760
        %902 = vmatpush1.bf16.msra.mxu0 %v759
        %903 = vmatprep.subr.bf16.mxu0 %v772
        %904 = vmatpush1.bf16.msra.mxu0 %v771
        %905 = vmatprep.subr.bf16.mxu0 %v784
        %906 = vmatpush1.bf16.msra.mxu0 %v783
        %907 = vmatprep.subr.bf16.mxu0 0
        %908 = vmatpush1.bf16.msra.mxu0 0
        %909 = vmatprep.subr.bf16.mxu0 0
        %910 = vmatpush1.bf16.msra.mxu0 0
        %911 = vmatprep.subr.bf16.mxu0 0
        %912 = vmatpush1.bf16.msra.mxu0 0
        %913 = vmatprep.subr.bf16.mxu0 0
        %914 = vmatpush1.bf16.msra.mxu0 0
        %915 = vmatprep.subr.bf16.mxu0 0
        %916 = vmatpush1.bf16.msra.mxu0 0
        %917 = vmatprep.subr.bf16.mxu0 0
        %918 = vmatpush1.bf16.msra.mxu0 0
        %919 = vmatprep.subr.bf16.mxu0 0
        %920 = vmatpush1.bf16.msra.mxu0 0
        %921 = vmatprep.subr.bf16.mxu0 0
        %922 = vmatpush1.bf16.msra.mxu0 0
        %923 = vmatprep.mubr.bf16.mxu0 0
        %924 = vmatmul.mubr.bf16.gmra.mrb[0].mxu0 %v409
        %v925 = vpop.f32.mrb[0].mxu0
        %v926 = vadd.f32 0.0, %v925
        %v927 = vpop.f32.mrb[0].mxu0
        %v928 = vadd.f32 0.0, %v927
        %v929 = vpop.f32.mrb[0].mxu0
        %v930 = vadd.f32 0.0, %v929
        %v931 = vpop.f32.mrb[0].mxu0
        %v932 = vadd.f32 0.0, %v931
        %933 = vdwg.mxu0
        %934 = vmatprep.subr.bf16.mxu0 %v702
        %935 = vmatpush1.bf16.msra.mxu0 %v701
        %936 = vmatprep.subr.bf16.mxu0 %v714
        %937 = vmatpush1.bf16.msra.mxu0 %v713
        %938 = vmatprep.subr.bf16.mxu0 %v726
        %939 = vmatpush1.bf16.msra.mxu0 %v725
        %940 = vmatprep.subr.bf16.mxu0 %v738
        %941 = vmatpush1.bf16.msra.mxu0 %v737
        %942 = vmatprep.subr.bf16.mxu0 %v750
        %943 = vmatpush1.bf16.msra.mxu0 %v749
        %944 = vmatprep.subr.bf16.mxu0 %v762
        %945 = vmatpush1.bf16.msra.mxu0 %v761
        %946 = vmatprep.subr.bf16.mxu0 %v774
        %947 = vmatpush1.bf16.msra.mxu0 %v773
        %948 = vmatprep.subr.bf16.mxu0 %v786
        %949 = vmatpush1.bf16.msra.mxu0 %v785
        %950 = vmatprep.subr.bf16.mxu0 0
        %951 = vmatpush1.bf16.msra.mxu0 0
        %952 = vmatprep.subr.bf16.mxu0 0
        %953 = vmatpush1.bf16.msra.mxu0 0
        %954 = vmatprep.subr.bf16.mxu0 0
        %955 = vmatpush1.bf16.msra.mxu0 0
        %956 = vmatprep.subr.bf16.mxu0 0
        %957 = vmatpush1.bf16.msra.mxu0 0
        %958 = vmatprep.subr.bf16.mxu0 0
        %959 = vmatpush1.bf16.msra.mxu0 0
        %960 = vmatprep.subr.bf16.mxu0 0
        %961 = vmatpush1.bf16.msra.mxu0 0
        %962 = vmatprep.subr.bf16.mxu0 0
        %963 = vmatpush1.bf16.msra.mxu0 0
        %964 = vmatprep.subr.bf16.mxu0 0
        %965 = vmatpush1.bf16.msra.mxu0 0
        %966 = vmatprep.mubr.bf16.mxu0 0
        %967 = vmatmul.mubr.bf16.gmra.mrb[0].mxu0 %v409
        %v968 = vpop.f32.mrb[0].mxu0
        %v969 = vadd.f32 0.0, %v968
        %v970 = vpop.f32.mrb[0].mxu0
        %v971 = vadd.f32 0.0, %v970
        %v972 = vpop.f32.mrb[0].mxu0
        %v973 = vadd.f32 0.0, %v972
        %v974 = vpop.f32.mrb[0].mxu0
        %v975 = vadd.f32 0.0, %v974
        %976 = vdwg.mxu0
        %977 = vmatprep.subr.bf16.mxu0 %v704
        %978 = vmatpush1.bf16.msra.mxu0 %v703
        %979 = vmatprep.subr.bf16.mxu0 %v716
        %980 = vmatpush1.bf16.msra.mxu0 %v715
        %981 = vmatprep.subr.bf16.mxu0 %v728
        %982 = vmatpush1.bf16.msra.mxu0 %v727
        %983 = vmatprep.subr.bf16.mxu0 %v740
        %984 = vmatpush1.bf16.msra.mxu0 %v739
        %985 = vmatprep.subr.bf16.mxu0 %v752
        %986 = vmatpush1.bf16.msra.mxu0 %v751
        %987 = vmatprep.subr.bf16.mxu0 %v764
        %988 = vmatpush1.bf16.msra.mxu0 %v763
        %989 = vmatprep.subr.bf16.mxu0 %v776
        %990 = vmatpush1.bf16.msra.mxu0 %v775
        %991 = vmatprep.subr.bf16.mxu0 %v788
        %992 = vmatpush1.bf16.msra.mxu0 %v787
        %993 = vmatprep.subr.bf16.mxu0 0
        %994 = vmatpush1.bf16.msra.mxu0 0
        %995 = vmatprep.subr.bf16.mxu0 0
        %996 = vmatpush1.bf16.msra.mxu0 0
        %997 = vmatprep.subr.bf16.mxu0 0
        %998 = vmatpush1.bf16.msra.mxu0 0
        %999 = vmatprep.subr.bf16.mxu0 0
        %1000 = vmatpush1.bf16.msra.mxu0 0
        %1001 = vmatprep.subr.bf16.mxu0 0
        %1002 = vmatpush1.bf16.msra.mxu0 0
        %1003 = vmatprep.subr.bf16.mxu0 0
        %1004 = vmatpush1.bf16.msra.mxu0 0
        %1005 = vmatprep.subr.bf16.mxu0 0
        %1006 = vmatpush1.bf16.msra.mxu0 0
        %1007 = vmatprep.subr.bf16.mxu0 0
        %1008 = vmatpush1.bf16.msra.mxu0 0
        %1009 = vmatprep.mubr.bf16.mxu0 0
        %1010 = vmatmul.mubr.bf16.gmra.mrb[0].mxu0 %v409
        %v1011 = vpop.f32.mrb[0].mxu0
        %v1012 = vadd.f32 0.0, %v1011
        %v1013 = vpop.f32.mrb[0].mxu0
        %v1014 = vadd.f32 0.0, %v1013
        %v1015 = vpop.f32.mrb[0].mxu0
        %v1016 = vadd.f32 0.0, %v1015
        %v1017 = vpop.f32.mrb[0].mxu0
        %v1018 = vadd.f32 0.0, %v1017
        %1019 = vdwg.mxu0
        %1020 = vmatprep.subr.bf16.mxu0 %v706
        %1021 = vmatpush1.bf16.msra.mxu0 %v705
        %1022 = vmatprep.subr.bf16.mxu0 %v718
        %1023 = vmatpush1.bf16.msra.mxu0 %v717
        %1024 = vmatprep.subr.bf16.mxu0 %v730
        %1025 = vmatpush1.bf16.msra.mxu0 %v729
        %1026 = vmatprep.subr.bf16.mxu0 %v742
        %1027 = vmatpush1.bf16.msra.mxu0 %v741
        %1028 = vmatprep.subr.bf16.mxu0 %v754
        %1029 = vmatpush1.bf16.msra.mxu0 %v753
        %1030 = vmatprep.subr.bf16.mxu0 %v766
        %1031 = vmatpush1.bf16.msra.mxu0 %v765
        %1032 = vmatprep.subr.bf16.mxu0 %v778
        %1033 = vmatpush1.bf16.msra.mxu0 %v777
        %1034 = vmatprep.subr.bf16.mxu0 %v790
        %1035 = vmatpush1.bf16.msra.mxu0 %v789
        %1036 = vmatprep.subr.bf16.mxu0 0
        %1037 = vmatpush1.bf16.msra.mxu0 0
        %1038 = vmatprep.subr.bf16.mxu0 0
        %1039 = vmatpush1.bf16.msra.mxu0 0
        %1040 = vmatprep.subr.bf16.mxu0 0
        %1041 = vmatpush1.bf16.msra.mxu0 0
        %1042 = vmatprep.subr.bf16.mxu0 0
        %1043 = vmatpush1.bf16.msra.mxu0 0
        %1044 = vmatprep.subr.bf16.mxu0 0
        %1045 = vmatpush1.bf16.msra.mxu0 0
        %1046 = vmatprep.subr.bf16.mxu0 0
        %1047 = vmatpush1.bf16.msra.mxu0 0
        %1048 = vmatprep.subr.bf16.mxu0 0
        %1049 = vmatpush1.bf16.msra.mxu0 0
        %1050 = vmatprep.subr.bf16.mxu0 0
        %1051 = vmatpush1.bf16.msra.mxu0 0
        %1052 = vmatprep.mubr.bf16.mxu0 0
        %1053 = vmatmul.mubr.bf16.gmra.mrb[0].mxu0 %v409
        %v1054 = vpop.f32.mrb[0].mxu0
        %v1055 = vadd.f32 0.0, %v1054
        %v1056 = vpop.f32.mrb[0].mxu0
        %v1057 = vadd.f32 0.0, %v1056
        %v1058 = vpop.f32.mrb[0].mxu0
        %v1059 = vadd.f32 0.0, %v1058
        %v1060 = vpop.f32.mrb[0].mxu0
        %v1061 = vadd.f32 0.0, %v1060
        %1062 = vdwg.mxu0
        %1063 = vmatprep.subr.bf16.mxu0 %v708
        %1064 = vmatpush1.bf16.msra.mxu0 %v707
        %1065 = vmatprep.subr.bf16.mxu0 %v720
        %1066 = vmatpush1.bf16.msra.mxu0 %v719
        %1067 = vmatprep.subr.bf16.mxu0 %v732
        %1068 = vmatpush1.bf16.msra.mxu0 %v731
        %1069 = vmatprep.subr.bf16.mxu0 %v744
        %1070 = vmatpush1.bf16.msra.mxu0 %v743
        %1071 = vmatprep.subr.bf16.mxu0 %v756
        %1072 = vmatpush1.bf16.msra.mxu0 %v755
        %1073 = vmatprep.subr.bf16.mxu0 %v768
        %1074 = vmatpush1.bf16.msra.mxu0 %v767
        %1075 = vmatprep.subr.bf16.mxu0 %v780
        %1076 = vmatpush1.bf16.msra.mxu0 %v779
        %1077 = vmatprep.subr.bf16.mxu0 %v792
        %1078 = vmatpush1.bf16.msra.mxu0 %v791
        %1079 = vmatprep.subr.bf16.mxu0 0
        %1080 = vmatpush1.bf16.msra.mxu0 0
        %1081 = vmatprep.subr.bf16.mxu0 0
        %1082 = vmatpush1.bf16.msra.mxu0 0
        %1083 = vmatprep.subr.bf16.mxu0 0
        %1084 = vmatpush1.bf16.msra.mxu0 0
        %1085 = vmatprep.subr.bf16.mxu0 0
        %1086 = vmatpush1.bf16.msra.mxu0 0
        %1087 = vmatprep.subr.bf16.mxu0 0
        %1088 = vmatpush1.bf16.msra.mxu0 0
        %1089 = vmatprep.subr.bf16.mxu0 0
        %1090 = vmatpush1.bf16.msra.mxu0 0
        %1091 = vmatprep.subr.bf16.mxu0 0
        %1092 = vmatpush1.bf16.msra.mxu0 0
        %1093 = vmatprep.subr.bf16.mxu0 0
        %1094 = vmatpush1.bf16.msra.mxu0 0
        %1095 = vmatprep.mubr.bf16.mxu0 0
        %1096 = vmatmul.mubr.bf16.gmra.mrb[0].mxu0 %v409
        %v1097 = vpop.f32.mrb[0].mxu0
        %v1098 = vadd.f32 0.0, %v1097
        %v1099 = vpop.f32.mrb[0].mxu0
        %v1100 = vadd.f32 0.0, %v1099
        %v1101 = vpop.f32.mrb[0].mxu0
        %v1102 = vadd.f32 0.0, %v1101
        %v1103 = vpop.f32.mrb[0].mxu0
        %v1104 = vadd.f32 0.0, %v1103
        %1105 = vdwg.mxu0
        %1106 = vmatprep.subr.bf16.mxu0 %v710
        %1107 = vmatpush1.bf16.msra.mxu0 %v709
        %1108 = vmatprep.subr.bf16.mxu0 %v722
        %1109 = vmatpush1.bf16.msra.mxu0 %v721
        %1110 = vmatprep.subr.bf16.mxu0 %v734
        %1111 = vmatpush1.bf16.msra.mxu0 %v733
        %1112 = vmatprep.subr.bf16.mxu0 %v746
        %1113 = vmatpush1.bf16.msra.mxu0 %v745
        %1114 = vmatprep.subr.bf16.mxu0 %v758
        %1115 = vmatpush1.bf16.msra.mxu0 %v757
        %1116 = vmatprep.subr.bf16.mxu0 %v770
        %1117 = vmatpush1.bf16.msra.mxu0 %v769
        %1118 = vmatprep.subr.bf16.mxu0 %v782
        %1119 = vmatpush1.bf16.msra.mxu0 %v781
        %1120 = vmatprep.subr.bf16.mxu0 %v794
        %1121 = vmatpush1.bf16.msra.mxu0 %v793
        %1122 = vmatprep.subr.bf16.mxu0 0
        %1123 = vmatpush1.bf16.msra.mxu0 0
        %1124 = vmatprep.subr.bf16.mxu0 0
        %1125 = vmatpush1.bf16.msra.mxu0 0
        %1126 = vmatprep.subr.bf16.mxu0 0
        %1127 = vmatpush1.bf16.msra.mxu0 0
        %1128 = vmatprep.subr.bf16.mxu0 0
        %1129 = vmatpush1.bf16.msra.mxu0 0
        %1130 = vmatprep.subr.bf16.mxu0 0
        %1131 = vmatpush1.bf16.msra.mxu0 0
        %1132 = vmatprep.subr.bf16.mxu0 0
        %1133 = vmatpush1.bf16.msra.mxu0 0
        %1134 = vmatprep.subr.bf16.mxu0 0
        %1135 = vmatpush1.bf16.msra.mxu0 0
        %1136 = vmatprep.subr.bf16.mxu0 0
        %1137 = vmatpush1.bf16.msra.mxu0 0
        %1138 = vmatprep.mubr.bf16.mxu0 0
        %1139 = vmatmul.mubr.bf16.gmra.mrb[0].mxu0 %v409
        %v1140 = vpop.f32.mrb[0].mxu0
        %v1141 = vadd.f32 0.0, %v1140
        %v1142 = vpop.f32.mrb[0].mxu0
        %v1143 = vadd.f32 0.0, %v1142
        %v1144 = vpop.f32.mrb[0].mxu0
        %v1145 = vadd.f32 0.0, %v1144
        %v1146 = vpop.f32.mrb[0].mxu0
        %v1147 = vadd.f32 0.0, %v1146
        %1148 = vdwg.mxu0
        %v1149 = vpack.c.bf16 %v930, %v926
        %v1150 = vpack.c.bf16 %v932, %v928
        %v1151 = vpack.c.bf16 %v973, %v969
        %v1152 = vpack.c.bf16 %v975, %v971
        %v1153 = vpack.c.bf16 %v1016, %v1012
        %v1154 = vpack.c.bf16 %v1018, %v1014
        %v1155 = vpack.c.bf16 %v1059, %v1055
        %v1156 = vpack.c.bf16 %v1061, %v1057
        %v1157 = vpack.c.bf16 %v1102, %v1098
        %v1158 = vpack.c.bf16 %v1104, %v1100
        %v1159 = vpack.c.bf16 %v1145, %v1141
        %v1160 = vpack.c.bf16 %v1147, %v1143
        %v1161 = vld [vmem:[%s291] sm:$0xf]
        %v1162 = vld [vmem:[%s291 + $0x4] sm:$0xf]
        %v1163 = vld [vmem:[%s291 + $0x8] sm:$0xf]
        %v1164 = vld [vmem:[%s291 + $0xc] sm:$0xf]
        %v1165 = vld [vmem:[%s291 + $0x10] sm:$0xf]
        %v1166 = vld [vmem:[%s291 + $0x14] sm:$0xf]
        %v1167 = vld [vmem:[%s291 + $0x18] sm:$0xf]
        %v1168 = vld [vmem:[%s291 + $0x1c] sm:$0xf]
        %v1169 = vld [vmem:[%s291 + $0x20] sm:$0xf]
        %v1170 = vld [vmem:[%s291 + $0x24] sm:$0xf]
        %v1171 = vld [vmem:[%s291 + $0x28] sm:$0xf]
        %v1172 = vld [vmem:[%s291 + $0x2c] sm:$0xf]
        %v1173 = vld [vmem:[%s291 + $0x30] sm:$0xf]
        %v1174 = vld [vmem:[%s291 + $0x34] sm:$0xf]
        %v1175 = vld [vmem:[%s291 + $0x38] sm:$0xf]
        %v1176 = vld [vmem:[%s291 + $0x3c] sm:$0xf]
        %v1177 = vld [vmem:[%s303] sm:$0xff]
        %v1178 = vld [vmem:[%s303 + $0x8] sm:$0xff]
        %v1195 = vunpack.c.l.b16 %v1161
        %v1196 = vunpack.c.l.b16 %v1162
        %v1197 = vunpack.c.l.b16 %v1163
        %v1198 = vunpack.c.l.b16 %v1164
        %v1199 = vunpack.c.l.b16 %v1165
        %v1200 = vunpack.c.l.b16 %v1166
        %v1201 = vunpack.c.l.b16 %v1167
        %v1202 = vunpack.c.l.b16 %v1168
        %v1203 = vunpack.c.l.b16 %v1169
        %v1204 = vunpack.c.l.b16 %v1170
        %v1205 = vunpack.c.l.b16 %v1171
        %v1206 = vunpack.c.l.b16 %v1172
        %v1207 = vunpack.c.l.b16 %v1173
        %v1208 = vunpack.c.l.b16 %v1174
        %v1209 = vunpack.c.l.b16 %v1175
        %v1210 = vunpack.c.l.b16 %v1176
        %v1211 = vpack.c.b16 %v1196, %v1195
        %v1212 = vpack.c.b16 %v1198, %v1197
        %v1213 = vpack.c.b16 %v1200, %v1199
        %v1214 = vpack.c.b16 %v1202, %v1201
        %v1215 = vpack.c.b16 %v1204, %v1203
        %v1216 = vpack.c.b16 %v1206, %v1205
        %v1217 = vpack.c.b16 %v1208, %v1207
        %v1218 = vpack.c.b16 %v1210, %v1209
        %1227 = vmatprep.subr.bf16.mxu0 0
        %1228 = vmatpush1.bf16.msra.mxu0 %v1211
        %1229 = vmatprep.subr.bf16.mxu0 0
        %1230 = vmatpush1.bf16.msra.mxu0 %v1212
        %1231 = vmatprep.subr.bf16.mxu0 0
        %1232 = vmatpush1.bf16.msra.mxu0 %v1213
        %1233 = vmatprep.subr.bf16.mxu0 0
        %1234 = vmatpush1.bf16.msra.mxu0 %v1214
        %1235 = vmatprep.subr.bf16.mxu0 0
        %1236 = vmatpush1.bf16.msra.mxu0 %v1215
        %1237 = vmatprep.subr.bf16.mxu0 0
        %1238 = vmatpush1.bf16.msra.mxu0 %v1216
        %1239 = vmatprep.subr.bf16.mxu0 0
        %1240 = vmatpush1.bf16.msra.mxu0 %v1217
        %1241 = vmatprep.subr.bf16.mxu0 0
        %1242 = vmatpush1.bf16.msra.mxu0 %v1218
        %1243 = vmatprep.subr.bf16.mxu0 0
        %1244 = vmatpush1.bf16.msra.mxu0 0
        %1245 = vmatprep.subr.bf16.mxu0 0
        %1246 = vmatpush1.bf16.msra.mxu0 0
        %1247 = vmatprep.subr.bf16.mxu0 0
        %1248 = vmatpush1.bf16.msra.mxu0 0
        %1249 = vmatprep.subr.bf16.mxu0 0
        %1250 = vmatpush1.bf16.msra.mxu0 0
        %1251 = vmatprep.subr.bf16.mxu0 0
        %1252 = vmatpush1.bf16.msra.mxu0 0
        %1253 = vmatprep.subr.bf16.mxu0 0
        %1254 = vmatpush1.bf16.msra.mxu0 0
        %1255 = vmatprep.subr.bf16.mxu0 0
        %1256 = vmatpush1.bf16.msra.mxu0 0
        %1257 = vmatprep.subr.bf16.mxu0 0
        %1258 = vmatpush1.bf16.msra.mxu0 0
        %1259 = vmatprep.mubr.bf16.mxu0 0
        %1260 = vmatmul.mubr.bf16.gmra.mrb[0].mxu0 %v1149
        %v1261 = vpop.f32.mrb[0].mxu0
        %v1262 = vadd.f32 0.0, %v1261
        %v1263 = vpop.f32.mrb[0].mxu0
        %v1264 = vpop.f32.mrb[0].mxu0
        %v1265 = vadd.f32 0.0, %v1264
        %v1266 = vpop.f32.mrb[0].mxu0
        %1267 = vdwg.mxu0
        %v1268 = vmul.f32 %v1177, %v1262
        %v1269 = vmul.f32 %v1178, %v1265
        %1270 = vmatprep.subr.bf16.mxu0 0
        %1271 = vmatpush1.bf16.msra.mxu0 %v1211
        %1272 = vmatprep.subr.bf16.mxu0 0
        %1273 = vmatpush1.bf16.msra.mxu0 %v1212
        %1274 = vmatprep.subr.bf16.mxu0 0
        %1275 = vmatpush1.bf16.msra.mxu0 %v1213
        %1276 = vmatprep.subr.bf16.mxu0 0
        %1277 = vmatpush1.bf16.msra.mxu0 %v1214
        %1278 = vmatprep.subr.bf16.mxu0 0
        %1279 = vmatpush1.bf16.msra.mxu0 %v1215
        %1280 = vmatprep.subr.bf16.mxu0 0
        %1281 = vmatpush1.bf16.msra.mxu0 %v1216
        %1282 = vmatprep.subr.bf16.mxu0 0
        %1283 = vmatpush1.bf16.msra.mxu0 %v1217
        %1284 = vmatprep.subr.bf16.mxu0 0
        %1285 = vmatpush1.bf16.msra.mxu0 %v1218
        %1286 = vmatprep.subr.bf16.mxu0 0
        %1287 = vmatpush1.bf16.msra.mxu0 0
        %1288 = vmatprep.subr.bf16.mxu0 0
        %1289 = vmatpush1.bf16.msra.mxu0 0
        %1290 = vmatprep.subr.bf16.mxu0 0
        %1291 = vmatpush1.bf16.msra.mxu0 0
        %1292 = vmatprep.subr.bf16.mxu0 0
        %1293 = vmatpush1.bf16.msra.mxu0 0
        %1294 = vmatprep.subr.bf16.mxu0 0
        %1295 = vmatpush1.bf16.msra.mxu0 0
        %1296 = vmatprep.subr.bf16.mxu0 0
        %1297 = vmatpush1.bf16.msra.mxu0 0
        %1298 = vmatprep.subr.bf16.mxu0 0
        %1299 = vmatpush1.bf16.msra.mxu0 0
        %1300 = vmatprep.subr.bf16.mxu0 0
        %1301 = vmatpush1.bf16.msra.mxu0 0
        %1302 = vmatprep.mubr.bf16.mxu0 0
        %1303 = vmatmul.mubr.bf16.gmra.mrb[0].mxu0 %v1152
        %v1304 = vpop.f32.mrb[0].mxu0
        %v1305 = vadd.f32 %v1268, %v1304
        %v1306 = vpop.f32.mrb[0].mxu0
        %v1307 = vpop.f32.mrb[0].mxu0
        %v1308 = vadd.f32 %v1269, %v1307
        %v1309 = vpop.f32.mrb[0].mxu0
        %1310 = vdwg.mxu0
        %s1311 = scalar_lea.vmem %s303, 16
        %v1312 = vld [vmem:[%s1311] sm:$0xff]
        %v1313 = vld [vmem:[%s1311 + $0x8] sm:$0xff]
        %1314 = vmatprep.subr.bf16.mxu0 0
        %1315 = vmatpush1.bf16.msra.mxu0 %v1211
        %1316 = vmatprep.subr.bf16.mxu0 0
        %1317 = vmatpush1.bf16.msra.mxu0 %v1212
        %1318 = vmatprep.subr.bf16.mxu0 0
        %1319 = vmatpush1.bf16.msra.mxu0 %v1213
        %1320 = vmatprep.subr.bf16.mxu0 0
        %1321 = vmatpush1.bf16.msra.mxu0 %v1214
        %1322 = vmatprep.subr.bf16.mxu0 0
        %1323 = vmatpush1.bf16.msra.mxu0 %v1215
        %1324 = vmatprep.subr.bf16.mxu0 0
        %1325 = vmatpush1.bf16.msra.mxu0 %v1216
        %1326 = vmatprep.subr.bf16.mxu0 0
        %1327 = vmatpush1.bf16.msra.mxu0 %v1217
        %1328 = vmatprep.subr.bf16.mxu0 0
        %1329 = vmatpush1.bf16.msra.mxu0 %v1218
        %1330 = vmatprep.subr.bf16.mxu0 0
        %1331 = vmatpush1.bf16.msra.mxu0 0
        %1332 = vmatprep.subr.bf16.mxu0 0
        %1333 = vmatpush1.bf16.msra.mxu0 0
        %1334 = vmatprep.subr.bf16.mxu0 0
        %1335 = vmatpush1.bf16.msra.mxu0 0
        %1336 = vmatprep.subr.bf16.mxu0 0
        %1337 = vmatpush1.bf16.msra.mxu0 0
        %1338 = vmatprep.subr.bf16.mxu0 0
        %1339 = vmatpush1.bf16.msra.mxu0 0
        %1340 = vmatprep.subr.bf16.mxu0 0
        %1341 = vmatpush1.bf16.msra.mxu0 0
        %1342 = vmatprep.subr.bf16.mxu0 0
        %1343 = vmatpush1.bf16.msra.mxu0 0
        %1344 = vmatprep.subr.bf16.mxu0 0
        %1345 = vmatpush1.bf16.msra.mxu0 0
        %1346 = vmatprep.mubr.bf16.mxu0 0
        %1347 = vmatmul.mubr.bf16.gmra.mrb[0].mxu0 %v1150
        %v1348 = vpop.f32.mrb[0].mxu0
        %v1349 = vadd.f32 0.0, %v1348
        %v1350 = vpop.f32.mrb[0].mxu0
        %v1351 = vpop.f32.mrb[0].mxu0
        %v1352 = vadd.f32 0.0, %v1351
        %v1353 = vpop.f32.mrb[0].mxu0
        %1354 = vdwg.mxu0
        %v1355 = vmul.f32 %v1312, %v1349
        %v1356 = vmul.f32 %v1313, %v1352
        %v1357 = vadd.f32 %v1305, %v1355
        %v1358 = vadd.f32 %v1308, %v1356
        %s1359 = scalar_lea.vmem %s303, 32
        %v1360 = vld [vmem:[%s1359] sm:$0xff]
        %v1361 = vld [vmem:[%s1359 + $0x8] sm:$0xff]
        %1362 = vmatprep.subr.bf16.mxu0 0
        %1363 = vmatpush1.bf16.msra.mxu0 %v1211
        %1364 = vmatprep.subr.bf16.mxu0 0
        %1365 = vmatpush1.bf16.msra.mxu0 %v1212
        %1366 = vmatprep.subr.bf16.mxu0 0
        %1367 = vmatpush1.bf16.msra.mxu0 %v1213
        %1368 = vmatprep.subr.bf16.mxu0 0
        %1369 = vmatpush1.bf16.msra.mxu0 %v1214
        %1370 = vmatprep.subr.bf16.mxu0 0
        %1371 = vmatpush1.bf16.msra.mxu0 %v1215
        %1372 = vmatprep.subr.bf16.mxu0 0
        %1373 = vmatpush1.bf16.msra.mxu0 %v1216
        %1374 = vmatprep.subr.bf16.mxu0 0
        %1375 = vmatpush1.bf16.msra.mxu0 %v1217
        %1376 = vmatprep.subr.bf16.mxu0 0
        %1377 = vmatpush1.bf16.msra.mxu0 %v1218
        %1378 = vmatprep.subr.bf16.mxu0 0
        %1379 = vmatpush1.bf16.msra.mxu0 0
        %1380 = vmatprep.subr.bf16.mxu0 0
        %1381 = vmatpush1.bf16.msra.mxu0 0
        %1382 = vmatprep.subr.bf16.mxu0 0
        %1383 = vmatpush1.bf16.msra.mxu0 0
        %1384 = vmatprep.subr.bf16.mxu0 0
        %1385 = vmatpush1.bf16.msra.mxu0 0
        %1386 = vmatprep.subr.bf16.mxu0 0
        %1387 = vmatpush1.bf16.msra.mxu0 0
        %1388 = vmatprep.subr.bf16.mxu0 0
        %1389 = vmatpush1.bf16.msra.mxu0 0
        %1390 = vmatprep.subr.bf16.mxu0 0
        %1391 = vmatpush1.bf16.msra.mxu0 0
        %1392 = vmatprep.subr.bf16.mxu0 0
        %1393 = vmatpush1.bf16.msra.mxu0 0
        %1394 = vmatprep.mubr.bf16.mxu0 0
        %1395 = vmatmul.mubr.bf16.gmra.mrb[0].mxu0 %v1151
        %v1396 = vpop.f32.mrb[0].mxu0
        %v1397 = vadd.f32 0.0, %v1396
        %v1398 = vpop.f32.mrb[0].mxu0
        %v1399 = vpop.f32.mrb[0].mxu0
        %v1400 = vadd.f32 0.0, %v1399
        %v1401 = vpop.f32.mrb[0].mxu0
        %1402 = vdwg.mxu0
        %v1403 = vmul.f32 %v1360, %v1397
        %v1404 = vmul.f32 %v1361, %v1400
        %v1405 = vadd.f32 %v1357, %v1403
        %v1406 = vadd.f32 %v1358, %v1404
        %vm1407 = vcmask 130048
        %1408 = vst.msk [vmem:[%s276] sm:$0xff] %vm1407, %v1405
        %1409 = vst.msk [vmem:[%s276 + $0x8] sm:$0xff] %vm1407, %v1406
        %v1410 = vld [vmem:[%s303] sm:$0xff]
        %v1411 = vld [vmem:[%s303 + $0x8] sm:$0xff]
        %1412 = vmatprep.subr.bf16.mxu0 0
        %1413 = vmatpush1.bf16.msra.mxu0 %v1211
        %1414 = vmatprep.subr.bf16.mxu0 0
        %1415 = vmatpush1.bf16.msra.mxu0 %v1212
        %1416 = vmatprep.subr.bf16.mxu0 0
        %1417 = vmatpush1.bf16.msra.mxu0 %v1213
        %1418 = vmatprep.subr.bf16.mxu0 0
        %1419 = vmatpush1.bf16.msra.mxu0 %v1214
        %1420 = vmatprep.subr.bf16.mxu0 0
        %1421 = vmatpush1.bf16.msra.mxu0 %v1215
        %1422 = vmatprep.subr.bf16.mxu0 0
        %1423 = vmatpush1.bf16.msra.mxu0 %v1216
        %1424 = vmatprep.subr.bf16.mxu0 0
        %1425 = vmatpush1.bf16.msra.mxu0 %v1217
        %1426 = vmatprep.subr.bf16.mxu0 0
        %1427 = vmatpush1.bf16.msra.mxu0 %v1218
        %1428 = vmatprep.subr.bf16.mxu0 0
        %1429 = vmatpush1.bf16.msra.mxu0 0
        %1430 = vmatprep.subr.bf16.mxu0 0
        %1431 = vmatpush1.bf16.msra.mxu0 0
        %1432 = vmatprep.subr.bf16.mxu0 0
        %1433 = vmatpush1.bf16.msra.mxu0 0
        %1434 = vmatprep.subr.bf16.mxu0 0
        %1435 = vmatpush1.bf16.msra.mxu0 0
        %1436 = vmatprep.subr.bf16.mxu0 0
        %1437 = vmatpush1.bf16.msra.mxu0 0
        %1438 = vmatprep.subr.bf16.mxu0 0
        %1439 = vmatpush1.bf16.msra.mxu0 0
        %1440 = vmatprep.subr.bf16.mxu0 0
        %1441 = vmatpush1.bf16.msra.mxu0 0
        %1442 = vmatprep.subr.bf16.mxu0 0
        %1443 = vmatpush1.bf16.msra.mxu0 0
        %1444 = vmatprep.mubr.bf16.mxu0 0
        %1445 = vmatmul.mubr.bf16.gmra.mrb[0].mxu0 %v1153
        %v1446 = vpop.f32.mrb[0].mxu0
        %v1447 = vadd.f32 0.0, %v1446
        %v1448 = vpop.f32.mrb[0].mxu0
        %v1449 = vpop.f32.mrb[0].mxu0
        %v1450 = vadd.f32 0.0, %v1449
        %v1451 = vpop.f32.mrb[0].mxu0
        %1452 = vdwg.mxu0
        %v1453 = vmul.f32 %v1410, %v1447
        %v1454 = vmul.f32 %v1411, %v1450
        %1455 = vmatprep.subr.bf16.mxu0 0
        %1456 = vmatpush1.bf16.msra.mxu0 %v1211
        %1457 = vmatprep.subr.bf16.mxu0 0
        %1458 = vmatpush1.bf16.msra.mxu0 %v1212
        %1459 = vmatprep.subr.bf16.mxu0 0
        %1460 = vmatpush1.bf16.msra.mxu0 %v1213
        %1461 = vmatprep.subr.bf16.mxu0 0
        %1462 = vmatpush1.bf16.msra.mxu0 %v1214
        %1463 = vmatprep.subr.bf16.mxu0 0
        %1464 = vmatpush1.bf16.msra.mxu0 %v1215
        %1465 = vmatprep.subr.bf16.mxu0 0
        %1466 = vmatpush1.bf16.msra.mxu0 %v1216
        %1467 = vmatprep.subr.bf16.mxu0 0
        %1468 = vmatpush1.bf16.msra.mxu0 %v1217
        %1469 = vmatprep.subr.bf16.mxu0 0
        %1470 = vmatpush1.bf16.msra.mxu0 %v1218
        %1471 = vmatprep.subr.bf16.mxu0 0
        %1472 = vmatpush1.bf16.msra.mxu0 0
        %1473 = vmatprep.subr.bf16.mxu0 0
        %1474 = vmatpush1.bf16.msra.mxu0 0
        %1475 = vmatprep.subr.bf16.mxu0 0
        %1476 = vmatpush1.bf16.msra.mxu0 0
        %1477 = vmatprep.subr.bf16.mxu0 0
        %1478 = vmatpush1.bf16.msra.mxu0 0
        %1479 = vmatprep.subr.bf16.mxu0 0
        %1480 = vmatpush1.bf16.msra.mxu0 0
        %1481 = vmatprep.subr.bf16.mxu0 0
        %1482 = vmatpush1.bf16.msra.mxu0 0
        %1483 = vmatprep.subr.bf16.mxu0 0
        %1484 = vmatpush1.bf16.msra.mxu0 0
        %1485 = vmatprep.subr.bf16.mxu0 0
        %1486 = vmatpush1.bf16.msra.mxu0 0
        %1487 = vmatprep.mubr.bf16.mxu0 0
        %1488 = vmatmul.mubr.bf16.gmra.mrb[0].mxu0 %v1156
        %v1489 = vpop.f32.mrb[0].mxu0
        %v1490 = vadd.f32 %v1453, %v1489
        %v1491 = vpop.f32.mrb[0].mxu0
        %v1492 = vpop.f32.mrb[0].mxu0
        %v1493 = vadd.f32 %v1454, %v1492
        %v1494 = vpop.f32.mrb[0].mxu0
        %1495 = vdwg.mxu0
        %v1496 = vld [vmem:[%s1311] sm:$0xff]
        %v1497 = vld [vmem:[%s1311 + $0x8] sm:$0xff]
        %1498 = vmatprep.subr.bf16.mxu0 0
        %1499 = vmatpush1.bf16.msra.mxu0 %v1211
        %1500 = vmatprep.subr.bf16.mxu0 0
        %1501 = vmatpush1.bf16.msra.mxu0 %v1212
        %1502 = vmatprep.subr.bf16.mxu0 0
        %1503 = vmatpush1.bf16.msra.mxu0 %v1213
        %1504 = vmatprep.subr.bf16.mxu0 0
        %1505 = vmatpush1.bf16.msra.mxu0 %v1214
        %1506 = vmatprep.subr.bf16.mxu0 0
        %1507 = vmatpush1.bf16.msra.mxu0 %v1215
        %1508 = vmatprep.subr.bf16.mxu0 0
        %1509 = vmatpush1.bf16.msra.mxu0 %v1216
        %1510 = vmatprep.subr.bf16.mxu0 0
        %1511 = vmatpush1.bf16.msra.mxu0 %v1217
        %1512 = vmatprep.subr.bf16.mxu0 0
        %1513 = vmatpush1.bf16.msra.mxu0 %v1218
        %1514 = vmatprep.subr.bf16.mxu0 0
        %1515 = vmatpush1.bf16.msra.mxu0 0
        %1516 = vmatprep.subr.bf16.mxu0 0
        %1517 = vmatpush1.bf16.msra.mxu0 0
        %1518 = vmatprep.subr.bf16.mxu0 0
        %1519 = vmatpush1.bf16.msra.mxu0 0
        %1520 = vmatprep.subr.bf16.mxu0 0
        %1521 = vmatpush1.bf16.msra.mxu0 0
        %1522 = vmatprep.subr.bf16.mxu0 0
        %1523 = vmatpush1.bf16.msra.mxu0 0
        %1524 = vmatprep.subr.bf16.mxu0 0
        %1525 = vmatpush1.bf16.msra.mxu0 0
        %1526 = vmatprep.subr.bf16.mxu0 0
        %1527 = vmatpush1.bf16.msra.mxu0 0
        %1528 = vmatprep.subr.bf16.mxu0 0
        %1529 = vmatpush1.bf16.msra.mxu0 0
        %1530 = vmatprep.mubr.bf16.mxu0 0
        %1531 = vmatmul.mubr.bf16.gmra.mrb[0].mxu0 %v1154
        %v1532 = vpop.f32.mrb[0].mxu0
        %v1533 = vadd.f32 0.0, %v1532
        %v1534 = vpop.f32.mrb[0].mxu0
        %v1535 = vpop.f32.mrb[0].mxu0
        %v1536 = vadd.f32 0.0, %v1535
        %v1537 = vpop.f32.mrb[0].mxu0
        %1538 = vdwg.mxu0
        %v1539 = vmul.f32 %v1496, %v1533
        %v1540 = vmul.f32 %v1497, %v1536
        %v1541 = vadd.f32 %v1490, %v1539
        %v1542 = vadd.f32 %v1493, %v1540
        %v1543 = vld [vmem:[%s1359] sm:$0xff]
        %v1544 = vld [vmem:[%s1359 + $0x8] sm:$0xff]
        %1545 = vmatprep.subr.bf16.mxu0 0
        %1546 = vmatpush1.bf16.msra.mxu0 %v1211
        %1547 = vmatprep.subr.bf16.mxu0 0
        %1548 = vmatpush1.bf16.msra.mxu0 %v1212
        %1549 = vmatprep.subr.bf16.mxu0 0
        %1550 = vmatpush1.bf16.msra.mxu0 %v1213
        %1551 = vmatprep.subr.bf16.mxu0 0
        %1552 = vmatpush1.bf16.msra.mxu0 %v1214
        %1553 = vmatprep.subr.bf16.mxu0 0
        %1554 = vmatpush1.bf16.msra.mxu0 %v1215
        %1555 = vmatprep.subr.bf16.mxu0 0
        %1556 = vmatpush1.bf16.msra.mxu0 %v1216
        %1557 = vmatprep.subr.bf16.mxu0 0
        %1558 = vmatpush1.bf16.msra.mxu0 %v1217
        %1559 = vmatprep.subr.bf16.mxu0 0
        %1560 = vmatpush1.bf16.msra.mxu0 %v1218
        %1561 = vmatprep.subr.bf16.mxu0 0
        %1562 = vmatpush1.bf16.msra.mxu0 0
        %1563 = vmatprep.subr.bf16.mxu0 0
        %1564 = vmatpush1.bf16.msra.mxu0 0
        %1565 = vmatprep.subr.bf16.mxu0 0
        %1566 = vmatpush1.bf16.msra.mxu0 0
        %1567 = vmatprep.subr.bf16.mxu0 0
        %1568 = vmatpush1.bf16.msra.mxu0 0
        %1569 = vmatprep.subr.bf16.mxu0 0
        %1570 = vmatpush1.bf16.msra.mxu0 0
        %1571 = vmatprep.subr.bf16.mxu0 0
        %1572 = vmatpush1.bf16.msra.mxu0 0
        %1573 = vmatprep.subr.bf16.mxu0 0
        %1574 = vmatpush1.bf16.msra.mxu0 0
        %1575 = vmatprep.subr.bf16.mxu0 0
        %1576 = vmatpush1.bf16.msra.mxu0 0
        %1577 = vmatprep.mubr.bf16.mxu0 0
        %1578 = vmatmul.mubr.bf16.gmra.mrb[0].mxu0 %v1155
        %v1579 = vpop.f32.mrb[0].mxu0
        %v1580 = vadd.f32 0.0, %v1579
        %v1581 = vpop.f32.mrb[0].mxu0
        %v1582 = vpop.f32.mrb[0].mxu0
        %v1583 = vadd.f32 0.0, %v1582
        %v1584 = vpop.f32.mrb[0].mxu0
        %1585 = vdwg.mxu0
        %v1586 = vmul.f32 %v1543, %v1580
        %v1587 = vmul.f32 %v1544, %v1583
        %v1588 = vadd.f32 %v1541, %v1586
        %v1589 = vadd.f32 %v1542, %v1587
        %s1590 = scalar_lea.vmem %s276, 16 [#allocation2]
        %1591 = vst.msk [vmem:[%s1590] sm:$0xff] %vm1407, %v1588
        %1592 = vst.msk [vmem:[%s1590 + $0x8] sm:$0xff] %vm1407, %v1589
        %v1593 = vld [vmem:[%s303] sm:$0xff]
        %v1594 = vld [vmem:[%s303 + $0x8] sm:$0xff]
        %1595 = vmatprep.subr.bf16.mxu0 0
        %1596 = vmatpush1.bf16.msra.mxu0 %v1211
        %1597 = vmatprep.subr.bf16.mxu0 0
        %1598 = vmatpush1.bf16.msra.mxu0 %v1212
        %1599 = vmatprep.subr.bf16.mxu0 0
        %1600 = vmatpush1.bf16.msra.mxu0 %v1213
        %1601 = vmatprep.subr.bf16.mxu0 0
        %1602 = vmatpush1.bf16.msra.mxu0 %v1214
        %1603 = vmatprep.subr.bf16.mxu0 0
        %1604 = vmatpush1.bf16.msra.mxu0 %v1215
        %1605 = vmatprep.subr.bf16.mxu0 0
        %1606 = vmatpush1.bf16.msra.mxu0 %v1216
        %1607 = vmatprep.subr.bf16.mxu0 0
        %1608 = vmatpush1.bf16.msra.mxu0 %v1217
        %1609 = vmatprep.subr.bf16.mxu0 0
        %1610 = vmatpush1.bf16.msra.mxu0 %v1218
        %1611 = vmatprep.subr.bf16.mxu0 0
        %1612 = vmatpush1.bf16.msra.mxu0 0
        %1613 = vmatprep.subr.bf16.mxu0 0
        %1614 = vmatpush1.bf16.msra.mxu0 0
        %1615 = vmatprep.subr.bf16.mxu0 0
        %1616 = vmatpush1.bf16.msra.mxu0 0
        %1617 = vmatprep.subr.bf16.mxu0 0
        %1618 = vmatpush1.bf16.msra.mxu0 0
        %1619 = vmatprep.subr.bf16.mxu0 0
        %1620 = vmatpush1.bf16.msra.mxu0 0
        %1621 = vmatprep.subr.bf16.mxu0 0
        %1622 = vmatpush1.bf16.msra.mxu0 0
        %1623 = vmatprep.subr.bf16.mxu0 0
        %1624 = vmatpush1.bf16.msra.mxu0 0
        %1625 = vmatprep.subr.bf16.mxu0 0
        %1626 = vmatpush1.bf16.msra.mxu0 0
        %1627 = vmatprep.mubr.bf16.mxu0 0
        %1628 = vmatmul.mubr.bf16.gmra.mrb[0].mxu0 %v1157
        %v1629 = vpop.f32.mrb[0].mxu0
        %v1630 = vadd.f32 0.0, %v1629
        %v1631 = vpop.f32.mrb[0].mxu0
        %v1632 = vpop.f32.mrb[0].mxu0
        %v1633 = vadd.f32 0.0, %v1632
        %v1634 = vpop.f32.mrb[0].mxu0
        %1635 = vdwg.mxu0
        %v1636 = vmul.f32 %v1593, %v1630
        %v1637 = vmul.f32 %v1594, %v1633
        %1638 = vmatprep.subr.bf16.mxu0 0
        %1639 = vmatpush1.bf16.msra.mxu0 %v1211
        %1640 = vmatprep.subr.bf16.mxu0 0
        %1641 = vmatpush1.bf16.msra.mxu0 %v1212
        %1642 = vmatprep.subr.bf16.mxu0 0
        %1643 = vmatpush1.bf16.msra.mxu0 %v1213
        %1644 = vmatprep.subr.bf16.mxu0 0
        %1645 = vmatpush1.bf16.msra.mxu0 %v1214
        %1646 = vmatprep.subr.bf16.mxu0 0
        %1647 = vmatpush1.bf16.msra.mxu0 %v1215
        %1648 = vmatprep.subr.bf16.mxu0 0
        %1649 = vmatpush1.bf16.msra.mxu0 %v1216
        %1650 = vmatprep.subr.bf16.mxu0 0
        %1651 = vmatpush1.bf16.msra.mxu0 %v1217
        %1652 = vmatprep.subr.bf16.mxu0 0
        %1653 = vmatpush1.bf16.msra.mxu0 %v1218
        %1654 = vmatprep.subr.bf16.mxu0 0
        %1655 = vmatpush1.bf16.msra.mxu0 0
        %1656 = vmatprep.subr.bf16.mxu0 0
        %1657 = vmatpush1.bf16.msra.mxu0 0
        %1658 = vmatprep.subr.bf16.mxu0 0
        %1659 = vmatpush1.bf16.msra.mxu0 0
        %1660 = vmatprep.subr.bf16.mxu0 0
        %1661 = vmatpush1.bf16.msra.mxu0 0
        %1662 = vmatprep.subr.bf16.mxu0 0
        %1663 = vmatpush1.bf16.msra.mxu0 0
        %1664 = vmatprep.subr.bf16.mxu0 0
        %1665 = vmatpush1.bf16.msra.mxu0 0
        %1666 = vmatprep.subr.bf16.mxu0 0
        %1667 = vmatpush1.bf16.msra.mxu0 0
        %1668 = vmatprep.subr.bf16.mxu0 0
        %1669 = vmatpush1.bf16.msra.mxu0 0
        %1670 = vmatprep.mubr.bf16.mxu0 0
        %1671 = vmatmul.mubr.bf16.gmra.mrb[0].mxu0 %v1160
        %v1672 = vpop.f32.mrb[0].mxu0
        %v1673 = vadd.f32 %v1636, %v1672
        %v1674 = vpop.f32.mrb[0].mxu0
        %v1675 = vpop.f32.mrb[0].mxu0
        %v1676 = vadd.f32 %v1637, %v1675
        %v1677 = vpop.f32.mrb[0].mxu0
        %1678 = vdwg.mxu0
        %v1679 = vld [vmem:[%s1311] sm:$0xff]
        %v1680 = vld [vmem:[%s1311 + $0x8] sm:$0xff]
        %1681 = vmatprep.subr.bf16.mxu0 0
        %1682 = vmatpush1.bf16.msra.mxu0 %v1211
        %1683 = vmatprep.subr.bf16.mxu0 0
        %1684 = vmatpush1.bf16.msra.mxu0 %v1212
        %1685 = vmatprep.subr.bf16.mxu0 0
        %1686 = vmatpush1.bf16.msra.mxu0 %v1213
        %1687 = vmatprep.subr.bf16.mxu0 0
        %1688 = vmatpush1.bf16.msra.mxu0 %v1214
        %1689 = vmatprep.subr.bf16.mxu0 0
        %1690 = vmatpush1.bf16.msra.mxu0 %v1215
        %1691 = vmatprep.subr.bf16.mxu0 0
        %1692 = vmatpush1.bf16.msra.mxu0 %v1216
        %1693 = vmatprep.subr.bf16.mxu0 0
        %1694 = vmatpush1.bf16.msra.mxu0 %v1217
        %1695 = vmatprep.subr.bf16.mxu0 0
        %1696 = vmatpush1.bf16.msra.mxu0 %v1218
        %1697 = vmatprep.subr.bf16.mxu0 0
        %1698 = vmatpush1.bf16.msra.mxu0 0
        %1699 = vmatprep.subr.bf16.mxu0 0
        %1700 = vmatpush1.bf16.msra.mxu0 0
        %1701 = vmatprep.subr.bf16.mxu0 0
        %1702 = vmatpush1.bf16.msra.mxu0 0
        %1703 = vmatprep.subr.bf16.mxu0 0
        %1704 = vmatpush1.bf16.msra.mxu0 0
        %1705 = vmatprep.subr.bf16.mxu0 0
        %1706 = vmatpush1.bf16.msra.mxu0 0
        %1707 = vmatprep.subr.bf16.mxu0 0
        %1708 = vmatpush1.bf16.msra.mxu0 0
        %1709 = vmatprep.subr.bf16.mxu0 0
        %1710 = vmatpush1.bf16.msra.mxu0 0
        %1711 = vmatprep.subr.bf16.mxu0 0
        %1712 = vmatpush1.bf16.msra.mxu0 0
        %1713 = vmatprep.mubr.bf16.mxu0 0
        %1714 = vmatmul.mubr.bf16.gmra.mrb[0].mxu0 %v1158
        %v1715 = vpop.f32.mrb[0].mxu0
        %v1716 = vadd.f32 0.0, %v1715
        %v1717 = vpop.f32.mrb[0].mxu0
        %v1718 = vpop.f32.mrb[0].mxu0
        %v1719 = vadd.f32 0.0, %v1718
        %v1720 = vpop.f32.mrb[0].mxu0
        %1721 = vdwg.mxu0
        %v1722 = vmul.f32 %v1679, %v1716
        %v1723 = vmul.f32 %v1680, %v1719
        %v1724 = vadd.f32 %v1673, %v1722
        %v1725 = vadd.f32 %v1676, %v1723
        %v1726 = vld [vmem:[%s1359] sm:$0xff]
        %v1727 = vld [vmem:[%s1359 + $0x8] sm:$0xff]
        %1728 = vmatprep.subr.bf16.mxu0 0
        %1729 = vmatpush1.bf16.msra.mxu0 %v1211
        %1730 = vmatprep.subr.bf16.mxu0 0
        %1731 = vmatpush1.bf16.msra.mxu0 %v1212
        %1732 = vmatprep.subr.bf16.mxu0 0
        %1733 = vmatpush1.bf16.msra.mxu0 %v1213
        %1734 = vmatprep.subr.bf16.mxu0 0
        %1735 = vmatpush1.bf16.msra.mxu0 %v1214
        %1736 = vmatprep.subr.bf16.mxu0 0
        %1737 = vmatpush1.bf16.msra.mxu0 %v1215
        %1738 = vmatprep.subr.bf16.mxu0 0
        %1739 = vmatpush1.bf16.msra.mxu0 %v1216
        %1740 = vmatprep.subr.bf16.mxu0 0
        %1741 = vmatpush1.bf16.msra.mxu0 %v1217
        %1742 = vmatprep.subr.bf16.mxu0 0
        %1743 = vmatpush1.bf16.msra.mxu0 %v1218
        %1744 = vmatprep.subr.bf16.mxu0 0
        %1745 = vmatpush1.bf16.msra.mxu0 0
        %1746 = vmatprep.subr.bf16.mxu0 0
        %1747 = vmatpush1.bf16.msra.mxu0 0
        %1748 = vmatprep.subr.bf16.mxu0 0
        %1749 = vmatpush1.bf16.msra.mxu0 0
        %1750 = vmatprep.subr.bf16.mxu0 0
        %1751 = vmatpush1.bf16.msra.mxu0 0
        %1752 = vmatprep.subr.bf16.mxu0 0
        %1753 = vmatpush1.bf16.msra.mxu0 0
        %1754 = vmatprep.subr.bf16.mxu0 0
        %1755 = vmatpush1.bf16.msra.mxu0 0
        %1756 = vmatprep.subr.bf16.mxu0 0
        %1757 = vmatpush1.bf16.msra.mxu0 0
        %1758 = vmatprep.subr.bf16.mxu0 0
        %1759 = vmatpush1.bf16.msra.mxu0 0
        %1760 = vmatprep.mubr.bf16.mxu0 0
        %1761 = vmatmul.mubr.bf16.gmra.mrb[0].mxu0 %v1159
        %v1762 = vpop.f32.mrb[0].mxu0
        %v1763 = vadd.f32 0.0, %v1762
        %v1764 = vpop.f32.mrb[0].mxu0
        %v1765 = vpop.f32.mrb[0].mxu0
        %v1766 = vadd.f32 0.0, %v1765
        %v1767 = vpop.f32.mrb[0].mxu0
        %1768 = vdwg.mxu0
        %v1769 = vmul.f32 %v1726, %v1763
        %v1770 = vmul.f32 %v1727, %v1766
        %v1771 = vadd.f32 %v1724, %v1769
        %v1772 = vadd.f32 %v1725, %v1770
        %s1773 = scalar_lea.vmem %s276, 32 [#allocation2]
        %1774 = vst.msk [vmem:[%s1773] sm:$0xff] %vm1407, %v1771
        %1775 = vst.msk [vmem:[%s1773 + $0x8] sm:$0xff] %vm1407, %v1772
        %s1776 = sand.u32 %s157, 1
        %s1777 = scalar_lea.sflag [#allocation3], %s1776
        %s1778 = sand.u32 %s157, 1
        %s1779 = smul.addr %s1778, 48
        %s1780 = scalar_lea.vmem [#allocation2], %s1779
        // Predicated region
        $region37: #{zero_net_forward.3} parent=35 // pred_check
          %p1781 = pneg %p167
        $region38: #{zero_net_forward.3} parent=35 // pred_check_branch
          %1783 = sbr.rel (%p1781) target = $region40
        $region39: #{zero_net_forward.3} parent=35 // pred_region
          %s1784 = smul.u32 2, %s24
          %s1786 = ssub.s32 768, 768
          %1787 = vsyncadd %s1777, %s1786
          %s1788 = sadd.s32 %s25, %s1784
          %s1789 = smul.addr %s23, 6
          %s1790 = sadd.s32 %s1788, %s1789
          %s1791 = smul.addr %s1790, 128
          %s1792 = scalar_lea.hbm %s4, %s1791
          %s1793 = sshll.u32 %s1780, 4
          %s1794 = int_to_ptr.vmem [resolvable:$true] %s1793
          %1799 = dma.vmem_to_hbm [thread:$0]  %s1794, 768, %s1792, %s1777, 128, 128, 8
        $region40: #{zero_net_forward.3} parent=35 // pred_fallthru
          _
      $region36: #{zero_net_forward.3} parent=5 // pred_fallthru
        _
      %p1800 = scmp.le.s32.totalorder 2, %s13
      // Predicated region
      $region41: #{zero_net_forward.3} parent=5 // pred_check
        %p1801 = pneg %p1800
      $region42: #{zero_net_forward.3} parent=5 // pred_check_branch
        %1803 = sbr.rel (%p1801) target = $region44
      $region43: #{zero_net_forward.3} parent=5 // pred_region
        %s1804 = ssub.s32 %s13, 2
        // Predicated region
        $region45: #{zero_net_forward.3} parent=43 // pred_check
          %p1805 = pneg %p173
        $region46: #{zero_net_forward.3} parent=43 // pred_check_branch
          %1807 = sbr.rel (%p1805) target = $region48
        $region47: #{zero_net_forward.3} parent=43 // pred_region
          %s1808 = sand.u32 %s158, 1
          %s1809 = scalar_lea.sflag [#allocation3], %s1808
          %s1810 = sand.u32 %s158, 1
          %s1811 = smul.addr %s1810, 48
          %s1812 = scalar_lea.vmem [#allocation2], %s1811
          %1813 = dma.done %s1809, 768
        $region48: #{zero_net_forward.3} parent=43 // pred_fallthru
          _
      $region44: #{zero_net_forward.3} parent=5 // pred_fallthru
        _
    $region6: #{zero_net_forward.3} parent=1 // loop_footer
      %s17 = sadd.s32 1, %s13
    $region7: #{zero_net_forward.3} parent=1 // loop_footer_branch
      %12 = sbr.rel target = $region3
    $region8: #{zero_net_forward.3} parent=1 // loop_exit
      _
    %1814 = vsyncpa [#allocation3], 1
    %s1815 = scalar_lea.sflag [#allocation3], 1
    %1816 = vsyncpa %s1815, 1

// kernel: zero_net_forward.2
$region0: #{zero_net_forward.2}
  #allocation0 [shape = 'u32[]', space=smem, size = 0x4, offset = 0x4, fixed_abs, tag = 'smem constant byte address 0x4 - core index']
  #allocation1 [shape = 'u32[144,128]{1,0:T(1,128)}', space=vmem, size = 0x12000, scoped, tag = 'internal scratch']
  #allocation2 [shape = 'f32[3,128,128]{2,1,0:T(8,128)}', space=vmem, size = 0x30000, scoped, tag = 'scratch operand']
  %s0 = inlined_call_operand.vmem [shape: bf16[2,3,128,16], index: 0, kind: input, shape index: {}]
  %s1 = inlined_call_operand.vmem [shape: bf16[16,128], index: 1, kind: input, shape index: {}]
  %s2 = inlined_call_operand.vmem [shape: f32[12,4], index: 2, kind: input, shape index: {}]
  %s3 = inlined_call_operand.vmem [shape: bf16[2,128,1536], index: 3, kind: output, shape index: {}]
  %s4 = sld [smem:[#allocation0]]
  $region57: #{zero_net_forward.2} parent=0
    _
  %s6 = ssub.s32 1, %s4
  %s7 = scalar_select 0, %s6, %s4
  $region1: #{zero_net_forward.2} parent=0
    #allocation3 [shape = 'u8[8192]{0}', space=smem, size = 0x2000, scoped, tag = 'input window, operand 2, single buffered']
    #allocation4 [shape = 's32[2]{0}', space=sflag, size = 0x8, scoped, tag = 'scoped memory for zero_net_forward.2']
    %8 = vsyncpa [#allocation4], 0
    loop: start=0, step=1, limit=4
    $region2: #{zero_net_forward.2} parent=1 // loop_pre_header
      _
    $region3: #{zero_net_forward.2} parent=1 // loop_header
      %s10 = sphi 0, %s14
      %p11 = scmp.ge.s32.totalorder %s10, 4
      %s17 = sphi 0, %s29
      %s18 = sphi 0, %s25
      %s19 = sphi 0, %s17
      %s20 = sphi 0, %s18
      %s21 = sphi 0, %s19
      %s22 = sphi 0, %s20
      %s34 = sphi 0, %s36
      %s37 = sphi 0, %s34
      %s38 = sphi 0, %s37
      %s54 = sphi 0, %s38
      %s60 = sphi 0, %s62
      %s63 = sphi 0, %s60
      %s64 = sphi 0, %s63
      %s80 = sphi 0, %s64
      %s84 = sphi 0, %s84
      %s86 = sphi 0, %s84
      %s87 = sphi 0, %s86
      %s101 = sphi 0, %s87
      %s107 = sphi 0, %s109
      %s110 = sphi 0, %s107
      %s111 = sphi 0, %s110
      %s127 = sphi 0, %s111
    $region4: #{zero_net_forward.2} parent=1 // loop_header_branch
      %13 = sbr.rel (%p11) target = $region8
    $region5: #{zero_net_forward.2} parent=1 // loop_body
      %s15 = ssub.s32 %s10, 1
      %s16 = ssub.s32 %s10, 2
      %s23 = sadd.s32 1, %s18
      %p24 = scmp.ge.s32.totalorder %s23, 1
      %s25 = scalar_select %p24, 0, %s23
      %s26 = sadd.s32 1, %s17
      %s27 = scalar_select %p24, %s26, %s17
      %p28 = scmp.ge.s32.totalorder %s27, 2
      %s29 = scalar_select %p28, 0, %s27
      %s30 = ssub.s32 %s17, %s29
      %s31 = ssub.s32 %s18, %s25
      %s32 = sor.u32 %s30, %s31
      %p33 = scmp.eq.s32.totalorder %s32, 0
      %s35 = sadd.s32 %s34, 1
      %s36 = scalar_select %p33, %s34, %s35
      %p39 = pneg %p33
      %p40 = scmp.eq.s32.totalorder %s10, 1
      %p41 = por %p39, %p40
      %p42 = scmp.ne.s32.totalorder %s34, %s37
      %p43 = scmp.eq.s32.totalorder %s10, 0
      %p44 = por %p42, %p43
      %p45 = scmp.ne.s32.totalorder %s34, %s37
      %p46 = scmp.eq.s32.totalorder %s15, 1
      %p47 = por %p45, %p46
      %p48 = scmp.ne.s32.totalorder %s37, %s38
      %p49 = scmp.eq.s32.totalorder %s15, 0
      %p50 = por %p48, %p49
      %p51 = scmp.ne.s32.totalorder %s37, %s38
      %p52 = scmp.eq.s32.totalorder %s16, 1
      %p53 = por %p51, %p52
      %p55 = scmp.ne.s32.totalorder %s38, %s54
      %p56 = scmp.eq.s32.totalorder %s16, 0
      %p57 = por %p55, %p56
      %s58 = ssub.s32 %s18, %s25
      %p59 = scmp.eq.s32.totalorder %s58, 0
      %s61 = sadd.s32 %s60, 1
      %s62 = scalar_select %p59, %s60, %s61
      %p65 = pneg %p59
      %p66 = scmp.eq.s32.totalorder %s10, 1
      %p67 = por %p65, %p66
      %p68 = scmp.ne.s32.totalorder %s60, %s63
      %p69 = scmp.eq.s32.totalorder %s10, 0
      %p70 = por %p68, %p69
      %p71 = scmp.ne.s32.totalorder %s60, %s63
      %p72 = scmp.eq.s32.totalorder %s15, 1
      %p73 = por %p71, %p72
      %p74 = scmp.ne.s32.totalorder %s63, %s64
      %p75 = scmp.eq.s32.totalorder %s15, 0
      %p76 = por %p74, %p75
      %p77 = scmp.ne.s32.totalorder %s63, %s64
      %p78 = scmp.eq.s32.totalorder %s16, 1
      %p79 = por %p77, %p78
      %p81 = scmp.ne.s32.totalorder %s64, %s80
      %p82 = scmp.eq.s32.totalorder %s16, 0
      %p83 = por %p81, %p82
      %s85 = sadd.s32 %s84, 1
      %p88 = scmp.eq.s32.totalorder %s10, 1
      %p89 = scmp.ne.s32.totalorder %s84, %s86
      %p90 = scmp.eq.s32.totalorder %s10, 0
      %p91 = por %p89, %p90
      %p92 = scmp.ne.s32.totalorder %s84, %s86
      %p93 = scmp.eq.s32.totalorder %s15, 1
      %p94 = por %p92, %p93
      %p95 = scmp.ne.s32.totalorder %s86, %s87
      %p96 = scmp.eq.s32.totalorder %s15, 0
      %p97 = por %p95, %p96
      %p98 = scmp.ne.s32.totalorder %s86, %s87
      %p99 = scmp.eq.s32.totalorder %s16, 1
      %p100 = por %p98, %p99
      %p102 = scmp.ne.s32.totalorder %s87, %s101
      %p103 = scmp.eq.s32.totalorder %s16, 0
      %p104 = por %p102, %p103
      %s105 = ssub.s32 %s17, %s29
      %p106 = scmp.eq.s32.totalorder %s105, 0
      %s108 = sadd.s32 %s107, 1
      %s109 = scalar_select %p106, %s107, %s108
      %p112 = pneg %p106
      %p113 = scmp.eq.s32.totalorder %s10, 1
      %p114 = por %p112, %p113
      %p115 = scmp.ne.s32.totalorder %s107, %s110
      %p116 = scmp.eq.s32.totalorder %s10, 0
      %p117 = por %p115, %p116
      %p118 = scmp.ne.s32.totalorder %s107, %s110
      %p119 = scmp.eq.s32.totalorder %s15, 1
      %p120 = por %p118, %p119
      %p121 = scmp.ne.s32.totalorder %s110, %s111
      %p122 = scmp.eq.s32.totalorder %s15, 0
      %p123 = por %p121, %p122
      %p124 = scmp.ne.s32.totalorder %s110, %s111
      %p125 = scmp.eq.s32.totalorder %s16, 1
      %p126 = por %p124, %p125
      %p128 = scmp.ne.s32.totalorder %s111, %s127
      %p129 = scmp.eq.s32.totalorder %s16, 0
      %p130 = por %p128, %p129
      %p131 = scmp.le.s32.totalorder 1, %s10
      %p132 = scmp.lt.s32.totalorder %s10, 3
      %p133 = pnand %p131, %p132
      %p134 = pneg %p133
      // Predicated region
      $region9: #{zero_net_forward.2} parent=5 // pred_check
        _
      $region10: #{zero_net_forward.2} parent=5 // pred_check_branch
        %136 = sbr.rel (%p133) target = $region12
      $region11: #{zero_net_forward.2} parent=5 // pred_region
        %s137 = ssub.s32 %s10, 1
        // Predicated region
        $region13: #{zero_net_forward.2} parent=11 // pred_check
          %p138 = pneg %p76
        $region14: #{zero_net_forward.2} parent=11 // pred_check_branch
          %140 = sbr.rel (%p138) target = $region16
        $region15: #{zero_net_forward.2} parent=11 // pred_region
          %s141 = smul.u32 2, %s20
          %p142 = scmp.lt.s32.totalorder %s141, 1
          %s143 = scalar_select %p142, %s141, 1
          %s144 = smul.addr %s143, 4
          %s145 = scalar_lea.vmem %s1, %s144
          %s146 = smul.u32 2, %s20
        $region16: #{zero_net_forward.2} parent=11 // pred_fallthru
          _
        // Predicated region
        $region17: #{zero_net_forward.2} parent=11 // pred_check
          %p147 = pneg %p97
        $region18: #{zero_net_forward.2} parent=11 // pred_check_branch
          %149 = sbr.rel (%p147) target = $region20
        $region19: #{zero_net_forward.2} parent=11 // pred_region
          %s151 = ssub.s32 256, 256
          %152 = vsyncadd [#allocation4], %s151
          %s153 = sshll.u32 %s2, 4
          %s154 = int_to_ptr.vmem [resolvable:$true] %s153
          %159 = dma.vmem_to_smem %s154, 256, [#allocation3], [#allocation4], 128, 128, 8
        $region20: #{zero_net_forward.2} parent=11 // pred_fallthru
          _
      $region12: #{zero_net_forward.2} parent=5 // pred_fallthru
        _
      %p160 = scmp.lt.s32.totalorder %s10, 2
      // Predicated region
      $region21: #{zero_net_forward.2} parent=5 // pred_check
        %p161 = pneg %p160
      $region22: #{zero_net_forward.2} parent=5 // pred_check_branch
        %163 = sbr.rel (%p161) target = $region24
      $region23: #{zero_net_forward.2} parent=5 // pred_region
        // Predicated region
        $region25: #{zero_net_forward.2} parent=23 // pred_check
          %p164 = pneg %p44
        $region26: #{zero_net_forward.2} parent=23 // pred_check_branch
          %166 = sbr.rel (%p164) target = $region28
        $region27: #{zero_net_forward.2} parent=23 // pred_region
          %p167 = scmp.lt.s32.totalorder %s17, 1
          %s168 = scalar_select %p167, %s17, 1
          %p169 = scmp.lt.s32.totalorder %s18, 0
          %s170 = scalar_select %p169, %s18, 0
          %s171 = smul.addr %s168, 48
          %s172 = sadd.s32 %s170, %s171
          %s173 = smul.addr %s172, 4
          %s174 = scalar_lea.vmem %s0, %s173
        $region28: #{zero_net_forward.2} parent=23 // pred_fallthru
          _
      $region24: #{zero_net_forward.2} parent=5 // pred_fallthru
        _
      %p175 = scmp.le.s32.totalorder 1, %s10
      %p176 = scmp.lt.s32.totalorder %s10, 3
      %p177 = pnand %p175, %p176
      %p178 = pneg %p177
      // Predicated region
      $region29: #{zero_net_forward.2} parent=5 // pred_check
        _
      $region30: #{zero_net_forward.2} parent=5 // pred_check_branch
        %180 = sbr.rel (%p177) target = $region32
      $region31: #{zero_net_forward.2} parent=5 // pred_region
        %s181 = ssub.s32 %s10, 1
        // Predicated region
        $region33: #{zero_net_forward.2} parent=31 // pred_check
          %p182 = pneg %p97
        $region34: #{zero_net_forward.2} parent=31 // pred_check_branch
          %184 = sbr.rel (%p182) target = $region36
        $region35: #{zero_net_forward.2} parent=31 // pred_region
          %185 = dma.done [#allocation4], 256
        $region36: #{zero_net_forward.2} parent=31 // pred_fallthru
          _
        %186 = sfence
        %p187 = scmp.lt.s32.totalorder %s19, 1
        %s188 = scalar_select %p187, %s19, 1
        %p189 = scmp.lt.s32.totalorder %s20, 0
        %s190 = scalar_select %p189, %s20, 0
        %s191 = smul.addr %s188, 48
        %s192 = sadd.s32 %s190, %s191
        %s193 = smul.addr %s192, 4
        %s194 = scalar_lea.vmem %s0, %s193
        %p195 = pneg %p50
        %p196 = pneg %p47
        %s197 = smul.u32 2, %s20
        %p198 = scmp.lt.s32.totalorder %s197, 1
        %s199 = scalar_select %p198, %s197, 1
        %s200 = smul.addr %s199, 4
        %s201 = scalar_lea.vmem %s1, %s200
        %p202 = pneg %p76
        %p203 = pneg %p73
        %p204 = pneg %p97
        %p205 = pneg %p94
        %p206 = pneg %p123
        %p207 = pneg %p120
        %p208 = scmp.lt.s32.totalorder %s19, 1
        %s209 = scalar_select %p208, %s19, 1
        %s210 = smul.addr %s209, 192
        %s211 = smul.addr %s210, 4
        %s212 = scalar_lea.vmem %s3, %s211
        %p213 = scmp.lt.s32.totalorder %s19, 1
        %s214 = scalar_select %p213, %s19, 1
        %p215 = scmp.lt.s32.totalorder %s20, 0
        %s216 = scalar_select %p215, %s20, 0
        %s217 = smul.addr %s214, 48
        %s218 = sadd.s32 %s216, %s217
        %s219 = smul.addr %s218, 4
        %s220 = scalar_lea.vmem %s0, %s219
        %s221 = smul.u32 2, %s20
        %p222 = scmp.lt.s32.totalorder %s221, 1
        %s223 = scalar_select %p222, %s221, 1
        %s224 = smul.addr %s223, 4
        %s225 = scalar_lea.vmem %s1, %s224
        %s226 = smul.u32 2, %s20
        %p227 = scmp.lt.s32.totalorder %s19, 1
        %s228 = scalar_select %p227, %s19, 1
        %s229 = smul.addr %s228, 192
        %s230 = smul.addr %s229, 4
        %s231 = scalar_lea.vmem %s3, %s230
        %p233 = scmp.eq.s32.totalorder %s20, 0
        // Predicated region
        $region37: #{zero_net_forward.2} parent=31 // pred_check
          %p234 = pneg %p233
        $region38: #{zero_net_forward.2} parent=31 // pred_check_branch
          %236 = sbr.rel (%p234) target = $region40
        $region39: #{zero_net_forward.2} parent=31 // pred_region
          %237 = vst [vmem:[#allocation2] sm:$0xff] 0.0
          %238 = vst [vmem:[#allocation2 + $0x8] sm:$0xff] 0.0
          %239 = vst [vmem:[#allocation2 + $0x10] sm:$0xff] 0.0
          %240 = vst [vmem:[#allocation2 + $0x18] sm:$0xff] 0.0
          %241 = vst [vmem:[#allocation2 + $0x20] sm:$0xff] 0.0
          %242 = vst [vmem:[#allocation2 + $0x28] sm:$0xff] 0.0
          %243 = vst [vmem:[#allocation2 + $0x30] sm:$0xff] 0.0
          %244 = vst [vmem:[#allocation2 + $0x38] sm:$0xff] 0.0
          %245 = vst [vmem:[#allocation2 + $0x40] sm:$0xff] 0.0
          %246 = vst [vmem:[#allocation2 + $0x48] sm:$0xff] 0.0
          %247 = vst [vmem:[#allocation2 + $0x50] sm:$0xff] 0.0
          %248 = vst [vmem:[#allocation2 + $0x58] sm:$0xff] 0.0
          %249 = vst [vmem:[#allocation2 + $0x60] sm:$0xff] 0.0
          %250 = vst [vmem:[#allocation2 + $0x68] sm:$0xff] 0.0
          %251 = vst [vmem:[#allocation2 + $0x70] sm:$0xff] 0.0
          %252 = vst [vmem:[#allocation2 + $0x78] sm:$0xff] 0.0
          %253 = vst [vmem:[#allocation2 + $0x80] sm:$0xff] 0.0
          %254 = vst [vmem:[#allocation2 + $0x88] sm:$0xff] 0.0
          %255 = vst [vmem:[#allocation2 + $0x90] sm:$0xff] 0.0
          %256 = vst [vmem:[#allocation2 + $0x98] sm:$0xff] 0.0
          %257 = vst [vmem:[#allocation2 + $0xa0] sm:$0xff] 0.0
          %258 = vst [vmem:[#allocation2 + $0xa8] sm:$0xff] 0.0
          %259 = vst [vmem:[#allocation2 + $0xb0] sm:$0xff] 0.0
          %260 = vst [vmem:[#allocation2 + $0xb8] sm:$0xff] 0.0
          %261 = vst [vmem:[#allocation2 + $0xc0] sm:$0xff] 0.0
          %262 = vst [vmem:[#allocation2 + $0xc8] sm:$0xff] 0.0
          %263 = vst [vmem:[#allocation2 + $0xd0] sm:$0xff] 0.0
          %264 = vst [vmem:[#allocation2 + $0xd8] sm:$0xff] 0.0
          %265 = vst [vmem:[#allocation2 + $0xe0] sm:$0xff] 0.0
          %266 = vst [vmem:[#allocation2 + $0xe8] sm:$0xff] 0.0
          %267 = vst [vmem:[#allocation2 + $0xf0] sm:$0xff] 0.0
          %268 = vst [vmem:[#allocation2 + $0xf8] sm:$0xff] 0.0
          %269 = vst [vmem:[#allocation2 + $0x100] sm:$0xff] 0.0
          %270 = vst [vmem:[#allocation2 + $0x108] sm:$0xff] 0.0
          %271 = vst [vmem:[#allocation2 + $0x110] sm:$0xff] 0.0
          %272 = vst [vmem:[#allocation2 + $0x118] sm:$0xff] 0.0
          %273 = vst [vmem:[#allocation2 + $0x120] sm:$0xff] 0.0
          %274 = vst [vmem:[#allocation2 + $0x128] sm:$0xff] 0.0
          %275 = vst [vmem:[#allocation2 + $0x130] sm:$0xff] 0.0
          %276 = vst [vmem:[#allocation2 + $0x138] sm:$0xff] 0.0
          %277 = vst [vmem:[#allocation2 + $0x140] sm:$0xff] 0.0
          %278 = vst [vmem:[#allocation2 + $0x148] sm:$0xff] 0.0
          %279 = vst [vmem:[#allocation2 + $0x150] sm:$0xff] 0.0
          %280 = vst [vmem:[#allocation2 + $0x158] sm:$0xff] 0.0
          %281 = vst [vmem:[#allocation2 + $0x160] sm:$0xff] 0.0
          %282 = vst [vmem:[#allocation2 + $0x168] sm:$0xff] 0.0
          %283 = vst [vmem:[#allocation2 + $0x170] sm:$0xff] 0.0
          %284 = vst [vmem:[#allocation2 + $0x178] sm:$0xff] 0.0
        $region40: #{zero_net_forward.2} parent=31 // pred_fallthru
          _
        %v285 = vld [vmem:[%s220] sm:$0xf]
        %v286 = vld [vmem:[%s220 + $0x4] sm:$0xf]
        %v287 = vld [vmem:[%s220 + $0x8] sm:$0xf]
        %v288 = vld [vmem:[%s220 + $0xc] sm:$0xf]
        %v289 = vld [vmem:[%s220 + $0x10] sm:$0xf]
        %v290 = vld [vmem:[%s220 + $0x14] sm:$0xf]
        %v291 = vld [vmem:[%s220 + $0x18] sm:$0xf]
        %v292 = vld [vmem:[%s220 + $0x1c] sm:$0xf]
        %v293 = vld [vmem:[%s220 + $0x20] sm:$0xf]
        %v294 = vld [vmem:[%s220 + $0x24] sm:$0xf]
        %v295 = vld [vmem:[%s220 + $0x28] sm:$0xf]
        %v296 = vld [vmem:[%s220 + $0x2c] sm:$0xf]
        %v297 = vld [vmem:[%s220 + $0x30] sm:$0xf]
        %v298 = vld [vmem:[%s220 + $0x34] sm:$0xf]
        %v299 = vld [vmem:[%s220 + $0x38] sm:$0xf]
        %v300 = vld [vmem:[%s220 + $0x3c] sm:$0xf]
        %v301 = vld [vmem:[%s220 + $0x40] sm:$0xf]
        %v302 = vld [vmem:[%s220 + $0x44] sm:$0xf]
        %v303 = vld [vmem:[%s220 + $0x48] sm:$0xf]
        %v304 = vld [vmem:[%s220 + $0x4c] sm:$0xf]
        %v305 = vld [vmem:[%s220 + $0x50] sm:$0xf]
        %v306 = vld [vmem:[%s220 + $0x54] sm:$0xf]
        %v307 = vld [vmem:[%s220 + $0x58] sm:$0xf]
        %v308 = vld [vmem:[%s220 + $0x5c] sm:$0xf]
        %v309 = vld [vmem:[%s220 + $0x60] sm:$0xf]
        %v310 = vld [vmem:[%s220 + $0x64] sm:$0xf]
        %v311 = vld [vmem:[%s220 + $0x68] sm:$0xf]
        %v312 = vld [vmem:[%s220 + $0x6c] sm:$0xf]
        %v313 = vld [vmem:[%s220 + $0x70] sm:$0xf]
        %v314 = vld [vmem:[%s220 + $0x74] sm:$0xf]
        %v315 = vld [vmem:[%s220 + $0x78] sm:$0xf]
        %v316 = vld [vmem:[%s220 + $0x7c] sm:$0xf]
        %v317 = vld [vmem:[%s220 + $0x80] sm:$0xf]
        %v318 = vld [vmem:[%s220 + $0x84] sm:$0xf]
        %v319 = vld [vmem:[%s220 + $0x88] sm:$0xf]
        %v320 = vld [vmem:[%s220 + $0x8c] sm:$0xf]
        %v321 = vld [vmem:[%s220 + $0x90] sm:$0xf]
        %v322 = vld [vmem:[%s220 + $0x94] sm:$0xf]
        %v323 = vld [vmem:[%s220 + $0x98] sm:$0xf]
        %v324 = vld [vmem:[%s220 + $0x9c] sm:$0xf]
        %v325 = vld [vmem:[%s220 + $0xa0] sm:$0xf]
        %v326 = vld [vmem:[%s220 + $0xa4] sm:$0xf]
        %v327 = vld [vmem:[%s220 + $0xa8] sm:$0xf]
        %v328 = vld [vmem:[%s220 + $0xac] sm:$0xf]
        %v329 = vld [vmem:[%s220 + $0xb0] sm:$0xf]
        %v330 = vld [vmem:[%s220 + $0xb4] sm:$0xf]
        %v331 = vld [vmem:[%s220 + $0xb8] sm:$0xf]
        %v332 = vld [vmem:[%s220 + $0xbc] sm:$0xf]
        %v333 = vld [vmem:[%s225] sm:$0xf]
        %v334 = vld [vmem:[%s225 + $0x4] sm:$0xf]
        %v383 = vunpack.c.l.b16 %v285
        %v384 = vunpack.c.l.b16 %v286
        %v385 = vunpack.c.l.b16 %v287
        %v386 = vunpack.c.l.b16 %v288
        %v387 = vunpack.c.l.b16 %v289
        %v388 = vunpack.c.l.b16 %v290
        %v389 = vunpack.c.l.b16 %v291
        %v390 = vunpack.c.l.b16 %v292
        %v391 = vunpack.c.l.b16 %v293
        %v392 = vunpack.c.l.b16 %v294
        %v393 = vunpack.c.l.b16 %v295
        %v394 = vunpack.c.l.b16 %v296
        %v395 = vunpack.c.l.b16 %v297
        %v396 = vunpack.c.l.b16 %v298
        %v397 = vunpack.c.l.b16 %v299
        %v398 = vunpack.c.l.b16 %v300
        %v399 = vunpack.c.l.b16 %v301
        %v400 = vunpack.c.l.b16 %v302
        %v401 = vunpack.c.l.b16 %v303
        %v402 = vunpack.c.l.b16 %v304
        %v403 = vunpack.c.l.b16 %v305
        %v404 = vunpack.c.l.b16 %v306
        %v405 = vunpack.c.l.b16 %v307
        %v406 = vunpack.c.l.b16 %v308
        %v407 = vunpack.c.l.b16 %v309
        %v408 = vunpack.c.l.b16 %v310
        %v409 = vunpack.c.l.b16 %v311
        %v410 = vunpack.c.l.b16 %v312
        %v411 = vunpack.c.l.b16 %v313
        %v412 = vunpack.c.l.b16 %v314
        %v413 = vunpack.c.l.b16 %v315
        %v414 = vunpack.c.l.b16 %v316
        %v415 = vunpack.c.l.b16 %v317
        %v416 = vunpack.c.l.b16 %v318
        %v417 = vunpack.c.l.b16 %v319
        %v418 = vunpack.c.l.b16 %v320
        %v419 = vunpack.c.l.b16 %v321
        %v420 = vunpack.c.l.b16 %v322
        %v421 = vunpack.c.l.b16 %v323
        %v422 = vunpack.c.l.b16 %v324
        %v423 = vunpack.c.l.b16 %v325
        %v424 = vunpack.c.l.b16 %v326
        %v425 = vunpack.c.l.b16 %v327
        %v426 = vunpack.c.l.b16 %v328
        %v427 = vunpack.c.l.b16 %v329
        %v428 = vunpack.c.l.b16 %v330
        %v429 = vunpack.c.l.b16 %v331
        %v430 = vunpack.c.l.b16 %v332
        %v431 = vpack.c.b16 %v384, %v383
        %v432 = vpack.c.b16 %v386, %v385
        %v433 = vpack.c.b16 %v388, %v387
        %v434 = vpack.c.b16 %v390, %v389
        %v435 = vpack.c.b16 %v392, %v391
        %v436 = vpack.c.b16 %v394, %v393
        %v437 = vpack.c.b16 %v396, %v395
        %v438 = vpack.c.b16 %v398, %v397
        %v439 = vpack.c.b16 %v400, %v399
        %v440 = vpack.c.b16 %v402, %v401
        %v441 = vpack.c.b16 %v404, %v403
        %v442 = vpack.c.b16 %v406, %v405
        %v443 = vpack.c.b16 %v408, %v407
        %v444 = vpack.c.b16 %v410, %v409
        %v445 = vpack.c.b16 %v412, %v411
        %v446 = vpack.c.b16 %v414, %v413
        %v447 = vpack.c.b16 %v416, %v415
        %v448 = vpack.c.b16 %v418, %v417
        %v449 = vpack.c.b16 %v420, %v419
        %v450 = vpack.c.b16 %v422, %v421
        %v451 = vpack.c.b16 %v424, %v423
        %v452 = vpack.c.b16 %v426, %v425
        %v453 = vpack.c.b16 %v428, %v427
        %v454 = vpack.c.b16 %v430, %v429
        %v457 = vunpack.c.l.b16 %v333
        %v458 = vunpack.c.l.b16 %v334
        %v459 = vpack.c.b16 %v458, %v457
        %vm461 = vcmask 130048
        %v463 = vsel %vm461, %v431, 0
        %v466 = vsel %vm461, %v432, 0
        %v469 = vsel %vm461, %v433, 0
        %v472 = vsel %vm461, %v434, 0
        %v475 = vsel %vm461, %v435, 0
        %v478 = vsel %vm461, %v436, 0
        %v481 = vsel %vm461, %v437, 0
        %v484 = vsel %vm461, %v438, 0
        %v487 = vsel %vm461, %v439, 0
        %v490 = vsel %vm461, %v440, 0
        %v493 = vsel %vm461, %v441, 0
        %v496 = vsel %vm461, %v442, 0
        %v499 = vsel %vm461, %v443, 0
        %v502 = vsel %vm461, %v444, 0
        %v505 = vsel %vm461, %v445, 0
        %v508 = vsel %vm461, %v446, 0
        %v511 = vsel %vm461, %v447, 0
        %v514 = vsel %vm461, %v448, 0
        %v517 = vsel %vm461, %v449, 0
        %v520 = vsel %vm461, %v450, 0
        %v523 = vsel %vm461, %v451, 0
        %v526 = vsel %vm461, %v452, 0
        %v529 = vsel %vm461, %v453, 0
        %v532 = vsel %vm461, %v454, 0
        %534 = vmatprep.subr.bf16.mxu0 0
        %535 = vmatpush1.bf16.msra.mxu0 %v459
        %536 = vmatprep.subr.bf16.mxu0 0
        %537 = vmatpush1.bf16.msra.mxu0 0
        %538 = vmatprep.subr.bf16.mxu0 0
        %539 = vmatpush1.bf16.msra.mxu0 0
        %540 = vmatprep.subr.bf16.mxu0 0
        %541 = vmatpush1.bf16.msra.mxu0 0
        %542 = vmatprep.subr.bf16.mxu0 0
        %543 = vmatpush1.bf16.msra.mxu0 0
        %544 = vmatprep.subr.bf16.mxu0 0
        %545 = vmatpush1.bf16.msra.mxu0 0
        %546 = vmatprep.subr.bf16.mxu0 0
        %547 = vmatpush1.bf16.msra.mxu0 0
        %548 = vmatprep.subr.bf16.mxu0 0
        %549 = vmatpush1.bf16.msra.mxu0 0
        %550 = vmatprep.subr.bf16.mxu0 0
        %551 = vmatpush1.bf16.msra.mxu0 0
        %552 = vmatprep.subr.bf16.mxu0 0
        %553 = vmatpush1.bf16.msra.mxu0 0
        %554 = vmatprep.subr.bf16.mxu0 0
        %555 = vmatpush1.bf16.msra.mxu0 0
        %556 = vmatprep.subr.bf16.mxu0 0
        %557 = vmatpush1.bf16.msra.mxu0 0
        %558 = vmatprep.subr.bf16.mxu0 0
        %559 = vmatpush1.bf16.msra.mxu0 0
        %560 = vmatprep.subr.bf16.mxu0 0
        %561 = vmatpush1.bf16.msra.mxu0 0
        %562 = vmatprep.subr.bf16.mxu0 0
        %563 = vmatpush1.bf16.msra.mxu0 0
        %564 = vmatprep.subr.bf16.mxu0 0
        %565 = vmatpush1.bf16.msra.mxu0 0
        %566 = vmatprep.mubr.bf16.mxu0 0
        %567 = vmatmul.mubr.bf16.gmra.mrb[0].mxu0 %v463
        %v568 = vpop.f32.mrb[0].mxu0
        %v569 = vadd.f32 0.0, %v568
        %v570 = vpop.f32.mrb[0].mxu0
        %v571 = vpop.f32.mrb[0].mxu0
        %v572 = vadd.f32 0.0, %v571
        %v573 = vpop.f32.mrb[0].mxu0
        %574 = vmatprep.mubr.bf16.mxu0 0
        %575 = vmatmul.mubr.bf16.gmra.mrb[0].mxu0 %v466
        %v576 = vpop.f32.mrb[0].mxu0
        %v577 = vadd.f32 0.0, %v576
        %v578 = vpop.f32.mrb[0].mxu0
        %v579 = vpop.f32.mrb[0].mxu0
        %v580 = vadd.f32 0.0, %v579
        %v581 = vpop.f32.mrb[0].mxu0
        %582 = vmatprep.mubr.bf16.mxu0 0
        %583 = vmatmul.mubr.bf16.gmra.mrb[0].mxu0 %v469
        %v584 = vpop.f32.mrb[0].mxu0
        %v585 = vadd.f32 0.0, %v584
        %v586 = vpop.f32.mrb[0].mxu0
        %v587 = vpop.f32.mrb[0].mxu0
        %v588 = vadd.f32 0.0, %v587
        %v589 = vpop.f32.mrb[0].mxu0
        %590 = vmatprep.mubr.bf16.mxu0 0
        %591 = vmatmul.mubr.bf16.gmra.mrb[0].mxu0 %v472
        %v592 = vpop.f32.mrb[0].mxu0
        %v593 = vadd.f32 0.0, %v592
        %v594 = vpop.f32.mrb[0].mxu0
        %v595 = vpop.f32.mrb[0].mxu0
        %v596 = vadd.f32 0.0, %v595
        %v597 = vpop.f32.mrb[0].mxu0
        %598 = vmatprep.mubr.bf16.mxu0 0
        %599 = vmatmul.mubr.bf16.gmra.mrb[0].mxu0 %v475
        %v600 = vpop.f32.mrb[0].mxu0
        %v601 = vadd.f32 0.0, %v600
        %v602 = vpop.f32.mrb[0].mxu0
        %v603 = vpop.f32.mrb[0].mxu0
        %v604 = vadd.f32 0.0, %v603
        %v605 = vpop.f32.mrb[0].mxu0
        %606 = vmatprep.mubr.bf16.mxu0 0
        %607 = vmatmul.mubr.bf16.gmra.mrb[0].mxu0 %v478
        %v608 = vpop.f32.mrb[0].mxu0
        %v609 = vadd.f32 0.0, %v608
        %v610 = vpop.f32.mrb[0].mxu0
        %v611 = vpop.f32.mrb[0].mxu0
        %v612 = vadd.f32 0.0, %v611
        %v613 = vpop.f32.mrb[0].mxu0
        %614 = vmatprep.mubr.bf16.mxu0 0
        %615 = vmatmul.mubr.bf16.gmra.mrb[0].mxu0 %v481
        %v616 = vpop.f32.mrb[0].mxu0
        %v617 = vadd.f32 0.0, %v616
        %v618 = vpop.f32.mrb[0].mxu0
        %v619 = vpop.f32.mrb[0].mxu0
        %v620 = vadd.f32 0.0, %v619
        %v621 = vpop.f32.mrb[0].mxu0
        %622 = vmatprep.mubr.bf16.mxu0 0
        %623 = vmatmul.mubr.bf16.gmra.mrb[0].mxu0 %v484
        %v624 = vpop.f32.mrb[0].mxu0
        %v625 = vadd.f32 0.0, %v624
        %v626 = vpop.f32.mrb[0].mxu0
        %v627 = vpop.f32.mrb[0].mxu0
        %v628 = vadd.f32 0.0, %v627
        %v629 = vpop.f32.mrb[0].mxu0
        %630 = vmatprep.mubr.bf16.mxu0 0
        %631 = vmatmul.mubr.bf16.gmra.mrb[0].mxu0 %v487
        %v632 = vpop.f32.mrb[0].mxu0
        %v633 = vadd.f32 0.0, %v632
        %v634 = vpop.f32.mrb[0].mxu0
        %v635 = vpop.f32.mrb[0].mxu0
        %v636 = vadd.f32 0.0, %v635
        %v637 = vpop.f32.mrb[0].mxu0
        %638 = vmatprep.mubr.bf16.mxu0 0
        %639 = vmatmul.mubr.bf16.gmra.mrb[0].mxu0 %v490
        %v640 = vpop.f32.mrb[0].mxu0
        %v641 = vadd.f32 0.0, %v640
        %v642 = vpop.f32.mrb[0].mxu0
        %v643 = vpop.f32.mrb[0].mxu0
        %v644 = vadd.f32 0.0, %v643
        %v645 = vpop.f32.mrb[0].mxu0
        %646 = vmatprep.mubr.bf16.mxu0 0
        %647 = vmatmul.mubr.bf16.gmra.mrb[0].mxu0 %v493
        %v648 = vpop.f32.mrb[0].mxu0
        %v649 = vadd.f32 0.0, %v648
        %v650 = vpop.f32.mrb[0].mxu0
        %v651 = vpop.f32.mrb[0].mxu0
        %v652 = vadd.f32 0.0, %v651
        %v653 = vpop.f32.mrb[0].mxu0
        %654 = vmatprep.mubr.bf16.mxu0 0
        %655 = vmatmul.mubr.bf16.gmra.mrb[0].mxu0 %v496
        %v656 = vpop.f32.mrb[0].mxu0
        %v657 = vadd.f32 0.0, %v656
        %v658 = vpop.f32.mrb[0].mxu0
        %v659 = vpop.f32.mrb[0].mxu0
        %v660 = vadd.f32 0.0, %v659
        %v661 = vpop.f32.mrb[0].mxu0
        %662 = vmatprep.mubr.bf16.mxu0 0
        %663 = vmatmul.mubr.bf16.gmra.mrb[0].mxu0 %v499
        %v664 = vpop.f32.mrb[0].mxu0
        %v665 = vadd.f32 0.0, %v664
        %v666 = vpop.f32.mrb[0].mxu0
        %v667 = vpop.f32.mrb[0].mxu0
        %v668 = vadd.f32 0.0, %v667
        %v669 = vpop.f32.mrb[0].mxu0
        %670 = vmatprep.mubr.bf16.mxu0 0
        %671 = vmatmul.mubr.bf16.gmra.mrb[0].mxu0 %v502
        %v672 = vpop.f32.mrb[0].mxu0
        %v673 = vadd.f32 0.0, %v672
        %v674 = vpop.f32.mrb[0].mxu0
        %v675 = vpop.f32.mrb[0].mxu0
        %v676 = vadd.f32 0.0, %v675
        %v677 = vpop.f32.mrb[0].mxu0
        %678 = vmatprep.mubr.bf16.mxu0 0
        %679 = vmatmul.mubr.bf16.gmra.mrb[0].mxu0 %v505
        %v680 = vpop.f32.mrb[0].mxu0
        %v681 = vadd.f32 0.0, %v680
        %v682 = vpop.f32.mrb[0].mxu0
        %v683 = vpop.f32.mrb[0].mxu0
        %v684 = vadd.f32 0.0, %v683
        %v685 = vpop.f32.mrb[0].mxu0
        %686 = vmatprep.mubr.bf16.mxu0 0
        %687 = vmatmul.mubr.bf16.gmra.mrb[0].mxu0 %v508
        %v688 = vpop.f32.mrb[0].mxu0
        %v689 = vadd.f32 0.0, %v688
        %v690 = vpop.f32.mrb[0].mxu0
        %v691 = vpop.f32.mrb[0].mxu0
        %v692 = vadd.f32 0.0, %v691
        %v693 = vpop.f32.mrb[0].mxu0
        %694 = vmatprep.mubr.bf16.mxu0 0
        %695 = vmatmul.mubr.bf16.gmra.mrb[0].mxu0 %v511
        %v696 = vpop.f32.mrb[0].mxu0
        %v697 = vadd.f32 0.0, %v696
        %v698 = vpop.f32.mrb[0].mxu0
        %v699 = vpop.f32.mrb[0].mxu0
        %v700 = vadd.f32 0.0, %v699
        %v701 = vpop.f32.mrb[0].mxu0
        %702 = vmatprep.mubr.bf16.mxu0 0
        %703 = vmatmul.mubr.bf16.gmra.mrb[0].mxu0 %v514
        %v704 = vpop.f32.mrb[0].mxu0
        %v705 = vadd.f32 0.0, %v704
        %v706 = vpop.f32.mrb[0].mxu0
        %v707 = vpop.f32.mrb[0].mxu0
        %v708 = vadd.f32 0.0, %v707
        %v709 = vpop.f32.mrb[0].mxu0
        %710 = vmatprep.mubr.bf16.mxu0 0
        %711 = vmatmul.mubr.bf16.gmra.mrb[0].mxu0 %v517
        %v712 = vpop.f32.mrb[0].mxu0
        %v713 = vadd.f32 0.0, %v712
        %v714 = vpop.f32.mrb[0].mxu0
        %v715 = vpop.f32.mrb[0].mxu0
        %v716 = vadd.f32 0.0, %v715
        %v717 = vpop.f32.mrb[0].mxu0
        %718 = vmatprep.mubr.bf16.mxu0 0
        %719 = vmatmul.mubr.bf16.gmra.mrb[0].mxu0 %v520
        %v720 = vpop.f32.mrb[0].mxu0
        %v721 = vadd.f32 0.0, %v720
        %v722 = vpop.f32.mrb[0].mxu0
        %v723 = vpop.f32.mrb[0].mxu0
        %v724 = vadd.f32 0.0, %v723
        %v725 = vpop.f32.mrb[0].mxu0
        %726 = vmatprep.mubr.bf16.mxu0 0
        %727 = vmatmul.mubr.bf16.gmra.mrb[0].mxu0 %v523
        %v728 = vpop.f32.mrb[0].mxu0
        %v729 = vadd.f32 0.0, %v728
        %v730 = vpop.f32.mrb[0].mxu0
        %v731 = vpop.f32.mrb[0].mxu0
        %v732 = vadd.f32 0.0, %v731
        %v733 = vpop.f32.mrb[0].mxu0
        %734 = vmatprep.mubr.bf16.mxu0 0
        %735 = vmatmul.mubr.bf16.gmra.mrb[0].mxu0 %v526
        %v736 = vpop.f32.mrb[0].mxu0
        %v737 = vadd.f32 0.0, %v736
        %v738 = vpop.f32.mrb[0].mxu0
        %v739 = vpop.f32.mrb[0].mxu0
        %v740 = vadd.f32 0.0, %v739
        %v741 = vpop.f32.mrb[0].mxu0
        %742 = vmatprep.mubr.bf16.mxu0 0
        %743 = vmatmul.mubr.bf16.gmra.mrb[0].mxu0 %v529
        %v744 = vpop.f32.mrb[0].mxu0
        %v745 = vadd.f32 0.0, %v744
        %v746 = vpop.f32.mrb[0].mxu0
        %v747 = vpop.f32.mrb[0].mxu0
        %v748 = vadd.f32 0.0, %v747
        %v749 = vpop.f32.mrb[0].mxu0
        %750 = vmatprep.mubr.bf16.mxu0 0
        %751 = vmatmul.mubr.bf16.gmra.mrb[0].mxu0 %v532
        %v752 = vpop.f32.mrb[0].mxu0
        %v753 = vadd.f32 0.0, %v752
        %v754 = vpop.f32.mrb[0].mxu0
        %v755 = vpop.f32.mrb[0].mxu0
        %v756 = vadd.f32 0.0, %v755
        %v757 = vpop.f32.mrb[0].mxu0
        %758 = vdwg.mxu0
        %v759 = vld [vmem:[#allocation2] sm:$0xff]
        %v760 = vld [vmem:[#allocation2 + $0x8] sm:$0xff]
        %v761 = vld [vmem:[#allocation2 + $0x10] sm:$0xff]
        %v762 = vld [vmem:[#allocation2 + $0x18] sm:$0xff]
        %v763 = vld [vmem:[#allocation2 + $0x20] sm:$0xff]
        %v764 = vld [vmem:[#allocation2 + $0x28] sm:$0xff]
        %v765 = vld [vmem:[#allocation2 + $0x30] sm:$0xff]
        %v766 = vld [vmem:[#allocation2 + $0x38] sm:$0xff]
        %v767 = vld [vmem:[#allocation2 + $0x40] sm:$0xff]
        %v768 = vld [vmem:[#allocation2 + $0x48] sm:$0xff]
        %v769 = vld [vmem:[#allocation2 + $0x50] sm:$0xff]
        %v770 = vld [vmem:[#allocation2 + $0x58] sm:$0xff]
        %v771 = vld [vmem:[#allocation2 + $0x60] sm:$0xff]
        %v772 = vld [vmem:[#allocation2 + $0x68] sm:$0xff]
        %v773 = vld [vmem:[#allocation2 + $0x70] sm:$0xff]
        %v774 = vld [vmem:[#allocation2 + $0x78] sm:$0xff]
        %v775 = vld [vmem:[#allocation2 + $0x80] sm:$0xff]
        %v776 = vld [vmem:[#allocation2 + $0x88] sm:$0xff]
        %v777 = vld [vmem:[#allocation2 + $0x90] sm:$0xff]
        %v778 = vld [vmem:[#allocation2 + $0x98] sm:$0xff]
        %v779 = vld [vmem:[#allocation2 + $0xa0] sm:$0xff]
        %v780 = vld [vmem:[#allocation2 + $0xa8] sm:$0xff]
        %v781 = vld [vmem:[#allocation2 + $0xb0] sm:$0xff]
        %v782 = vld [vmem:[#allocation2 + $0xb8] sm:$0xff]
        %v783 = vld [vmem:[#allocation2 + $0xc0] sm:$0xff]
        %v784 = vld [vmem:[#allocation2 + $0xc8] sm:$0xff]
        %v785 = vld [vmem:[#allocation2 + $0xd0] sm:$0xff]
        %v786 = vld [vmem:[#allocation2 + $0xd8] sm:$0xff]
        %v787 = vld [vmem:[#allocation2 + $0xe0] sm:$0xff]
        %v788 = vld [vmem:[#allocation2 + $0xe8] sm:$0xff]
        %v789 = vld [vmem:[#allocation2 + $0xf0] sm:$0xff]
        %v790 = vld [vmem:[#allocation2 + $0xf8] sm:$0xff]
        %v791 = vld [vmem:[#allocation2 + $0x100] sm:$0xff]
        %v792 = vld [vmem:[#allocation2 + $0x108] sm:$0xff]
        %v793 = vld [vmem:[#allocation2 + $0x110] sm:$0xff]
        %v794 = vld [vmem:[#allocation2 + $0x118] sm:$0xff]
        %v795 = vld [vmem:[#allocation2 + $0x120] sm:$0xff]
        %v796 = vld [vmem:[#allocation2 + $0x128] sm:$0xff]
        %v797 = vld [vmem:[#allocation2 + $0x130] sm:$0xff]
        %v798 = vld [vmem:[#allocation2 + $0x138] sm:$0xff]
        %v799 = vld [vmem:[#allocation2 + $0x140] sm:$0xff]
        %v800 = vld [vmem:[#allocation2 + $0x148] sm:$0xff]
        %v801 = vld [vmem:[#allocation2 + $0x150] sm:$0xff]
        %v802 = vld [vmem:[#allocation2 + $0x158] sm:$0xff]
        %v803 = vld [vmem:[#allocation2 + $0x160] sm:$0xff]
        %v804 = vld [vmem:[#allocation2 + $0x168] sm:$0xff]
        %v805 = vld [vmem:[#allocation2 + $0x170] sm:$0xff]
        %v806 = vld [vmem:[#allocation2 + $0x178] sm:$0xff]
        %v807 = vadd.f32 %v759, %v569
        %v808 = vadd.f32 %v760, %v572
        %v809 = vadd.f32 %v761, %v577
        %v810 = vadd.f32 %v762, %v580
        %v811 = vadd.f32 %v763, %v585
        %v812 = vadd.f32 %v764, %v588
        %v813 = vadd.f32 %v765, %v593
        %v814 = vadd.f32 %v766, %v596
        %v815 = vadd.f32 %v767, %v601
        %v816 = vadd.f32 %v768, %v604
        %v817 = vadd.f32 %v769, %v609
        %v818 = vadd.f32 %v770, %v612
        %v819 = vadd.f32 %v771, %v617
        %v820 = vadd.f32 %v772, %v620
        %v821 = vadd.f32 %v773, %v625
        %v822 = vadd.f32 %v774, %v628
        %v823 = vadd.f32 %v775, %v633
        %v824 = vadd.f32 %v776, %v636
        %v825 = vadd.f32 %v777, %v641
        %v826 = vadd.f32 %v778, %v644
        %v827 = vadd.f32 %v779, %v649
        %v828 = vadd.f32 %v780, %v652
        %v829 = vadd.f32 %v781, %v657
        %v830 = vadd.f32 %v782, %v660
        %v831 = vadd.f32 %v783, %v665
        %v832 = vadd.f32 %v784, %v668
        %v833 = vadd.f32 %v785, %v673
        %v834 = vadd.f32 %v786, %v676
        %v835 = vadd.f32 %v787, %v681
        %v836 = vadd.f32 %v788, %v684
        %v837 = vadd.f32 %v789, %v689
        %v838 = vadd.f32 %v790, %v692
        %v839 = vadd.f32 %v791, %v697
        %v840 = vadd.f32 %v792, %v700
        %v841 = vadd.f32 %v793, %v705
        %v842 = vadd.f32 %v794, %v708
        %v843 = vadd.f32 %v795, %v713
        %v844 = vadd.f32 %v796, %v716
        %v845 = vadd.f32 %v797, %v721
        %v846 = vadd.f32 %v798, %v724
        %v847 = vadd.f32 %v799, %v729
        %v848 = vadd.f32 %v800, %v732
        %v849 = vadd.f32 %v801, %v737
        %v850 = vadd.f32 %v802, %v740
        %v851 = vadd.f32 %v803, %v745
        %v852 = vadd.f32 %v804, %v748
        %v853 = vadd.f32 %v805, %v753
        %v854 = vadd.f32 %v806, %v756
        %855 = vst [vmem:[#allocation2] sm:$0xff] %v807
        %856 = vst [vmem:[#allocation2 + $0x8] sm:$0xff] %v808
        %857 = vst [vmem:[#allocation2 + $0x10] sm:$0xff] %v809
        %858 = vst [vmem:[#allocation2 + $0x18] sm:$0xff] %v810
        %859 = vst [vmem:[#allocation2 + $0x20] sm:$0xff] %v811
        %860 = vst [vmem:[#allocation2 + $0x28] sm:$0xff] %v812
        %861 = vst [vmem:[#allocation2 + $0x30] sm:$0xff] %v813
        %862 = vst [vmem:[#allocation2 + $0x38] sm:$0xff] %v814
        %863 = vst [vmem:[#allocation2 + $0x40] sm:$0xff] %v815
        %864 = vst [vmem:[#allocation2 + $0x48] sm:$0xff] %v816
        %865 = vst [vmem:[#allocation2 + $0x50] sm:$0xff] %v817
        %866 = vst [vmem:[#allocation2 + $0x58] sm:$0xff] %v818
        %867 = vst [vmem:[#allocation2 + $0x60] sm:$0xff] %v819
        %868 = vst [vmem:[#allocation2 + $0x68] sm:$0xff] %v820
        %869 = vst [vmem:[#allocation2 + $0x70] sm:$0xff] %v821
        %870 = vst [vmem:[#allocation2 + $0x78] sm:$0xff] %v822
        %871 = vst [vmem:[#allocation2 + $0x80] sm:$0xff] %v823
        %872 = vst [vmem:[#allocation2 + $0x88] sm:$0xff] %v824
        %873 = vst [vmem:[#allocation2 + $0x90] sm:$0xff] %v825
        %874 = vst [vmem:[#allocation2 + $0x98] sm:$0xff] %v826
        %875 = vst [vmem:[#allocation2 + $0xa0] sm:$0xff] %v827
        %876 = vst [vmem:[#allocation2 + $0xa8] sm:$0xff] %v828
        %877 = vst [vmem:[#allocation2 + $0xb0] sm:$0xff] %v829
        %878 = vst [vmem:[#allocation2 + $0xb8] sm:$0xff] %v830
        %879 = vst [vmem:[#allocation2 + $0xc0] sm:$0xff] %v831
        %880 = vst [vmem:[#allocation2 + $0xc8] sm:$0xff] %v832
        %881 = vst [vmem:[#allocation2 + $0xd0] sm:$0xff] %v833
        %882 = vst [vmem:[#allocation2 + $0xd8] sm:$0xff] %v834
        %883 = vst [vmem:[#allocation2 + $0xe0] sm:$0xff] %v835
        %884 = vst [vmem:[#allocation2 + $0xe8] sm:$0xff] %v836
        %885 = vst [vmem:[#allocation2 + $0xf0] sm:$0xff] %v837
        %886 = vst [vmem:[#allocation2 + $0xf8] sm:$0xff] %v838
        %887 = vst [vmem:[#allocation2 + $0x100] sm:$0xff] %v839
        %888 = vst [vmem:[#allocation2 + $0x108] sm:$0xff] %v840
        %889 = vst [vmem:[#allocation2 + $0x110] sm:$0xff] %v841
        %890 = vst [vmem:[#allocation2 + $0x118] sm:$0xff] %v842
        %891 = vst [vmem:[#allocation2 + $0x120] sm:$0xff] %v843
        %892 = vst [vmem:[#allocation2 + $0x128] sm:$0xff] %v844
        %893 = vst [vmem:[#allocation2 + $0x130] sm:$0xff] %v845
        %894 = vst [vmem:[#allocation2 + $0x138] sm:$0xff] %v846
        %895 = vst [vmem:[#allocation2 + $0x140] sm:$0xff] %v847
        %896 = vst [vmem:[#allocation2 + $0x148] sm:$0xff] %v848
        %897 = vst [vmem:[#allocation2 + $0x150] sm:$0xff] %v849
        %898 = vst [vmem:[#allocation2 + $0x158] sm:$0xff] %v850
        %899 = vst [vmem:[#allocation2 + $0x160] sm:$0xff] %v851
        %900 = vst [vmem:[#allocation2 + $0x168] sm:$0xff] %v852
        %901 = vst [vmem:[#allocation2 + $0x170] sm:$0xff] %v853
        %902 = vst [vmem:[#allocation2 + $0x178] sm:$0xff] %v854
        // Predicated region
        $region41: #{zero_net_forward.2} parent=31 // pred_check
          %p903 = pneg %p233
        $region42: #{zero_net_forward.2} parent=31 // pred_check_branch
          %905 = sbr.rel (%p903) target = $region44
        $region43: #{zero_net_forward.2} parent=31 // pred_region
          %v906 = vld [vmem:[#allocation2] sm:$0xff]
          %v907 = vld [vmem:[#allocation2 + $0x8] sm:$0xff]
          %v908 = vld [vmem:[#allocation2 + $0x10] sm:$0xff]
          %v909 = vld [vmem:[#allocation2 + $0x18] sm:$0xff]
          %v910 = vld [vmem:[#allocation2 + $0x20] sm:$0xff]
          %v911 = vld [vmem:[#allocation2 + $0x28] sm:$0xff]
          %v912 = vld [vmem:[#allocation2 + $0x30] sm:$0xff]
          %v913 = vld [vmem:[#allocation2 + $0x38] sm:$0xff]
          %v914 = vld [vmem:[#allocation2 + $0x40] sm:$0xff]
          %v915 = vld [vmem:[#allocation2 + $0x48] sm:$0xff]
          %v916 = vld [vmem:[#allocation2 + $0x50] sm:$0xff]
          %v917 = vld [vmem:[#allocation2 + $0x58] sm:$0xff]
          %v918 = vld [vmem:[#allocation2 + $0x60] sm:$0xff]
          %v919 = vld [vmem:[#allocation2 + $0x68] sm:$0xff]
          %v920 = vld [vmem:[#allocation2 + $0x70] sm:$0xff]
          %v921 = vld [vmem:[#allocation2 + $0x78] sm:$0xff]
          %s922 = scalar_lea.vmem [#allocation2], 128
          %v923 = vld [vmem:[%s922] sm:$0xff]
          %v924 = vld [vmem:[%s922 + $0x8] sm:$0xff]
          %v925 = vld [vmem:[%s922 + $0x10] sm:$0xff]
          %v926 = vld [vmem:[%s922 + $0x18] sm:$0xff]
          %v927 = vld [vmem:[%s922 + $0x20] sm:$0xff]
          %v928 = vld [vmem:[%s922 + $0x28] sm:$0xff]
          %v929 = vld [vmem:[%s922 + $0x30] sm:$0xff]
          %v930 = vld [vmem:[%s922 + $0x38] sm:$0xff]
          %v931 = vld [vmem:[%s922 + $0x40] sm:$0xff]
          %v932 = vld [vmem:[%s922 + $0x48] sm:$0xff]
          %v933 = vld [vmem:[%s922 + $0x50] sm:$0xff]
          %v934 = vld [vmem:[%s922 + $0x58] sm:$0xff]
          %v935 = vld [vmem:[%s922 + $0x60] sm:$0xff]
          %v936 = vld [vmem:[%s922 + $0x68] sm:$0xff]
          %v937 = vld [vmem:[%s922 + $0x70] sm:$0xff]
          %v938 = vld [vmem:[%s922 + $0x78] sm:$0xff]
          %s939 = scalar_lea.vmem [#allocation2], 256
          %v940 = vld [vmem:[%s939] sm:$0xff]
          %v941 = vld [vmem:[%s939 + $0x8] sm:$0xff]
          %v942 = vld [vmem:[%s939 + $0x10] sm:$0xff]
          %v943 = vld [vmem:[%s939 + $0x18] sm:$0xff]
          %v944 = vld [vmem:[%s939 + $0x20] sm:$0xff]
          %v945 = vld [vmem:[%s939 + $0x28] sm:$0xff]
          %v946 = vld [vmem:[%s939 + $0x30] sm:$0xff]
          %v947 = vld [vmem:[%s939 + $0x38] sm:$0xff]
          %v948 = vld [vmem:[%s939 + $0x40] sm:$0xff]
          %v949 = vld [vmem:[%s939 + $0x48] sm:$0xff]
          %v950 = vld [vmem:[%s939 + $0x50] sm:$0xff]
          %v951 = vld [vmem:[%s939 + $0x58] sm:$0xff]
          %v952 = vld [vmem:[%s939 + $0x60] sm:$0xff]
          %v953 = vld [vmem:[%s939 + $0x68] sm:$0xff]
          %v954 = vld [vmem:[%s939 + $0x70] sm:$0xff]
          %v955 = vld [vmem:[%s939 + $0x78] sm:$0xff]
          %s956 = sld [smem:[#allocation3]]
          %v957 = vstv %s956
          %v958 = vmul.f32 %v957, %v906
          %v959 = vmul.f32 %v957, %v907
          %v960 = vmul.f32 %v957, %v908
          %v961 = vmul.f32 %v957, %v909
          %v962 = vmul.f32 %v957, %v910
          %v963 = vmul.f32 %v957, %v911
          %v964 = vmul.f32 %v957, %v912
          %v965 = vmul.f32 %v957, %v913
          %v966 = vmul.f32 %v957, %v914
          %v967 = vmul.f32 %v957, %v915
          %v968 = vmul.f32 %v957, %v916
          %v969 = vmul.f32 %v957, %v917
          %v970 = vmul.f32 %v957, %v918
          %v971 = vmul.f32 %v957, %v919
          %v972 = vmul.f32 %v957, %v920
          %v973 = vmul.f32 %v957, %v921
          %s974 = sld [smem:[#allocation3 + $0x1]]
          %v975 = vstv %s974
          %v976 = vmul.f32 %v975, %v923
          %v977 = vmul.f32 %v975, %v924
          %v978 = vmul.f32 %v975, %v925
          %v979 = vmul.f32 %v975, %v926
          %v980 = vmul.f32 %v975, %v927
          %v981 = vmul.f32 %v975, %v928
          %v982 = vmul.f32 %v975, %v929
          %v983 = vmul.f32 %v975, %v930
          %v984 = vmul.f32 %v975, %v931
          %v985 = vmul.f32 %v975, %v932
          %v986 = vmul.f32 %v975, %v933
          %v987 = vmul.f32 %v975, %v934
          %v988 = vmul.f32 %v975, %v935
          %v989 = vmul.f32 %v975, %v936
          %v990 = vmul.f32 %v975, %v937
          %v991 = vmul.f32 %v975, %v938
          %v992 = vadd.f32 %v958, %v976
          %v993 = vadd.f32 %v959, %v977
          %v994 = vadd.f32 %v960, %v978
          %v995 = vadd.f32 %v961, %v979
          %v996 = vadd.f32 %v962, %v980
          %v997 = vadd.f32 %v963, %v981
          %v998 = vadd.f32 %v964, %v982
          %v999 = vadd.f32 %v965, %v983
          %v1000 = vadd.f32 %v966, %v984
          %v1001 = vadd.f32 %v967, %v985
          %v1002 = vadd.f32 %v968, %v986
          %v1003 = vadd.f32 %v969, %v987
          %v1004 = vadd.f32 %v970, %v988
          %v1005 = vadd.f32 %v971, %v989
          %v1006 = vadd.f32 %v972, %v990
          %v1007 = vadd.f32 %v973, %v991
          %s1008 = sld [smem:[#allocation3 + $0x2]]
          %v1009 = vstv %s1008
          %v1010 = vmul.f32 %v1009, %v940
          %v1011 = vmul.f32 %v1009, %v941
          %v1012 = vmul.f32 %v1009, %v942
          %v1013 = vmul.f32 %v1009, %v943
          %v1014 = vmul.f32 %v1009, %v944
          %v1015 = vmul.f32 %v1009, %v945
          %v1016 = vmul.f32 %v1009, %v946
          %v1017 = vmul.f32 %v1009, %v947
          %v1018 = vmul.f32 %v1009, %v948
          %v1019 = vmul.f32 %v1009, %v949
          %v1020 = vmul.f32 %v1009, %v950
          %v1021 = vmul.f32 %v1009, %v951
          %v1022 = vmul.f32 %v1009, %v952
          %v1023 = vmul.f32 %v1009, %v953
          %v1024 = vmul.f32 %v1009, %v954
          %v1025 = vmul.f32 %v1009, %v955
          %v1026 = vadd.f32 %v992, %v1010
          %v1027 = vadd.f32 %v993, %v1011
          %v1028 = vadd.f32 %v994, %v1012
          %v1029 = vadd.f32 %v995, %v1013
          %v1030 = vadd.f32 %v996, %v1014
          %v1031 = vadd.f32 %v997, %v1015
          %v1032 = vadd.f32 %v998, %v1016
          %v1033 = vadd.f32 %v999, %v1017
          %v1034 = vadd.f32 %v1000, %v1018
          %v1035 = vadd.f32 %v1001, %v1019
          %v1036 = vadd.f32 %v1002, %v1020
          %v1037 = vadd.f32 %v1003, %v1021
          %v1038 = vadd.f32 %v1004, %v1022
          %v1039 = vadd.f32 %v1005, %v1023
          %v1040 = vadd.f32 %v1006, %v1024
          %v1041 = vadd.f32 %v1007, %v1025
          %s1042 = sld [smem:[#allocation3 + $0x3]]
          %v1043 = vstv %s1042
          %v1044 = vadd.f32 %v1026, %v1043
          %v1045 = vadd.f32 %v1027, %v1043
          %v1046 = vadd.f32 %v1028, %v1043
          %v1047 = vadd.f32 %v1029, %v1043
          %v1048 = vadd.f32 %v1030, %v1043
          %v1049 = vadd.f32 %v1031, %v1043
          %v1050 = vadd.f32 %v1032, %v1043
          %v1051 = vadd.f32 %v1033, %v1043
          %v1052 = vadd.f32 %v1034, %v1043
          %v1053 = vadd.f32 %v1035, %v1043
          %v1054 = vadd.f32 %v1036, %v1043
          %v1055 = vadd.f32 %v1037, %v1043
          %v1056 = vadd.f32 %v1038, %v1043
          %v1057 = vadd.f32 %v1039, %v1043
          %v1058 = vadd.f32 %v1040, %v1043
          %v1059 = vadd.f32 %v1041, %v1043
          %v1060 = vpack.c.bf16 %v1045, %v1044
          %v1061 = vpack.c.bf16 %v1047, %v1046
          %v1062 = vpack.c.bf16 %v1049, %v1048
          %v1063 = vpack.c.bf16 %v1051, %v1050
          %v1064 = vpack.c.bf16 %v1053, %v1052
          %v1065 = vpack.c.bf16 %v1055, %v1054
          %v1066 = vpack.c.bf16 %v1057, %v1056
          %v1067 = vpack.c.bf16 %v1059, %v1058
          %v1076 = vunpack.c.l.b16 %v1060
          %v1077 = vunpack.c.h.b16 %v1060
          %v1078 = vunpack.c.l.b16 %v1061
          %v1079 = vunpack.c.h.b16 %v1061
          %v1080 = vunpack.c.l.b16 %v1062
          %v1081 = vunpack.c.h.b16 %v1062
          %v1082 = vunpack.c.l.b16 %v1063
          %v1083 = vunpack.c.h.b16 %v1063
          %v1084 = vunpack.c.l.b16 %v1064
          %v1085 = vunpack.c.h.b16 %v1064
          %v1086 = vunpack.c.l.b16 %v1065
          %v1087 = vunpack.c.h.b16 %v1065
          %v1088 = vunpack.c.l.b16 %v1066
          %v1089 = vunpack.c.h.b16 %v1066
          %v1090 = vunpack.c.l.b16 %v1067
          %v1091 = vunpack.c.h.b16 %v1067
          %v1092 = vpack.c.b16 %v1076, %v1076
          %v1093 = vpack.c.b16 %v1077, %v1077
          %v1094 = vpack.c.b16 %v1078, %v1078
          %v1095 = vpack.c.b16 %v1079, %v1079
          %v1096 = vpack.c.b16 %v1080, %v1080
          %v1097 = vpack.c.b16 %v1081, %v1081
          %v1098 = vpack.c.b16 %v1082, %v1082
          %v1099 = vpack.c.b16 %v1083, %v1083
          %v1100 = vpack.c.b16 %v1084, %v1084
          %v1101 = vpack.c.b16 %v1085, %v1085
          %v1102 = vpack.c.b16 %v1086, %v1086
          %v1103 = vpack.c.b16 %v1087, %v1087
          %v1104 = vpack.c.b16 %v1088, %v1088
          %v1105 = vpack.c.b16 %v1089, %v1089
          %v1106 = vpack.c.b16 %v1090, %v1090
          %v1107 = vpack.c.b16 %v1091, %v1091
          %1124 = vst [vmem:[%s231] sm:$0xf] %v1092
          %1125 = vst [vmem:[%s231 + $0x30] sm:$0xf] %v1093
          %1126 = vst [vmem:[%s231 + $0x60] sm:$0xf] %v1094
          %1127 = vst [vmem:[%s231 + $0x90] sm:$0xf] %v1095
          %1128 = vst [vmem:[%s231 + $0xc0] sm:$0xf] %v1096
          %1129 = vst [vmem:[%s231 + $0xf0] sm:$0xf] %v1097
          %1130 = vst [vmem:[%s231 + $0x120] sm:$0xf] %v1098
          %1131 = vst [vmem:[%s231 + $0x150] sm:$0xf] %v1099
          %1132 = vst [vmem:[%s231 + $0x180] sm:$0xf] %v1100
          %1133 = vst [vmem:[%s231 + $0x1b0] sm:$0xf] %v1101
          %1134 = vst [vmem:[%s231 + $0x1e0] sm:$0xf] %v1102
          %1135 = vst [vmem:[%s231 + $0x210] sm:$0xf] %v1103
          %1136 = vst [vmem:[%s231 + $0x240] sm:$0xf] %v1104
          %1137 = vst [vmem:[%s231 + $0x270] sm:$0xf] %v1105
          %1138 = vst [vmem:[%s231 + $0x2a0] sm:$0xf] %v1106
          %1139 = vst [vmem:[%s231 + $0x2d0] sm:$0xf] %v1107
          %s1140 = sld [smem:[#allocation3 + $0x80]]
          %v1141 = vstv %s1140
          %v1142 = vmul.f32 %v1141, %v906
          %v1143 = vmul.f32 %v1141, %v907
          %v1144 = vmul.f32 %v1141, %v908
          %v1145 = vmul.f32 %v1141, %v909
          %v1146 = vmul.f32 %v1141, %v910
          %v1147 = vmul.f32 %v1141, %v911
          %v1148 = vmul.f32 %v1141, %v912
          %v1149 = vmul.f32 %v1141, %v913
          %v1150 = vmul.f32 %v1141, %v914
          %v1151 = vmul.f32 %v1141, %v915
          %v1152 = vmul.f32 %v1141, %v916
          %v1153 = vmul.f32 %v1141, %v917
          %v1154 = vmul.f32 %v1141, %v918
          %v1155 = vmul.f32 %v1141, %v919
          %v1156 = vmul.f32 %v1141, %v920
          %v1157 = vmul.f32 %v1141, %v921
          %s1158 = sld [smem:[#allocation3 + $0x81]]
          %v1159 = vstv %s1158
          %v1160 = vmul.f32 %v1159, %v923
          %v1161 = vmul.f32 %v1159, %v924
          %v1162 = vmul.f32 %v1159, %v925
          %v1163 = vmul.f32 %v1159, %v926
          %v1164 = vmul.f32 %v1159, %v927
          %v1165 = vmul.f32 %v1159, %v928
          %v1166 = vmul.f32 %v1159, %v929
          %v1167 = vmul.f32 %v1159, %v930
          %v1168 = vmul.f32 %v1159, %v931
          %v1169 = vmul.f32 %v1159, %v932
          %v1170 = vmul.f32 %v1159, %v933
          %v1171 = vmul.f32 %v1159, %v934
          %v1172 = vmul.f32 %v1159, %v935
          %v1173 = vmul.f32 %v1159, %v936
          %v1174 = vmul.f32 %v1159, %v937
          %v1175 = vmul.f32 %v1159, %v938
          %v1176 = vadd.f32 %v1142, %v1160
          %v1177 = vadd.f32 %v1143, %v1161
          %v1178 = vadd.f32 %v1144, %v1162
          %v1179 = vadd.f32 %v1145, %v1163
          %v1180 = vadd.f32 %v1146, %v1164
          %v1181 = vadd.f32 %v1147, %v1165
          %v1182 = vadd.f32 %v1148, %v1166
          %v1183 = vadd.f32 %v1149, %v1167
          %v1184 = vadd.f32 %v1150, %v1168
          %v1185 = vadd.f32 %v1151, %v1169
          %v1186 = vadd.f32 %v1152, %v1170
          %v1187 = vadd.f32 %v1153, %v1171
          %v1188 = vadd.f32 %v1154, %v1172
          %v1189 = vadd.f32 %v1155, %v1173
          %v1190 = vadd.f32 %v1156, %v1174
          %v1191 = vadd.f32 %v1157, %v1175
          %s1192 = sld [smem:[#allocation3 + $0x82]]
          %v1193 = vstv %s1192
          %v1194 = vmul.f32 %v1193, %v940
          %v1195 = vmul.f32 %v1193, %v941
          %v1196 = vmul.f32 %v1193, %v942
          %v1197 = vmul.f32 %v1193, %v943
          %v1198 = vmul.f32 %v1193, %v944
          %v1199 = vmul.f32 %v1193, %v945
          %v1200 = vmul.f32 %v1193, %v946
          %v1201 = vmul.f32 %v1193, %v947
          %v1202 = vmul.f32 %v1193, %v948
          %v1203 = vmul.f32 %v1193, %v949
          %v1204 = vmul.f32 %v1193, %v950
          %v1205 = vmul.f32 %v1193, %v951
          %v1206 = vmul.f32 %v1193, %v952
          %v1207 = vmul.f32 %v1193, %v953
          %v1208 = vmul.f32 %v1193, %v954
          %v1209 = vmul.f32 %v1193, %v955
          %v1210 = vadd.f32 %v1176, %v1194
          %v1211 = vadd.f32 %v1177, %v1195
          %v1212 = vadd.f32 %v1178, %v1196
          %v1213 = vadd.f32 %v1179, %v1197
          %v1214 = vadd.f32 %v1180, %v1198
          %v1215 = vadd.f32 %v1181, %v1199
          %v1216 = vadd.f32 %v1182, %v1200
          %v1217 = vadd.f32 %v1183, %v1201
          %v1218 = vadd.f32 %v1184, %v1202
          %v1219 = vadd.f32 %v1185, %v1203
          %v1220 = vadd.f32 %v1186, %v1204
          %v1221 = vadd.f32 %v1187, %v1205
          %v1222 = vadd.f32 %v1188, %v1206
          %v1223 = vadd.f32 %v1189, %v1207
          %v1224 = vadd.f32 %v1190, %v1208
          %v1225 = vadd.f32 %v1191, %v1209
          %s1226 = sld [smem:[#allocation3 + $0x83]]
          %v1227 = vstv %s1226
          %v1228 = vadd.f32 %v1210, %v1227
          %v1229 = vadd.f32 %v1211, %v1227
          %v1230 = vadd.f32 %v1212, %v1227
          %v1231 = vadd.f32 %v1213, %v1227
          %v1232 = vadd.f32 %v1214, %v1227
          %v1233 = vadd.f32 %v1215, %v1227
          %v1234 = vadd.f32 %v1216, %v1227
          %v1235 = vadd.f32 %v1217, %v1227
          %v1236 = vadd.f32 %v1218, %v1227
          %v1237 = vadd.f32 %v1219, %v1227
          %v1238 = vadd.f32 %v1220, %v1227
          %v1239 = vadd.f32 %v1221, %v1227
          %v1240 = vadd.f32 %v1222, %v1227
          %v1241 = vadd.f32 %v1223, %v1227
          %v1242 = vadd.f32 %v1224, %v1227
          %v1243 = vadd.f32 %v1225, %v1227
          %v1244 = vpack.c.bf16 %v1229, %v1228
          %v1245 = vpack.c.bf16 %v1231, %v1230
          %v1246 = vpack.c.bf16 %v1233, %v1232
          %v1247 = vpack.c.bf16 %v1235, %v1234
          %v1248 = vpack.c.bf16 %v1237, %v1236
          %v1249 = vpack.c.bf16 %v1239, %v1238
          %v1250 = vpack.c.bf16 %v1241, %v1240
          %v1251 = vpack.c.bf16 %v1243, %v1242
          %v1260 = vunpack.c.l.b16 %v1244
          %v1261 = vunpack.c.h.b16 %v1244
          %v1262 = vunpack.c.l.b16 %v1245
          %v1263 = vunpack.c.h.b16 %v1245
          %v1264 = vunpack.c.l.b16 %v1246
          %v1265 = vunpack.c.h.b16 %v1246
          %v1266 = vunpack.c.l.b16 %v1247
          %v1267 = vunpack.c.h.b16 %v1247
          %v1268 = vunpack.c.l.b16 %v1248
          %v1269 = vunpack.c.h.b16 %v1248
          %v1270 = vunpack.c.l.b16 %v1249
          %v1271 = vunpack.c.h.b16 %v1249
          %v1272 = vunpack.c.l.b16 %v1250
          %v1273 = vunpack.c.h.b16 %v1250
          %v1274 = vunpack.c.l.b16 %v1251
          %v1275 = vunpack.c.h.b16 %v1251
          %v1276 = vpack.c.b16 %v1260, %v1260
          %v1277 = vpack.c.b16 %v1261, %v1261
          %v1278 = vpack.c.b16 %v1262, %v1262
          %v1279 = vpack.c.b16 %v1263, %v1263
          %v1280 = vpack.c.b16 %v1264, %v1264
          %v1281 = vpack.c.b16 %v1265, %v1265
          %v1282 = vpack.c.b16 %v1266, %v1266
          %v1283 = vpack.c.b16 %v1267, %v1267
          %v1284 = vpack.c.b16 %v1268, %v1268
          %v1285 = vpack.c.b16 %v1269, %v1269
          %v1286 = vpack.c.b16 %v1270, %v1270
          %v1287 = vpack.c.b16 %v1271, %v1271
          %v1288 = vpack.c.b16 %v1272, %v1272
          %v1289 = vpack.c.b16 %v1273, %v1273
          %v1290 = vpack.c.b16 %v1274, %v1274
          %v1291 = vpack.c.b16 %v1275, %v1275
          %1308 = vst [vmem:[%s231 + $0x4] sm:$0xf] %v1276
          %1309 = vst [vmem:[%s231 + $0x34] sm:$0xf] %v1277
          %1310 = vst [vmem:[%s231 + $0x64] sm:$0xf] %v1278
          %1311 = vst [vmem:[%s231 + $0x94] sm:$0xf] %v1279
          %1312 = vst [vmem:[%s231 + $0xc4] sm:$0xf] %v1280
          %1313 = vst [vmem:[%s231 + $0xf4] sm:$0xf] %v1281
          %1314 = vst [vmem:[%s231 + $0x124] sm:$0xf] %v1282
          %1315 = vst [vmem:[%s231 + $0x154] sm:$0xf] %v1283
          %1316 = vst [vmem:[%s231 + $0x184] sm:$0xf] %v1284
          %1317 = vst [vmem:[%s231 + $0x1b4] sm:$0xf] %v1285
          %1318 = vst [vmem:[%s231 + $0x1e4] sm:$0xf] %v1286
          %1319 = vst [vmem:[%s231 + $0x214] sm:$0xf] %v1287
          %1320 = vst [vmem:[%s231 + $0x244] sm:$0xf] %v1288
          %1321 = vst [vmem:[%s231 + $0x274] sm:$0xf] %v1289
          %1322 = vst [vmem:[%s231 + $0x2a4] sm:$0xf] %v1290
          %1323 = vst [vmem:[%s231 + $0x2d4] sm:$0xf] %v1291
          %s1324 = sld [smem:[#allocation3 + $0x100]]
          %v1325 = vstv %s1324
          %v1326 = vmul.f32 %v1325, %v906
          %v1327 = vmul.f32 %v1325, %v907
          %v1328 = vmul.f32 %v1325, %v908
          %v1329 = vmul.f32 %v1325, %v909
          %v1330 = vmul.f32 %v1325, %v910
          %v1331 = vmul.f32 %v1325, %v911
          %v1332 = vmul.f32 %v1325, %v912
          %v1333 = vmul.f32 %v1325, %v913
          %v1334 = vmul.f32 %v1325, %v914
          %v1335 = vmul.f32 %v1325, %v915
          %v1336 = vmul.f32 %v1325, %v916
          %v1337 = vmul.f32 %v1325, %v917
          %v1338 = vmul.f32 %v1325, %v918
          %v1339 = vmul.f32 %v1325, %v919
          %v1340 = vmul.f32 %v1325, %v920
          %v1341 = vmul.f32 %v1325, %v921
          %s1342 = sld [smem:[#allocation3 + $0x101]]
          %v1343 = vstv %s1342
          %v1344 = vmul.f32 %v1343, %v923
          %v1345 = vmul.f32 %v1343, %v924
          %v1346 = vmul.f32 %v1343, %v925
          %v1347 = vmul.f32 %v1343, %v926
          %v1348 = vmul.f32 %v1343, %v927
          %v1349 = vmul.f32 %v1343, %v928
          %v1350 = vmul.f32 %v1343, %v929
          %v1351 = vmul.f32 %v1343, %v930
          %v1352 = vmul.f32 %v1343, %v931
          %v1353 = vmul.f32 %v1343, %v932
          %v1354 = vmul.f32 %v1343, %v933
          %v1355 = vmul.f32 %v1343, %v934
          %v1356 = vmul.f32 %v1343, %v935
          %v1357 = vmul.f32 %v1343, %v936
          %v1358 = vmul.f32 %v1343, %v937
          %v1359 = vmul.f32 %v1343, %v938
          %v1360 = vadd.f32 %v1326, %v1344
          %v1361 = vadd.f32 %v1327, %v1345
          %v1362 = vadd.f32 %v1328, %v1346
          %v1363 = vadd.f32 %v1329, %v1347
          %v1364 = vadd.f32 %v1330, %v1348
          %v1365 = vadd.f32 %v1331, %v1349
          %v1366 = vadd.f32 %v1332, %v1350
          %v1367 = vadd.f32 %v1333, %v1351
          %v1368 = vadd.f32 %v1334, %v1352
          %v1369 = vadd.f32 %v1335, %v1353
          %v1370 = vadd.f32 %v1336, %v1354
          %v1371 = vadd.f32 %v1337, %v1355
          %v1372 = vadd.f32 %v1338, %v1356
          %v1373 = vadd.f32 %v1339, %v1357
          %v1374 = vadd.f32 %v1340, %v1358
          %v1375 = vadd.f32 %v1341, %v1359
          %s1376 = sld [smem:[#allocation3 + $0x102]]
          %v1377 = vstv %s1376
          %v1378 = vmul.f32 %v1377, %v940
          %v1379 = vmul.f32 %v1377, %v941
          %v1380 = vmul.f32 %v1377, %v942
          %v1381 = vmul.f32 %v1377, %v943
          %v1382 = vmul.f32 %v1377, %v944
          %v1383 = vmul.f32 %v1377, %v945
          %v1384 = vmul.f32 %v1377, %v946
          %v1385 = vmul.f32 %v1377, %v947
          %v1386 = vmul.f32 %v1377, %v948
          %v1387 = vmul.f32 %v1377, %v949
          %v1388 = vmul.f32 %v1377, %v950
          %v1389 = vmul.f32 %v1377, %v951
          %v1390 = vmul.f32 %v1377, %v952
          %v1391 = vmul.f32 %v1377, %v953
          %v1392 = vmul.f32 %v1377, %v954
          %v1393 = vmul.f32 %v1377, %v955
          %v1394 = vadd.f32 %v1360, %v1378
          %v1395 = vadd.f32 %v1361, %v1379
          %v1396 = vadd.f32 %v1362, %v1380
          %v1397 = vadd.f32 %v1363, %v1381
          %v1398 = vadd.f32 %v1364, %v1382
          %v1399 = vadd.f32 %v1365, %v1383
          %v1400 = vadd.f32 %v1366, %v1384
          %v1401 = vadd.f32 %v1367, %v1385
          %v1402 = vadd.f32 %v1368, %v1386
          %v1403 = vadd.f32 %v1369, %v1387
          %v1404 = vadd.f32 %v1370, %v1388
          %v1405 = vadd.f32 %v1371, %v1389
          %v1406 = vadd.f32 %v1372, %v1390
          %v1407 = vadd.f32 %v1373, %v1391
          %v1408 = vadd.f32 %v1374, %v1392
          %v1409 = vadd.f32 %v1375, %v1393
          %s1410 = sld [smem:[#allocation3 + $0x103]]
          %v1411 = vstv %s1410
          %v1412 = vadd.f32 %v1394, %v1411
          %v1413 = vadd.f32 %v1395, %v1411
          %v1414 = vadd.f32 %v1396, %v1411
          %v1415 = vadd.f32 %v1397, %v1411
          %v1416 = vadd.f32 %v1398, %v1411
          %v1417 = vadd.f32 %v1399, %v1411
          %v1418 = vadd.f32 %v1400, %v1411
          %v1419 = vadd.f32 %v1401, %v1411
          %v1420 = vadd.f32 %v1402, %v1411
          %v1421 = vadd.f32 %v1403, %v1411
          %v1422 = vadd.f32 %v1404, %v1411
          %v1423 = vadd.f32 %v1405, %v1411
          %v1424 = vadd.f32 %v1406, %v1411
          %v1425 = vadd.f32 %v1407, %v1411
          %v1426 = vadd.f32 %v1408, %v1411
          %v1427 = vadd.f32 %v1409, %v1411
          %v1428 = vpack.c.bf16 %v1413, %v1412
          %v1429 = vpack.c.bf16 %v1415, %v1414
          %v1430 = vpack.c.bf16 %v1417, %v1416
          %v1431 = vpack.c.bf16 %v1419, %v1418
          %v1432 = vpack.c.bf16 %v1421, %v1420
          %v1433 = vpack.c.bf16 %v1423, %v1422
          %v1434 = vpack.c.bf16 %v1425, %v1424
          %v1435 = vpack.c.bf16 %v1427, %v1426
          %v1444 = vunpack.c.l.b16 %v1428
          %v1445 = vunpack.c.h.b16 %v1428
          %v1446 = vunpack.c.l.b16 %v1429
          %v1447 = vunpack.c.h.b16 %v1429
          %v1448 = vunpack.c.l.b16 %v1430
          %v1449 = vunpack.c.h.b16 %v1430
          %v1450 = vunpack.c.l.b16 %v1431
          %v1451 = vunpack.c.h.b16 %v1431
          %v1452 = vunpack.c.l.b16 %v1432
          %v1453 = vunpack.c.h.b16 %v1432
          %v1454 = vunpack.c.l.b16 %v1433
          %v1455 = vunpack.c.h.b16 %v1433
          %v1456 = vunpack.c.l.b16 %v1434
          %v1457 = vunpack.c.h.b16 %v1434
          %v1458 = vunpack.c.l.b16 %v1435
          %v1459 = vunpack.c.h.b16 %v1435
          %v1460 = vpack.c.b16 %v1444, %v1444
          %v1461 = vpack.c.b16 %v1445, %v1445
          %v1462 = vpack.c.b16 %v1446, %v1446
          %v1463 = vpack.c.b16 %v1447, %v1447
          %v1464 = vpack.c.b16 %v1448, %v1448
          %v1465 = vpack.c.b16 %v1449, %v1449
          %v1466 = vpack.c.b16 %v1450, %v1450
          %v1467 = vpack.c.b16 %v1451, %v1451
          %v1468 = vpack.c.b16 %v1452, %v1452
          %v1469 = vpack.c.b16 %v1453, %v1453
          %v1470 = vpack.c.b16 %v1454, %v1454
          %v1471 = vpack.c.b16 %v1455, %v1455
          %v1472 = vpack.c.b16 %v1456, %v1456
          %v1473 = vpack.c.b16 %v1457, %v1457
          %v1474 = vpack.c.b16 %v1458, %v1458
          %v1475 = vpack.c.b16 %v1459, %v1459
          %1492 = vst [vmem:[%s231 + $0x8] sm:$0xf] %v1460
          %1493 = vst [vmem:[%s231 + $0x38] sm:$0xf] %v1461
          %1494 = vst [vmem:[%s231 + $0x68] sm:$0xf] %v1462
          %1495 = vst [vmem:[%s231 + $0x98] sm:$0xf] %v1463
          %1496 = vst [vmem:[%s231 + $0xc8] sm:$0xf] %v1464
          %1497 = vst [vmem:[%s231 + $0xf8] sm:$0xf] %v1465
          %1498 = vst [vmem:[%s231 + $0x128] sm:$0xf] %v1466
          %1499 = vst [vmem:[%s231 + $0x158] sm:$0xf] %v1467
          %1500 = vst [vmem:[%s231 + $0x188] sm:$0xf] %v1468
          %1501 = vst [vmem:[%s231 + $0x1b8] sm:$0xf] %v1469
          %1502 = vst [vmem:[%s231 + $0x1e8] sm:$0xf] %v1470
          %1503 = vst [vmem:[%s231 + $0x218] sm:$0xf] %v1471
          %1504 = vst [vmem:[%s231 + $0x248] sm:$0xf] %v1472
          %1505 = vst [vmem:[%s231 + $0x278] sm:$0xf] %v1473
          %1506 = vst [vmem:[%s231 + $0x2a8] sm:$0xf] %v1474
          %1507 = vst [vmem:[%s231 + $0x2d8] sm:$0xf] %v1475
          %s1508 = sld [smem:[#allocation3 + $0x180]]
          %v1509 = vstv %s1508
          %v1510 = vmul.f32 %v1509, %v906
          %v1511 = vmul.f32 %v1509, %v907
          %v1512 = vmul.f32 %v1509, %v908
          %v1513 = vmul.f32 %v1509, %v909
          %v1514 = vmul.f32 %v1509, %v910
          %v1515 = vmul.f32 %v1509, %v911
          %v1516 = vmul.f32 %v1509, %v912
          %v1517 = vmul.f32 %v1509, %v913
          %v1518 = vmul.f32 %v1509, %v914
          %v1519 = vmul.f32 %v1509, %v915
          %v1520 = vmul.f32 %v1509, %v916
          %v1521 = vmul.f32 %v1509, %v917
          %v1522 = vmul.f32 %v1509, %v918
          %v1523 = vmul.f32 %v1509, %v919
          %v1524 = vmul.f32 %v1509, %v920
          %v1525 = vmul.f32 %v1509, %v921
          %s1526 = sld [smem:[#allocation3 + $0x181]]
          %v1527 = vstv %s1526
          %v1528 = vmul.f32 %v1527, %v923
          %v1529 = vmul.f32 %v1527, %v924
          %v1530 = vmul.f32 %v1527, %v925
          %v1531 = vmul.f32 %v1527, %v926
          %v1532 = vmul.f32 %v1527, %v927
          %v1533 = vmul.f32 %v1527, %v928
          %v1534 = vmul.f32 %v1527, %v929
          %v1535 = vmul.f32 %v1527, %v930
          %v1536 = vmul.f32 %v1527, %v931
          %v1537 = vmul.f32 %v1527, %v932
          %v1538 = vmul.f32 %v1527, %v933
          %v1539 = vmul.f32 %v1527, %v934
          %v1540 = vmul.f32 %v1527, %v935
          %v1541 = vmul.f32 %v1527, %v936
          %v1542 = vmul.f32 %v1527, %v937
          %v1543 = vmul.f32 %v1527, %v938
          %v1544 = vadd.f32 %v1510, %v1528
          %v1545 = vadd.f32 %v1511, %v1529
          %v1546 = vadd.f32 %v1512, %v1530
          %v1547 = vadd.f32 %v1513, %v1531
          %v1548 = vadd.f32 %v1514, %v1532
          %v1549 = vadd.f32 %v1515, %v1533
          %v1550 = vadd.f32 %v1516, %v1534
          %v1551 = vadd.f32 %v1517, %v1535
          %v1552 = vadd.f32 %v1518, %v1536
          %v1553 = vadd.f32 %v1519, %v1537
          %v1554 = vadd.f32 %v1520, %v1538
          %v1555 = vadd.f32 %v1521, %v1539
          %v1556 = vadd.f32 %v1522, %v1540
          %v1557 = vadd.f32 %v1523, %v1541
          %v1558 = vadd.f32 %v1524, %v1542
          %v1559 = vadd.f32 %v1525, %v1543
          %s1560 = sld [smem:[#allocation3 + $0x182]]
          %v1561 = vstv %s1560
          %v1562 = vmul.f32 %v1561, %v940
          %v1563 = vmul.f32 %v1561, %v941
          %v1564 = vmul.f32 %v1561, %v942
          %v1565 = vmul.f32 %v1561, %v943
          %v1566 = vmul.f32 %v1561, %v944
          %v1567 = vmul.f32 %v1561, %v945
          %v1568 = vmul.f32 %v1561, %v946
          %v1569 = vmul.f32 %v1561, %v947
          %v1570 = vmul.f32 %v1561, %v948
          %v1571 = vmul.f32 %v1561, %v949
          %v1572 = vmul.f32 %v1561, %v950
          %v1573 = vmul.f32 %v1561, %v951
          %v1574 = vmul.f32 %v1561, %v952
          %v1575 = vmul.f32 %v1561, %v953
          %v1576 = vmul.f32 %v1561, %v954
          %v1577 = vmul.f32 %v1561, %v955
          %v1578 = vadd.f32 %v1544, %v1562
          %v1579 = vadd.f32 %v1545, %v1563
          %v1580 = vadd.f32 %v1546, %v1564
          %v1581 = vadd.f32 %v1547, %v1565
          %v1582 = vadd.f32 %v1548, %v1566
          %v1583 = vadd.f32 %v1549, %v1567
          %v1584 = vadd.f32 %v1550, %v1568
          %v1585 = vadd.f32 %v1551, %v1569
          %v1586 = vadd.f32 %v1552, %v1570
          %v1587 = vadd.f32 %v1553, %v1571
          %v1588 = vadd.f32 %v1554, %v1572
          %v1589 = vadd.f32 %v1555, %v1573
          %v1590 = vadd.f32 %v1556, %v1574
          %v1591 = vadd.f32 %v1557, %v1575
          %v1592 = vadd.f32 %v1558, %v1576
          %v1593 = vadd.f32 %v1559, %v1577
          %s1594 = sld [smem:[#allocation3 + $0x183]]
          %v1595 = vstv %s1594
          %v1596 = vadd.f32 %v1578, %v1595
          %v1597 = vadd.f32 %v1579, %v1595
          %v1598 = vadd.f32 %v1580, %v1595
          %v1599 = vadd.f32 %v1581, %v1595
          %v1600 = vadd.f32 %v1582, %v1595
          %v1601 = vadd.f32 %v1583, %v1595
          %v1602 = vadd.f32 %v1584, %v1595
          %v1603 = vadd.f32 %v1585, %v1595
          %v1604 = vadd.f32 %v1586, %v1595
          %v1605 = vadd.f32 %v1587, %v1595
          %v1606 = vadd.f32 %v1588, %v1595
          %v1607 = vadd.f32 %v1589, %v1595
          %v1608 = vadd.f32 %v1590, %v1595
          %v1609 = vadd.f32 %v1591, %v1595
          %v1610 = vadd.f32 %v1592, %v1595
          %v1611 = vadd.f32 %v1593, %v1595
          %v1612 = vpack.c.bf16 %v1597, %v1596
          %v1613 = vpack.c.bf16 %v1599, %v1598
          %v1614 = vpack.c.bf16 %v1601, %v1600
          %v1615 = vpack.c.bf16 %v1603, %v1602
          %v1616 = vpack.c.bf16 %v1605, %v1604
          %v1617 = vpack.c.bf16 %v1607, %v1606
          %v1618 = vpack.c.bf16 %v1609, %v1608
          %v1619 = vpack.c.bf16 %v1611, %v1610
          %v1628 = vunpack.c.l.b16 %v1612
          %v1629 = vunpack.c.h.b16 %v1612
          %v1630 = vunpack.c.l.b16 %v1613
          %v1631 = vunpack.c.h.b16 %v1613
          %v1632 = vunpack.c.l.b16 %v1614
          %v1633 = vunpack.c.h.b16 %v1614
          %v1634 = vunpack.c.l.b16 %v1615
          %v1635 = vunpack.c.h.b16 %v1615
          %v1636 = vunpack.c.l.b16 %v1616
          %v1637 = vunpack.c.h.b16 %v1616
          %v1638 = vunpack.c.l.b16 %v1617
          %v1639 = vunpack.c.h.b16 %v1617
          %v1640 = vunpack.c.l.b16 %v1618
          %v1641 = vunpack.c.h.b16 %v1618
          %v1642 = vunpack.c.l.b16 %v1619
          %v1643 = vunpack.c.h.b16 %v1619
          %v1644 = vpack.c.b16 %v1628, %v1628
          %v1645 = vpack.c.b16 %v1629, %v1629
          %v1646 = vpack.c.b16 %v1630, %v1630
          %v1647 = vpack.c.b16 %v1631, %v1631
          %v1648 = vpack.c.b16 %v1632, %v1632
          %v1649 = vpack.c.b16 %v1633, %v1633
          %v1650 = vpack.c.b16 %v1634, %v1634
          %v1651 = vpack.c.b16 %v1635, %v1635
          %v1652 = vpack.c.b16 %v1636, %v1636
          %v1653 = vpack.c.b16 %v1637, %v1637
          %v1654 = vpack.c.b16 %v1638, %v1638
          %v1655 = vpack.c.b16 %v1639, %v1639
          %v1656 = vpack.c.b16 %v1640, %v1640
          %v1657 = vpack.c.b16 %v1641, %v1641
          %v1658 = vpack.c.b16 %v1642, %v1642
          %v1659 = vpack.c.b16 %v1643, %v1643
          %1676 = vst [vmem:[%s231 + $0xc] sm:$0xf] %v1644
          %1677 = vst [vmem:[%s231 + $0x3c] sm:$0xf] %v1645
          %1678 = vst [vmem:[%s231 + $0x6c] sm:$0xf] %v1646
          %1679 = vst [vmem:[%s231 + $0x9c] sm:$0xf] %v1647
          %1680 = vst [vmem:[%s231 + $0xcc] sm:$0xf] %v1648
          %1681 = vst [vmem:[%s231 + $0xfc] sm:$0xf] %v1649
          %1682 = vst [vmem:[%s231 + $0x12c] sm:$0xf] %v1650
          %1683 = vst [vmem:[%s231 + $0x15c] sm:$0xf] %v1651
          %1684 = vst [vmem:[%s231 + $0x18c] sm:$0xf] %v1652
          %1685 = vst [vmem:[%s231 + $0x1bc] sm:$0xf] %v1653
          %1686 = vst [vmem:[%s231 + $0x1ec] sm:$0xf] %v1654
          %1687 = vst [vmem:[%s231 + $0x21c] sm:$0xf] %v1655
          %1688 = vst [vmem:[%s231 + $0x24c] sm:$0xf] %v1656
          %1689 = vst [vmem:[%s231 + $0x27c] sm:$0xf] %v1657
          %1690 = vst [vmem:[%s231 + $0x2ac] sm:$0xf] %v1658
          %1691 = vst [vmem:[%s231 + $0x2dc] sm:$0xf] %v1659
          %s1692 = sld [smem:[#allocation3 + $0x200]]
          %v1693 = vstv %s1692
          %v1694 = vmul.f32 %v1693, %v906
          %v1695 = vmul.f32 %v1693, %v907
          %v1696 = vmul.f32 %v1693, %v908
          %v1697 = vmul.f32 %v1693, %v909
          %v1698 = vmul.f32 %v1693, %v910
          %v1699 = vmul.f32 %v1693, %v911
          %v1700 = vmul.f32 %v1693, %v912
          %v1701 = vmul.f32 %v1693, %v913
          %v1702 = vmul.f32 %v1693, %v914
          %v1703 = vmul.f32 %v1693, %v915
          %v1704 = vmul.f32 %v1693, %v916
          %v1705 = vmul.f32 %v1693, %v917
          %v1706 = vmul.f32 %v1693, %v918
          %v1707 = vmul.f32 %v1693, %v919
          %v1708 = vmul.f32 %v1693, %v920
          %v1709 = vmul.f32 %v1693, %v921
          %s1710 = sld [smem:[#allocation3 + $0x201]]
          %v1711 = vstv %s1710
          %v1712 = vmul.f32 %v1711, %v923
          %v1713 = vmul.f32 %v1711, %v924
          %v1714 = vmul.f32 %v1711, %v925
          %v1715 = vmul.f32 %v1711, %v926
          %v1716 = vmul.f32 %v1711, %v927
          %v1717 = vmul.f32 %v1711, %v928
          %v1718 = vmul.f32 %v1711, %v929
          %v1719 = vmul.f32 %v1711, %v930
          %v1720 = vmul.f32 %v1711, %v931
          %v1721 = vmul.f32 %v1711, %v932
          %v1722 = vmul.f32 %v1711, %v933
          %v1723 = vmul.f32 %v1711, %v934
          %v1724 = vmul.f32 %v1711, %v935
          %v1725 = vmul.f32 %v1711, %v936
          %v1726 = vmul.f32 %v1711, %v937
          %v1727 = vmul.f32 %v1711, %v938
          %v1728 = vadd.f32 %v1694, %v1712
          %v1729 = vadd.f32 %v1695, %v1713
          %v1730 = vadd.f32 %v1696, %v1714
          %v1731 = vadd.f32 %v1697, %v1715
          %v1732 = vadd.f32 %v1698, %v1716
          %v1733 = vadd.f32 %v1699, %v1717
          %v1734 = vadd.f32 %v1700, %v1718
          %v1735 = vadd.f32 %v1701, %v1719
          %v1736 = vadd.f32 %v1702, %v1720
          %v1737 = vadd.f32 %v1703, %v1721
          %v1738 = vadd.f32 %v1704, %v1722
          %v1739 = vadd.f32 %v1705, %v1723
          %v1740 = vadd.f32 %v1706, %v1724
          %v1741 = vadd.f32 %v1707, %v1725
          %v1742 = vadd.f32 %v1708, %v1726
          %v1743 = vadd.f32 %v1709, %v1727
          %s1744 = sld [smem:[#allocation3 + $0x202]]
          %v1745 = vstv %s1744
          %v1746 = vmul.f32 %v1745, %v940
          %v1747 = vmul.f32 %v1745, %v941
          %v1748 = vmul.f32 %v1745, %v942
          %v1749 = vmul.f32 %v1745, %v943
          %v1750 = vmul.f32 %v1745, %v944
          %v1751 = vmul.f32 %v1745, %v945
          %v1752 = vmul.f32 %v1745, %v946
          %v1753 = vmul.f32 %v1745, %v947
          %v1754 = vmul.f32 %v1745, %v948
          %v1755 = vmul.f32 %v1745, %v949
          %v1756 = vmul.f32 %v1745, %v950
          %v1757 = vmul.f32 %v1745, %v951
          %v1758 = vmul.f32 %v1745, %v952
          %v1759 = vmul.f32 %v1745, %v953
          %v1760 = vmul.f32 %v1745, %v954
          %v1761 = vmul.f32 %v1745, %v955
          %v1762 = vadd.f32 %v1728, %v1746
          %v1763 = vadd.f32 %v1729, %v1747
          %v1764 = vadd.f32 %v1730, %v1748
          %v1765 = vadd.f32 %v1731, %v1749
          %v1766 = vadd.f32 %v1732, %v1750
          %v1767 = vadd.f32 %v1733, %v1751
          %v1768 = vadd.f32 %v1734, %v1752
          %v1769 = vadd.f32 %v1735, %v1753
          %v1770 = vadd.f32 %v1736, %v1754
          %v1771 = vadd.f32 %v1737, %v1755
          %v1772 = vadd.f32 %v1738, %v1756
          %v1773 = vadd.f32 %v1739, %v1757
          %v1774 = vadd.f32 %v1740, %v1758
          %v1775 = vadd.f32 %v1741, %v1759
          %v1776 = vadd.f32 %v1742, %v1760
          %v1777 = vadd.f32 %v1743, %v1761
          %s1778 = sld [smem:[#allocation3 + $0x203]]
          %v1779 = vstv %s1778
          %v1780 = vadd.f32 %v1762, %v1779
          %v1781 = vadd.f32 %v1763, %v1779
          %v1782 = vadd.f32 %v1764, %v1779
          %v1783 = vadd.f32 %v1765, %v1779
          %v1784 = vadd.f32 %v1766, %v1779
          %v1785 = vadd.f32 %v1767, %v1779
          %v1786 = vadd.f32 %v1768, %v1779
          %v1787 = vadd.f32 %v1769, %v1779
          %v1788 = vadd.f32 %v1770, %v1779
          %v1789 = vadd.f32 %v1771, %v1779
          %v1790 = vadd.f32 %v1772, %v1779
          %v1791 = vadd.f32 %v1773, %v1779
          %v1792 = vadd.f32 %v1774, %v1779
          %v1793 = vadd.f32 %v1775, %v1779
          %v1794 = vadd.f32 %v1776, %v1779
          %v1795 = vadd.f32 %v1777, %v1779
          %v1796 = vpack.c.bf16 %v1781, %v1780
          %v1797 = vpack.c.bf16 %v1783, %v1782
          %v1798 = vpack.c.bf16 %v1785, %v1784
          %v1799 = vpack.c.bf16 %v1787, %v1786
          %v1800 = vpack.c.bf16 %v1789, %v1788
          %v1801 = vpack.c.bf16 %v1791, %v1790
          %v1802 = vpack.c.bf16 %v1793, %v1792
          %v1803 = vpack.c.bf16 %v1795, %v1794
          %v1812 = vunpack.c.l.b16 %v1796
          %v1813 = vunpack.c.h.b16 %v1796
          %v1814 = vunpack.c.l.b16 %v1797
          %v1815 = vunpack.c.h.b16 %v1797
          %v1816 = vunpack.c.l.b16 %v1798
          %v1817 = vunpack.c.h.b16 %v1798
          %v1818 = vunpack.c.l.b16 %v1799
          %v1819 = vunpack.c.h.b16 %v1799
          %v1820 = vunpack.c.l.b16 %v1800
          %v1821 = vunpack.c.h.b16 %v1800
          %v1822 = vunpack.c.l.b16 %v1801
          %v1823 = vunpack.c.h.b16 %v1801
          %v1824 = vunpack.c.l.b16 %v1802
          %v1825 = vunpack.c.h.b16 %v1802
          %v1826 = vunpack.c.l.b16 %v1803
          %v1827 = vunpack.c.h.b16 %v1803
          %v1828 = vpack.c.b16 %v1812, %v1812
          %v1829 = vpack.c.b16 %v1813, %v1813
          %v1830 = vpack.c.b16 %v1814, %v1814
          %v1831 = vpack.c.b16 %v1815, %v1815
          %v1832 = vpack.c.b16 %v1816, %v1816
          %v1833 = vpack.c.b16 %v1817, %v1817
          %v1834 = vpack.c.b16 %v1818, %v1818
          %v1835 = vpack.c.b16 %v1819, %v1819
          %v1836 = vpack.c.b16 %v1820, %v1820
          %v1837 = vpack.c.b16 %v1821, %v1821
          %v1838 = vpack.c.b16 %v1822, %v1822
          %v1839 = vpack.c.b16 %v1823, %v1823
          %v1840 = vpack.c.b16 %v1824, %v1824
          %v1841 = vpack.c.b16 %v1825, %v1825
          %v1842 = vpack.c.b16 %v1826, %v1826
          %v1843 = vpack.c.b16 %v1827, %v1827
          %1860 = vst [vmem:[%s231 + $0x10] sm:$0xf] %v1828
          %1861 = vst [vmem:[%s231 + $0x40] sm:$0xf] %v1829
          %1862 = vst [vmem:[%s231 + $0x70] sm:$0xf] %v1830
          %1863 = vst [vmem:[%s231 + $0xa0] sm:$0xf] %v1831
          %1864 = vst [vmem:[%s231 + $0xd0] sm:$0xf] %v1832
          %1865 = vst [vmem:[%s231 + $0x100] sm:$0xf] %v1833
          %1866 = vst [vmem:[%s231 + $0x130] sm:$0xf] %v1834
          %1867 = vst [vmem:[%s231 + $0x160] sm:$0xf] %v1835
          %1868 = vst [vmem:[%s231 + $0x190] sm:$0xf] %v1836
          %1869 = vst [vmem:[%s231 + $0x1c0] sm:$0xf] %v1837
          %1870 = vst [vmem:[%s231 + $0x1f0] sm:$0xf] %v1838
          %1871 = vst [vmem:[%s231 + $0x220] sm:$0xf] %v1839
          %1872 = vst [vmem:[%s231 + $0x250] sm:$0xf] %v1840
          %1873 = vst [vmem:[%s231 + $0x280] sm:$0xf] %v1841
          %1874 = vst [vmem:[%s231 + $0x2b0] sm:$0xf] %v1842
          %1875 = vst [vmem:[%s231 + $0x2e0] sm:$0xf] %v1843
          %s1876 = sld [smem:[#allocation3 + $0x280]]
          %v1877 = vstv %s1876
          %v1878 = vmul.f32 %v1877, %v906
          %v1879 = vmul.f32 %v1877, %v907
          %v1880 = vmul.f32 %v1877, %v908
          %v1881 = vmul.f32 %v1877, %v909
          %v1882 = vmul.f32 %v1877, %v910
          %v1883 = vmul.f32 %v1877, %v911
          %v1884 = vmul.f32 %v1877, %v912
          %v1885 = vmul.f32 %v1877, %v913
          %v1886 = vmul.f32 %v1877, %v914
          %v1887 = vmul.f32 %v1877, %v915
          %v1888 = vmul.f32 %v1877, %v916
          %v1889 = vmul.f32 %v1877, %v917
          %v1890 = vmul.f32 %v1877, %v918
          %v1891 = vmul.f32 %v1877, %v919
          %v1892 = vmul.f32 %v1877, %v920
          %v1893 = vmul.f32 %v1877, %v921
          %s1894 = sld [smem:[#allocation3 + $0x281]]
          %v1895 = vstv %s1894
          %v1896 = vmul.f32 %v1895, %v923
          %v1897 = vmul.f32 %v1895, %v924
          %v1898 = vmul.f32 %v1895, %v925
          %v1899 = vmul.f32 %v1895, %v926
          %v1900 = vmul.f32 %v1895, %v927
          %v1901 = vmul.f32 %v1895, %v928
          %v1902 = vmul.f32 %v1895, %v929
          %v1903 = vmul.f32 %v1895, %v930
          %v1904 = vmul.f32 %v1895, %v931
          %v1905 = vmul.f32 %v1895, %v932
          %v1906 = vmul.f32 %v1895, %v933
          %v1907 = vmul.f32 %v1895, %v934
          %v1908 = vmul.f32 %v1895, %v935
          %v1909 = vmul.f32 %v1895, %v936
          %v1910 = vmul.f32 %v1895, %v937
          %v1911 = vmul.f32 %v1895, %v938
          %v1912 = vadd.f32 %v1878, %v1896
          %v1913 = vadd.f32 %v1879, %v1897
          %v1914 = vadd.f32 %v1880, %v1898
          %v1915 = vadd.f32 %v1881, %v1899
          %v1916 = vadd.f32 %v1882, %v1900
          %v1917 = vadd.f32 %v1883, %v1901
          %v1918 = vadd.f32 %v1884, %v1902
          %v1919 = vadd.f32 %v1885, %v1903
          %v1920 = vadd.f32 %v1886, %v1904
          %v1921 = vadd.f32 %v1887, %v1905
          %v1922 = vadd.f32 %v1888, %v1906
          %v1923 = vadd.f32 %v1889, %v1907
          %v1924 = vadd.f32 %v1890, %v1908
          %v1925 = vadd.f32 %v1891, %v1909
          %v1926 = vadd.f32 %v1892, %v1910
          %v1927 = vadd.f32 %v1893, %v1911
          %s1928 = sld [smem:[#allocation3 + $0x282]]
          %v1929 = vstv %s1928
          %v1930 = vmul.f32 %v1929, %v940
          %v1931 = vmul.f32 %v1929, %v941
          %v1932 = vmul.f32 %v1929, %v942
          %v1933 = vmul.f32 %v1929, %v943
          %v1934 = vmul.f32 %v1929, %v944
          %v1935 = vmul.f32 %v1929, %v945
          %v1936 = vmul.f32 %v1929, %v946
          %v1937 = vmul.f32 %v1929, %v947
          %v1938 = vmul.f32 %v1929, %v948
          %v1939 = vmul.f32 %v1929, %v949
          %v1940 = vmul.f32 %v1929, %v950
          %v1941 = vmul.f32 %v1929, %v951
          %v1942 = vmul.f32 %v1929, %v952
          %v1943 = vmul.f32 %v1929, %v953
          %v1944 = vmul.f32 %v1929, %v954
          %v1945 = vmul.f32 %v1929, %v955
          %v1946 = vadd.f32 %v1912, %v1930
          %v1947 = vadd.f32 %v1913, %v1931
          %v1948 = vadd.f32 %v1914, %v1932
          %v1949 = vadd.f32 %v1915, %v1933
          %v1950 = vadd.f32 %v1916, %v1934
          %v1951 = vadd.f32 %v1917, %v1935
          %v1952 = vadd.f32 %v1918, %v1936
          %v1953 = vadd.f32 %v1919, %v1937
          %v1954 = vadd.f32 %v1920, %v1938
          %v1955 = vadd.f32 %v1921, %v1939
          %v1956 = vadd.f32 %v1922, %v1940
          %v1957 = vadd.f32 %v1923, %v1941
          %v1958 = vadd.f32 %v1924, %v1942
          %v1959 = vadd.f32 %v1925, %v1943
          %v1960 = vadd.f32 %v1926, %v1944
          %v1961 = vadd.f32 %v1927, %v1945
          %s1962 = sld [smem:[#allocation3 + $0x283]]
          %v1963 = vstv %s1962
          %v1964 = vadd.f32 %v1946, %v1963
          %v1965 = vadd.f32 %v1947, %v1963
          %v1966 = vadd.f32 %v1948, %v1963
          %v1967 = vadd.f32 %v1949, %v1963
          %v1968 = vadd.f32 %v1950, %v1963
          %v1969 = vadd.f32 %v1951, %v1963
          %v1970 = vadd.f32 %v1952, %v1963
          %v1971 = vadd.f32 %v1953, %v1963
          %v1972 = vadd.f32 %v1954, %v1963
          %v1973 = vadd.f32 %v1955, %v1963
          %v1974 = vadd.f32 %v1956, %v1963
          %v1975 = vadd.f32 %v1957, %v1963
          %v1976 = vadd.f32 %v1958, %v1963
          %v1977 = vadd.f32 %v1959, %v1963
          %v1978 = vadd.f32 %v1960, %v1963
          %v1979 = vadd.f32 %v1961, %v1963
          %v1980 = vpack.c.bf16 %v1965, %v1964
          %v1981 = vpack.c.bf16 %v1967, %v1966
          %v1982 = vpack.c.bf16 %v1969, %v1968
          %v1983 = vpack.c.bf16 %v1971, %v1970
          %v1984 = vpack.c.bf16 %v1973, %v1972
          %v1985 = vpack.c.bf16 %v1975, %v1974
          %v1986 = vpack.c.bf16 %v1977, %v1976
          %v1987 = vpack.c.bf16 %v1979, %v1978
          %v1996 = vunpack.c.l.b16 %v1980
          %v1997 = vunpack.c.h.b16 %v1980
          %v1998 = vunpack.c.l.b16 %v1981
          %v1999 = vunpack.c.h.b16 %v1981
          %v2000 = vunpack.c.l.b16 %v1982
          %v2001 = vunpack.c.h.b16 %v1982
          %v2002 = vunpack.c.l.b16 %v1983
          %v2003 = vunpack.c.h.b16 %v1983
          %v2004 = vunpack.c.l.b16 %v1984
          %v2005 = vunpack.c.h.b16 %v1984
          %v2006 = vunpack.c.l.b16 %v1985
          %v2007 = vunpack.c.h.b16 %v1985
          %v2008 = vunpack.c.l.b16 %v1986
          %v2009 = vunpack.c.h.b16 %v1986
          %v2010 = vunpack.c.l.b16 %v1987
          %v2011 = vunpack.c.h.b16 %v1987
          %v2012 = vpack.c.b16 %v1996, %v1996
          %v2013 = vpack.c.b16 %v1997, %v1997
          %v2014 = vpack.c.b16 %v1998, %v1998
          %v2015 = vpack.c.b16 %v1999, %v1999
          %v2016 = vpack.c.b16 %v2000, %v2000
          %v2017 = vpack.c.b16 %v2001, %v2001
          %v2018 = vpack.c.b16 %v2002, %v2002
          %v2019 = vpack.c.b16 %v2003, %v2003
          %v2020 = vpack.c.b16 %v2004, %v2004
          %v2021 = vpack.c.b16 %v2005, %v2005
          %v2022 = vpack.c.b16 %v2006, %v2006
          %v2023 = vpack.c.b16 %v2007, %v2007
          %v2024 = vpack.c.b16 %v2008, %v2008
          %v2025 = vpack.c.b16 %v2009, %v2009
          %v2026 = vpack.c.b16 %v2010, %v2010
          %v2027 = vpack.c.b16 %v2011, %v2011
          %2044 = vst [vmem:[%s231 + $0x14] sm:$0xf] %v2012
          %2045 = vst [vmem:[%s231 + $0x44] sm:$0xf] %v2013
          %2046 = vst [vmem:[%s231 + $0x74] sm:$0xf] %v2014
          %2047 = vst [vmem:[%s231 + $0xa4] sm:$0xf] %v2015
          %2048 = vst [vmem:[%s231 + $0xd4] sm:$0xf] %v2016
          %2049 = vst [vmem:[%s231 + $0x104] sm:$0xf] %v2017
          %2050 = vst [vmem:[%s231 + $0x134] sm:$0xf] %v2018
          %2051 = vst [vmem:[%s231 + $0x164] sm:$0xf] %v2019
          %2052 = vst [vmem:[%s231 + $0x194] sm:$0xf] %v2020
          %2053 = vst [vmem:[%s231 + $0x1c4] sm:$0xf] %v2021
          %2054 = vst [vmem:[%s231 + $0x1f4] sm:$0xf] %v2022
          %2055 = vst [vmem:[%s231 + $0x224] sm:$0xf] %v2023
          %2056 = vst [vmem:[%s231 + $0x254] sm:$0xf] %v2024
          %2057 = vst [vmem:[%s231 + $0x284] sm:$0xf] %v2025
          %2058 = vst [vmem:[%s231 + $0x2b4] sm:$0xf] %v2026
          %2059 = vst [vmem:[%s231 + $0x2e4] sm:$0xf] %v2027
          %s2060 = sld [smem:[#allocation3 + $0x300]]
          %v2061 = vstv %s2060
          %v2062 = vmul.f32 %v2061, %v906
          %v2063 = vmul.f32 %v2061, %v907
          %v2064 = vmul.f32 %v2061, %v908
          %v2065 = vmul.f32 %v2061, %v909
          %v2066 = vmul.f32 %v2061, %v910
          %v2067 = vmul.f32 %v2061, %v911
          %v2068 = vmul.f32 %v2061, %v912
          %v2069 = vmul.f32 %v2061, %v913
          %v2070 = vmul.f32 %v2061, %v914
          %v2071 = vmul.f32 %v2061, %v915
          %v2072 = vmul.f32 %v2061, %v916
          %v2073 = vmul.f32 %v2061, %v917
          %v2074 = vmul.f32 %v2061, %v918
          %v2075 = vmul.f32 %v2061, %v919
          %v2076 = vmul.f32 %v2061, %v920
          %v2077 = vmul.f32 %v2061, %v921
          %s2078 = sld [smem:[#allocation3 + $0x301]]
          %v2079 = vstv %s2078
          %v2080 = vmul.f32 %v2079, %v923
          %v2081 = vmul.f32 %v2079, %v924
          %v2082 = vmul.f32 %v2079, %v925
          %v2083 = vmul.f32 %v2079, %v926
          %v2084 = vmul.f32 %v2079, %v927
          %v2085 = vmul.f32 %v2079, %v928
          %v2086 = vmul.f32 %v2079, %v929
          %v2087 = vmul.f32 %v2079, %v930
          %v2088 = vmul.f32 %v2079, %v931
          %v2089 = vmul.f32 %v2079, %v932
          %v2090 = vmul.f32 %v2079, %v933
          %v2091 = vmul.f32 %v2079, %v934
          %v2092 = vmul.f32 %v2079, %v935
          %v2093 = vmul.f32 %v2079, %v936
          %v2094 = vmul.f32 %v2079, %v937
          %v2095 = vmul.f32 %v2079, %v938
          %v2096 = vadd.f32 %v2062, %v2080
          %v2097 = vadd.f32 %v2063, %v2081
          %v2098 = vadd.f32 %v2064, %v2082
          %v2099 = vadd.f32 %v2065, %v2083
          %v2100 = vadd.f32 %v2066, %v2084
          %v2101 = vadd.f32 %v2067, %v2085
          %v2102 = vadd.f32 %v2068, %v2086
          %v2103 = vadd.f32 %v2069, %v2087
          %v2104 = vadd.f32 %v2070, %v2088
          %v2105 = vadd.f32 %v2071, %v2089
          %v2106 = vadd.f32 %v2072, %v2090
          %v2107 = vadd.f32 %v2073, %v2091
          %v2108 = vadd.f32 %v2074, %v2092
          %v2109 = vadd.f32 %v2075, %v2093
          %v2110 = vadd.f32 %v2076, %v2094
          %v2111 = vadd.f32 %v2077, %v2095
          %s2112 = sld [smem:[#allocation3 + $0x302]]
          %v2113 = vstv %s2112
          %v2114 = vmul.f32 %v2113, %v940
          %v2115 = vmul.f32 %v2113, %v941
          %v2116 = vmul.f32 %v2113, %v942
          %v2117 = vmul.f32 %v2113, %v943
          %v2118 = vmul.f32 %v2113, %v944
          %v2119 = vmul.f32 %v2113, %v945
          %v2120 = vmul.f32 %v2113, %v946
          %v2121 = vmul.f32 %v2113, %v947
          %v2122 = vmul.f32 %v2113, %v948
          %v2123 = vmul.f32 %v2113, %v949
          %v2124 = vmul.f32 %v2113, %v950
          %v2125 = vmul.f32 %v2113, %v951
          %v2126 = vmul.f32 %v2113, %v952
          %v2127 = vmul.f32 %v2113, %v953
          %v2128 = vmul.f32 %v2113, %v954
          %v2129 = vmul.f32 %v2113, %v955
          %v2130 = vadd.f32 %v2096, %v2114
          %v2131 = vadd.f32 %v2097, %v2115
          %v2132 = vadd.f32 %v2098, %v2116
          %v2133 = vadd.f32 %v2099, %v2117
          %v2134 = vadd.f32 %v2100, %v2118
          %v2135 = vadd.f32 %v2101, %v2119
          %v2136 = vadd.f32 %v2102, %v2120
          %v2137 = vadd.f32 %v2103, %v2121
          %v2138 = vadd.f32 %v2104, %v2122
          %v2139 = vadd.f32 %v2105, %v2123
          %v2140 = vadd.f32 %v2106, %v2124
          %v2141 = vadd.f32 %v2107, %v2125
          %v2142 = vadd.f32 %v2108, %v2126
          %v2143 = vadd.f32 %v2109, %v2127
          %v2144 = vadd.f32 %v2110, %v2128
          %v2145 = vadd.f32 %v2111, %v2129
          %s2146 = sld [smem:[#allocation3 + $0x303]]
          %v2147 = vstv %s2146
          %v2148 = vadd.f32 %v2130, %v2147
          %v2149 = vadd.f32 %v2131, %v2147
          %v2150 = vadd.f32 %v2132, %v2147
          %v2151 = vadd.f32 %v2133, %v2147
          %v2152 = vadd.f32 %v2134, %v2147
          %v2153 = vadd.f32 %v2135, %v2147
          %v2154 = vadd.f32 %v2136, %v2147
          %v2155 = vadd.f32 %v2137, %v2147
          %v2156 = vadd.f32 %v2138, %v2147
          %v2157 = vadd.f32 %v2139, %v2147
          %v2158 = vadd.f32 %v2140, %v2147
          %v2159 = vadd.f32 %v2141, %v2147
          %v2160 = vadd.f32 %v2142, %v2147
          %v2161 = vadd.f32 %v2143, %v2147
          %v2162 = vadd.f32 %v2144, %v2147
          %v2163 = vadd.f32 %v2145, %v2147
          %v2164 = vpack.c.bf16 %v2149, %v2148
          %v2165 = vpack.c.bf16 %v2151, %v2150
          %v2166 = vpack.c.bf16 %v2153, %v2152
          %v2167 = vpack.c.bf16 %v2155, %v2154
          %v2168 = vpack.c.bf16 %v2157, %v2156
          %v2169 = vpack.c.bf16 %v2159, %v2158
          %v2170 = vpack.c.bf16 %v2161, %v2160
          %v2171 = vpack.c.bf16 %v2163, %v2162
          %v2180 = vunpack.c.l.b16 %v2164
          %v2181 = vunpack.c.h.b16 %v2164
          %v2182 = vunpack.c.l.b16 %v2165
          %v2183 = vunpack.c.h.b16 %v2165
          %v2184 = vunpack.c.l.b16 %v2166
          %v2185 = vunpack.c.h.b16 %v2166
          %v2186 = vunpack.c.l.b16 %v2167
          %v2187 = vunpack.c.h.b16 %v2167
          %v2188 = vunpack.c.l.b16 %v2168
          %v2189 = vunpack.c.h.b16 %v2168
          %v2190 = vunpack.c.l.b16 %v2169
          %v2191 = vunpack.c.h.b16 %v2169
          %v2192 = vunpack.c.l.b16 %v2170
          %v2193 = vunpack.c.h.b16 %v2170
          %v2194 = vunpack.c.l.b16 %v2171
          %v2195 = vunpack.c.h.b16 %v2171
          %v2196 = vpack.c.b16 %v2180, %v2180
          %v2197 = vpack.c.b16 %v2181, %v2181
          %v2198 = vpack.c.b16 %v2182, %v2182
          %v2199 = vpack.c.b16 %v2183, %v2183
          %v2200 = vpack.c.b16 %v2184, %v2184
          %v2201 = vpack.c.b16 %v2185, %v2185
          %v2202 = vpack.c.b16 %v2186, %v2186
          %v2203 = vpack.c.b16 %v2187, %v2187
          %v2204 = vpack.c.b16 %v2188, %v2188
          %v2205 = vpack.c.b16 %v2189, %v2189
          %v2206 = vpack.c.b16 %v2190, %v2190
          %v2207 = vpack.c.b16 %v2191, %v2191
          %v2208 = vpack.c.b16 %v2192, %v2192
          %v2209 = vpack.c.b16 %v2193, %v2193
          %v2210 = vpack.c.b16 %v2194, %v2194
          %v2211 = vpack.c.b16 %v2195, %v2195
          %2228 = vst [vmem:[%s231 + $0x18] sm:$0xf] %v2196
          %2229 = vst [vmem:[%s231 + $0x48] sm:$0xf] %v2197
          %2230 = vst [vmem:[%s231 + $0x78] sm:$0xf] %v2198
          %2231 = vst [vmem:[%s231 + $0xa8] sm:$0xf] %v2199
          %2232 = vst [vmem:[%s231 + $0xd8] sm:$0xf] %v2200
          %2233 = vst [vmem:[%s231 + $0x108] sm:$0xf] %v2201
          %2234 = vst [vmem:[%s231 + $0x138] sm:$0xf] %v2202
          %2235 = vst [vmem:[%s231 + $0x168] sm:$0xf] %v2203
          %2236 = vst [vmem:[%s231 + $0x198] sm:$0xf] %v2204
          %2237 = vst [vmem:[%s231 + $0x1c8] sm:$0xf] %v2205
          %2238 = vst [vmem:[%s231 + $0x1f8] sm:$0xf] %v2206
          %2239 = vst [vmem:[%s231 + $0x228] sm:$0xf] %v2207
          %2240 = vst [vmem:[%s231 + $0x258] sm:$0xf] %v2208
          %2241 = vst [vmem:[%s231 + $0x288] sm:$0xf] %v2209
          %2242 = vst [vmem:[%s231 + $0x2b8] sm:$0xf] %v2210
          %2243 = vst [vmem:[%s231 + $0x2e8] sm:$0xf] %v2211
          %s2244 = sld [smem:[#allocation3 + $0x380]]
          %v2245 = vstv %s2244
          %v2246 = vmul.f32 %v2245, %v906
          %v2247 = vmul.f32 %v2245, %v907
          %v2248 = vmul.f32 %v2245, %v908
          %v2249 = vmul.f32 %v2245, %v909
          %v2250 = vmul.f32 %v2245, %v910
          %v2251 = vmul.f32 %v2245, %v911
          %v2252 = vmul.f32 %v2245, %v912
          %v2253 = vmul.f32 %v2245, %v913
          %v2254 = vmul.f32 %v2245, %v914
          %v2255 = vmul.f32 %v2245, %v915
          %v2256 = vmul.f32 %v2245, %v916
          %v2257 = vmul.f32 %v2245, %v917
          %v2258 = vmul.f32 %v2245, %v918
          %v2259 = vmul.f32 %v2245, %v919
          %v2260 = vmul.f32 %v2245, %v920
          %v2261 = vmul.f32 %v2245, %v921
          %s2262 = sld [smem:[#allocation3 + $0x381]]
          %v2263 = vstv %s2262
          %v2264 = vmul.f32 %v2263, %v923
          %v2265 = vmul.f32 %v2263, %v924
          %v2266 = vmul.f32 %v2263, %v925
          %v2267 = vmul.f32 %v2263, %v926
          %v2268 = vmul.f32 %v2263, %v927
          %v2269 = vmul.f32 %v2263, %v928
          %v2270 = vmul.f32 %v2263, %v929
          %v2271 = vmul.f32 %v2263, %v930
          %v2272 = vmul.f32 %v2263, %v931
          %v2273 = vmul.f32 %v2263, %v932
          %v2274 = vmul.f32 %v2263, %v933
          %v2275 = vmul.f32 %v2263, %v934
          %v2276 = vmul.f32 %v2263, %v935
          %v2277 = vmul.f32 %v2263, %v936
          %v2278 = vmul.f32 %v2263, %v937
          %v2279 = vmul.f32 %v2263, %v938
          %v2280 = vadd.f32 %v2246, %v2264
          %v2281 = vadd.f32 %v2247, %v2265
          %v2282 = vadd.f32 %v2248, %v2266
          %v2283 = vadd.f32 %v2249, %v2267
          %v2284 = vadd.f32 %v2250, %v2268
          %v2285 = vadd.f32 %v2251, %v2269
          %v2286 = vadd.f32 %v2252, %v2270
          %v2287 = vadd.f32 %v2253, %v2271
          %v2288 = vadd.f32 %v2254, %v2272
          %v2289 = vadd.f32 %v2255, %v2273
          %v2290 = vadd.f32 %v2256, %v2274
          %v2291 = vadd.f32 %v2257, %v2275
          %v2292 = vadd.f32 %v2258, %v2276
          %v2293 = vadd.f32 %v2259, %v2277
          %v2294 = vadd.f32 %v2260, %v2278
          %v2295 = vadd.f32 %v2261, %v2279
          %s2296 = sld [smem:[#allocation3 + $0x382]]
          %v2297 = vstv %s2296
          %v2298 = vmul.f32 %v2297, %v940
          %v2299 = vmul.f32 %v2297, %v941
          %v2300 = vmul.f32 %v2297, %v942
          %v2301 = vmul.f32 %v2297, %v943
          %v2302 = vmul.f32 %v2297, %v944
          %v2303 = vmul.f32 %v2297, %v945
          %v2304 = vmul.f32 %v2297, %v946
          %v2305 = vmul.f32 %v2297, %v947
          %v2306 = vmul.f32 %v2297, %v948
          %v2307 = vmul.f32 %v2297, %v949
          %v2308 = vmul.f32 %v2297, %v950
          %v2309 = vmul.f32 %v2297, %v951
          %v2310 = vmul.f32 %v2297, %v952
          %v2311 = vmul.f32 %v2297, %v953
          %v2312 = vmul.f32 %v2297, %v954
          %v2313 = vmul.f32 %v2297, %v955
          %v2314 = vadd.f32 %v2280, %v2298
          %v2315 = vadd.f32 %v2281, %v2299
          %v2316 = vadd.f32 %v2282, %v2300
          %v2317 = vadd.f32 %v2283, %v2301
          %v2318 = vadd.f32 %v2284, %v2302
          %v2319 = vadd.f32 %v2285, %v2303
          %v2320 = vadd.f32 %v2286, %v2304
          %v2321 = vadd.f32 %v2287, %v2305
          %v2322 = vadd.f32 %v2288, %v2306
          %v2323 = vadd.f32 %v2289, %v2307
          %v2324 = vadd.f32 %v2290, %v2308
          %v2325 = vadd.f32 %v2291, %v2309
          %v2326 = vadd.f32 %v2292, %v2310
          %v2327 = vadd.f32 %v2293, %v2311
          %v2328 = vadd.f32 %v2294, %v2312
          %v2329 = vadd.f32 %v2295, %v2313
          %s2330 = sld [smem:[#allocation3 + $0x383]]
          %v2331 = vstv %s2330
          %v2332 = vadd.f32 %v2314, %v2331
          %v2333 = vadd.f32 %v2315, %v2331
          %v2334 = vadd.f32 %v2316, %v2331
          %v2335 = vadd.f32 %v2317, %v2331
          %v2336 = vadd.f32 %v2318, %v2331
          %v2337 = vadd.f32 %v2319, %v2331
          %v2338 = vadd.f32 %v2320, %v2331
          %v2339 = vadd.f32 %v2321, %v2331
          %v2340 = vadd.f32 %v2322, %v2331
          %v2341 = vadd.f32 %v2323, %v2331
          %v2342 = vadd.f32 %v2324, %v2331
          %v2343 = vadd.f32 %v2325, %v2331
          %v2344 = vadd.f32 %v2326, %v2331
          %v2345 = vadd.f32 %v2327, %v2331
          %v2346 = vadd.f32 %v2328, %v2331
          %v2347 = vadd.f32 %v2329, %v2331
          %v2348 = vpack.c.bf16 %v2333, %v2332
          %v2349 = vpack.c.bf16 %v2335, %v2334
          %v2350 = vpack.c.bf16 %v2337, %v2336
          %v2351 = vpack.c.bf16 %v2339, %v2338
          %v2352 = vpack.c.bf16 %v2341, %v2340
          %v2353 = vpack.c.bf16 %v2343, %v2342
          %v2354 = vpack.c.bf16 %v2345, %v2344
          %v2355 = vpack.c.bf16 %v2347, %v2346
          %v2364 = vunpack.c.l.b16 %v2348
          %v2365 = vunpack.c.h.b16 %v2348
          %v2366 = vunpack.c.l.b16 %v2349
          %v2367 = vunpack.c.h.b16 %v2349
          %v2368 = vunpack.c.l.b16 %v2350
          %v2369 = vunpack.c.h.b16 %v2350
          %v2370 = vunpack.c.l.b16 %v2351
          %v2371 = vunpack.c.h.b16 %v2351
          %v2372 = vunpack.c.l.b16 %v2352
          %v2373 = vunpack.c.h.b16 %v2352
          %v2374 = vunpack.c.l.b16 %v2353
          %v2375 = vunpack.c.h.b16 %v2353
          %v2376 = vunpack.c.l.b16 %v2354
          %v2377 = vunpack.c.h.b16 %v2354
          %v2378 = vunpack.c.l.b16 %v2355
          %v2379 = vunpack.c.h.b16 %v2355
          %v2380 = vpack.c.b16 %v2364, %v2364
          %v2381 = vpack.c.b16 %v2365, %v2365
          %v2382 = vpack.c.b16 %v2366, %v2366
          %v2383 = vpack.c.b16 %v2367, %v2367
          %v2384 = vpack.c.b16 %v2368, %v2368
          %v2385 = vpack.c.b16 %v2369, %v2369
          %v2386 = vpack.c.b16 %v2370, %v2370
          %v2387 = vpack.c.b16 %v2371, %v2371
          %v2388 = vpack.c.b16 %v2372, %v2372
          %v2389 = vpack.c.b16 %v2373, %v2373
          %v2390 = vpack.c.b16 %v2374, %v2374
          %v2391 = vpack.c.b16 %v2375, %v2375
          %v2392 = vpack.c.b16 %v2376, %v2376
          %v2393 = vpack.c.b16 %v2377, %v2377
          %v2394 = vpack.c.b16 %v2378, %v2378
          %v2395 = vpack.c.b16 %v2379, %v2379
          %2412 = vst [vmem:[%s231 + $0x1c] sm:$0xf] %v2380
          %2413 = vst [vmem:[%s231 + $0x4c] sm:$0xf] %v2381
          %2414 = vst [vmem:[%s231 + $0x7c] sm:$0xf] %v2382
          %2415 = vst [vmem:[%s231 + $0xac] sm:$0xf] %v2383
          %2416 = vst [vmem:[%s231 + $0xdc] sm:$0xf] %v2384
          %2417 = vst [vmem:[%s231 + $0x10c] sm:$0xf] %v2385
          %2418 = vst [vmem:[%s231 + $0x13c] sm:$0xf] %v2386
          %2419 = vst [vmem:[%s231 + $0x16c] sm:$0xf] %v2387
          %2420 = vst [vmem:[%s231 + $0x19c] sm:$0xf] %v2388
          %2421 = vst [vmem:[%s231 + $0x1cc] sm:$0xf] %v2389
          %2422 = vst [vmem:[%s231 + $0x1fc] sm:$0xf] %v2390
          %2423 = vst [vmem:[%s231 + $0x22c] sm:$0xf] %v2391
          %2424 = vst [vmem:[%s231 + $0x25c] sm:$0xf] %v2392
          %2425 = vst [vmem:[%s231 + $0x28c] sm:$0xf] %v2393
          %2426 = vst [vmem:[%s231 + $0x2bc] sm:$0xf] %v2394
          %2427 = vst [vmem:[%s231 + $0x2ec] sm:$0xf] %v2395
          %s2428 = sld [smem:[#allocation3 + $0x400]]
          %v2429 = vstv %s2428
          %v2430 = vmul.f32 %v2429, %v906
          %v2431 = vmul.f32 %v2429, %v907
          %v2432 = vmul.f32 %v2429, %v908
          %v2433 = vmul.f32 %v2429, %v909
          %v2434 = vmul.f32 %v2429, %v910
          %v2435 = vmul.f32 %v2429, %v911
          %v2436 = vmul.f32 %v2429, %v912
          %v2437 = vmul.f32 %v2429, %v913
          %v2438 = vmul.f32 %v2429, %v914
          %v2439 = vmul.f32 %v2429, %v915
          %v2440 = vmul.f32 %v2429, %v916
          %v2441 = vmul.f32 %v2429, %v917
          %v2442 = vmul.f32 %v2429, %v918
          %v2443 = vmul.f32 %v2429, %v919
          %v2444 = vmul.f32 %v2429, %v920
          %v2445 = vmul.f32 %v2429, %v921
          %s2446 = sld [smem:[#allocation3 + $0x401]]
          %v2447 = vstv %s2446
          %v2448 = vmul.f32 %v2447, %v923
          %v2449 = vmul.f32 %v2447, %v924
          %v2450 = vmul.f32 %v2447, %v925
          %v2451 = vmul.f32 %v2447, %v926
          %v2452 = vmul.f32 %v2447, %v927
          %v2453 = vmul.f32 %v2447, %v928
          %v2454 = vmul.f32 %v2447, %v929
          %v2455 = vmul.f32 %v2447, %v930
          %v2456 = vmul.f32 %v2447, %v931
          %v2457 = vmul.f32 %v2447, %v932
          %v2458 = vmul.f32 %v2447, %v933
          %v2459 = vmul.f32 %v2447, %v934
          %v2460 = vmul.f32 %v2447, %v935
          %v2461 = vmul.f32 %v2447, %v936
          %v2462 = vmul.f32 %v2447, %v937
          %v2463 = vmul.f32 %v2447, %v938
          %v2464 = vadd.f32 %v2430, %v2448
          %v2465 = vadd.f32 %v2431, %v2449
          %v2466 = vadd.f32 %v2432, %v2450
          %v2467 = vadd.f32 %v2433, %v2451
          %v2468 = vadd.f32 %v2434, %v2452
          %v2469 = vadd.f32 %v2435, %v2453
          %v2470 = vadd.f32 %v2436, %v2454
          %v2471 = vadd.f32 %v2437, %v2455
          %v2472 = vadd.f32 %v2438, %v2456
          %v2473 = vadd.f32 %v2439, %v2457
          %v2474 = vadd.f32 %v2440, %v2458
          %v2475 = vadd.f32 %v2441, %v2459
          %v2476 = vadd.f32 %v2442, %v2460
          %v2477 = vadd.f32 %v2443, %v2461
          %v2478 = vadd.f32 %v2444, %v2462
          %v2479 = vadd.f32 %v2445, %v2463
          %s2480 = sld [smem:[#allocation3 + $0x402]]
          %v2481 = vstv %s2480
          %v2482 = vmul.f32 %v2481, %v940
          %v2483 = vmul.f32 %v2481, %v941
          %v2484 = vmul.f32 %v2481, %v942
          %v2485 = vmul.f32 %v2481, %v943
          %v2486 = vmul.f32 %v2481, %v944
          %v2487 = vmul.f32 %v2481, %v945
          %v2488 = vmul.f32 %v2481, %v946
          %v2489 = vmul.f32 %v2481, %v947
          %v2490 = vmul.f32 %v2481, %v948
          %v2491 = vmul.f32 %v2481, %v949
          %v2492 = vmul.f32 %v2481, %v950
          %v2493 = vmul.f32 %v2481, %v951
          %v2494 = vmul.f32 %v2481, %v952
          %v2495 = vmul.f32 %v2481, %v953
          %v2496 = vmul.f32 %v2481, %v954
          %v2497 = vmul.f32 %v2481, %v955
          %v2498 = vadd.f32 %v2464, %v2482
          %v2499 = vadd.f32 %v2465, %v2483
          %v2500 = vadd.f32 %v2466, %v2484
          %v2501 = vadd.f32 %v2467, %v2485
          %v2502 = vadd.f32 %v2468, %v2486
          %v2503 = vadd.f32 %v2469, %v2487
          %v2504 = vadd.f32 %v2470, %v2488
          %v2505 = vadd.f32 %v2471, %v2489
          %v2506 = vadd.f32 %v2472, %v2490
          %v2507 = vadd.f32 %v2473, %v2491
          %v2508 = vadd.f32 %v2474, %v2492
          %v2509 = vadd.f32 %v2475, %v2493
          %v2510 = vadd.f32 %v2476, %v2494
          %v2511 = vadd.f32 %v2477, %v2495
          %v2512 = vadd.f32 %v2478, %v2496
          %v2513 = vadd.f32 %v2479, %v2497
          %s2514 = sld [smem:[#allocation3 + $0x403]]
          %v2515 = vstv %s2514
          %v2516 = vadd.f32 %v2498, %v2515
          %v2517 = vadd.f32 %v2499, %v2515
          %v2518 = vadd.f32 %v2500, %v2515
          %v2519 = vadd.f32 %v2501, %v2515
          %v2520 = vadd.f32 %v2502, %v2515
          %v2521 = vadd.f32 %v2503, %v2515
          %v2522 = vadd.f32 %v2504, %v2515
          %v2523 = vadd.f32 %v2505, %v2515
          %v2524 = vadd.f32 %v2506, %v2515
          %v2525 = vadd.f32 %v2507, %v2515
          %v2526 = vadd.f32 %v2508, %v2515
          %v2527 = vadd.f32 %v2509, %v2515
          %v2528 = vadd.f32 %v2510, %v2515
          %v2529 = vadd.f32 %v2511, %v2515
          %v2530 = vadd.f32 %v2512, %v2515
          %v2531 = vadd.f32 %v2513, %v2515
          %v2532 = vpack.c.bf16 %v2517, %v2516
          %v2533 = vpack.c.bf16 %v2519, %v2518
          %v2534 = vpack.c.bf16 %v2521, %v2520
          %v2535 = vpack.c.bf16 %v2523, %v2522
          %v2536 = vpack.c.bf16 %v2525, %v2524
          %v2537 = vpack.c.bf16 %v2527, %v2526
          %v2538 = vpack.c.bf16 %v2529, %v2528
          %v2539 = vpack.c.bf16 %v2531, %v2530
          %v2548 = vunpack.c.l.b16 %v2532
          %v2549 = vunpack.c.h.b16 %v2532
          %v2550 = vunpack.c.l.b16 %v2533
          %v2551 = vunpack.c.h.b16 %v2533
          %v2552 = vunpack.c.l.b16 %v2534
          %v2553 = vunpack.c.h.b16 %v2534
          %v2554 = vunpack.c.l.b16 %v2535
          %v2555 = vunpack.c.h.b16 %v2535
          %v2556 = vunpack.c.l.b16 %v2536
          %v2557 = vunpack.c.h.b16 %v2536
          %v2558 = vunpack.c.l.b16 %v2537
          %v2559 = vunpack.c.h.b16 %v2537
          %v2560 = vunpack.c.l.b16 %v2538
          %v2561 = vunpack.c.h.b16 %v2538
          %v2562 = vunpack.c.l.b16 %v2539
          %v2563 = vunpack.c.h.b16 %v2539
          %v2564 = vpack.c.b16 %v2548, %v2548
          %v2565 = vpack.c.b16 %v2549, %v2549
          %v2566 = vpack.c.b16 %v2550, %v2550
          %v2567 = vpack.c.b16 %v2551, %v2551
          %v2568 = vpack.c.b16 %v2552, %v2552
          %v2569 = vpack.c.b16 %v2553, %v2553
          %v2570 = vpack.c.b16 %v2554, %v2554
          %v2571 = vpack.c.b16 %v2555, %v2555
          %v2572 = vpack.c.b16 %v2556, %v2556
          %v2573 = vpack.c.b16 %v2557, %v2557
          %v2574 = vpack.c.b16 %v2558, %v2558
          %v2575 = vpack.c.b16 %v2559, %v2559
          %v2576 = vpack.c.b16 %v2560, %v2560
          %v2577 = vpack.c.b16 %v2561, %v2561
          %v2578 = vpack.c.b16 %v2562, %v2562
          %v2579 = vpack.c.b16 %v2563, %v2563
          %2596 = vst [vmem:[%s231 + $0x20] sm:$0xf] %v2564
          %2597 = vst [vmem:[%s231 + $0x50] sm:$0xf] %v2565
          %2598 = vst [vmem:[%s231 + $0x80] sm:$0xf] %v2566
          %2599 = vst [vmem:[%s231 + $0xb0] sm:$0xf] %v2567
          %2600 = vst [vmem:[%s231 + $0xe0] sm:$0xf] %v2568
          %2601 = vst [vmem:[%s231 + $0x110] sm:$0xf] %v2569
          %2602 = vst [vmem:[%s231 + $0x140] sm:$0xf] %v2570
          %2603 = vst [vmem:[%s231 + $0x170] sm:$0xf] %v2571
          %2604 = vst [vmem:[%s231 + $0x1a0] sm:$0xf] %v2572
          %2605 = vst [vmem:[%s231 + $0x1d0] sm:$0xf] %v2573
          %2606 = vst [vmem:[%s231 + $0x200] sm:$0xf] %v2574
          %2607 = vst [vmem:[%s231 + $0x230] sm:$0xf] %v2575
          %2608 = vst [vmem:[%s231 + $0x260] sm:$0xf] %v2576
          %2609 = vst [vmem:[%s231 + $0x290] sm:$0xf] %v2577
          %2610 = vst [vmem:[%s231 + $0x2c0] sm:$0xf] %v2578
          %2611 = vst [vmem:[%s231 + $0x2f0] sm:$0xf] %v2579
          %s2612 = sld [smem:[#allocation3 + $0x480]]
          %v2613 = vstv %s2612
          %v2614 = vmul.f32 %v2613, %v906
          %v2615 = vmul.f32 %v2613, %v907
          %v2616 = vmul.f32 %v2613, %v908
          %v2617 = vmul.f32 %v2613, %v909
          %v2618 = vmul.f32 %v2613, %v910
          %v2619 = vmul.f32 %v2613, %v911
          %v2620 = vmul.f32 %v2613, %v912
          %v2621 = vmul.f32 %v2613, %v913
          %v2622 = vmul.f32 %v2613, %v914
          %v2623 = vmul.f32 %v2613, %v915
          %v2624 = vmul.f32 %v2613, %v916
          %v2625 = vmul.f32 %v2613, %v917
          %v2626 = vmul.f32 %v2613, %v918
          %v2627 = vmul.f32 %v2613, %v919
          %v2628 = vmul.f32 %v2613, %v920
          %v2629 = vmul.f32 %v2613, %v921
          %s2630 = sld [smem:[#allocation3 + $0x481]]
          %v2631 = vstv %s2630
          %v2632 = vmul.f32 %v2631, %v923
          %v2633 = vmul.f32 %v2631, %v924
          %v2634 = vmul.f32 %v2631, %v925
          %v2635 = vmul.f32 %v2631, %v926
          %v2636 = vmul.f32 %v2631, %v927
          %v2637 = vmul.f32 %v2631, %v928
          %v2638 = vmul.f32 %v2631, %v929
          %v2639 = vmul.f32 %v2631, %v930
          %v2640 = vmul.f32 %v2631, %v931
          %v2641 = vmul.f32 %v2631, %v932
          %v2642 = vmul.f32 %v2631, %v933
          %v2643 = vmul.f32 %v2631, %v934
          %v2644 = vmul.f32 %v2631, %v935
          %v2645 = vmul.f32 %v2631, %v936
          %v2646 = vmul.f32 %v2631, %v937
          %v2647 = vmul.f32 %v2631, %v938
          %v2648 = vadd.f32 %v2614, %v2632
          %v2649 = vadd.f32 %v2615, %v2633
          %v2650 = vadd.f32 %v2616, %v2634
          %v2651 = vadd.f32 %v2617, %v2635
          %v2652 = vadd.f32 %v2618, %v2636
          %v2653 = vadd.f32 %v2619, %v2637
          %v2654 = vadd.f32 %v2620, %v2638
          %v2655 = vadd.f32 %v2621, %v2639
          %v2656 = vadd.f32 %v2622, %v2640
          %v2657 = vadd.f32 %v2623, %v2641
          %v2658 = vadd.f32 %v2624, %v2642
          %v2659 = vadd.f32 %v2625, %v2643
          %v2660 = vadd.f32 %v2626, %v2644
          %v2661 = vadd.f32 %v2627, %v2645
          %v2662 = vadd.f32 %v2628, %v2646
          %v2663 = vadd.f32 %v2629, %v2647
          %s2664 = sld [smem:[#allocation3 + $0x482]]
          %v2665 = vstv %s2664
          %v2666 = vmul.f32 %v2665, %v940
          %v2667 = vmul.f32 %v2665, %v941
          %v2668 = vmul.f32 %v2665, %v942
          %v2669 = vmul.f32 %v2665, %v943
          %v2670 = vmul.f32 %v2665, %v944
          %v2671 = vmul.f32 %v2665, %v945
          %v2672 = vmul.f32 %v2665, %v946
          %v2673 = vmul.f32 %v2665, %v947
          %v2674 = vmul.f32 %v2665, %v948
          %v2675 = vmul.f32 %v2665, %v949
          %v2676 = vmul.f32 %v2665, %v950
          %v2677 = vmul.f32 %v2665, %v951
          %v2678 = vmul.f32 %v2665, %v952
          %v2679 = vmul.f32 %v2665, %v953
          %v2680 = vmul.f32 %v2665, %v954
          %v2681 = vmul.f32 %v2665, %v955
          %v2682 = vadd.f32 %v2648, %v2666
          %v2683 = vadd.f32 %v2649, %v2667
          %v2684 = vadd.f32 %v2650, %v2668
          %v2685 = vadd.f32 %v2651, %v2669
          %v2686 = vadd.f32 %v2652, %v2670
          %v2687 = vadd.f32 %v2653, %v2671
          %v2688 = vadd.f32 %v2654, %v2672
          %v2689 = vadd.f32 %v2655, %v2673
          %v2690 = vadd.f32 %v2656, %v2674
          %v2691 = vadd.f32 %v2657, %v2675
          %v2692 = vadd.f32 %v2658, %v2676
          %v2693 = vadd.f32 %v2659, %v2677
          %v2694 = vadd.f32 %v2660, %v2678
          %v2695 = vadd.f32 %v2661, %v2679
          %v2696 = vadd.f32 %v2662, %v2680
          %v2697 = vadd.f32 %v2663, %v2681
          %s2698 = sld [smem:[#allocation3 + $0x483]]
          %v2699 = vstv %s2698
          %v2700 = vadd.f32 %v2682, %v2699
          %v2701 = vadd.f32 %v2683, %v2699
          %v2702 = vadd.f32 %v2684, %v2699
          %v2703 = vadd.f32 %v2685, %v2699
          %v2704 = vadd.f32 %v2686, %v2699
          %v2705 = vadd.f32 %v2687, %v2699
          %v2706 = vadd.f32 %v2688, %v2699
          %v2707 = vadd.f32 %v2689, %v2699
          %v2708 = vadd.f32 %v2690, %v2699
          %v2709 = vadd.f32 %v2691, %v2699
          %v2710 = vadd.f32 %v2692, %v2699
          %v2711 = vadd.f32 %v2693, %v2699
          %v2712 = vadd.f32 %v2694, %v2699
          %v2713 = vadd.f32 %v2695, %v2699
          %v2714 = vadd.f32 %v2696, %v2699
          %v2715 = vadd.f32 %v2697, %v2699
          %v2716 = vpack.c.bf16 %v2701, %v2700
          %v2717 = vpack.c.bf16 %v2703, %v2702
          %v2718 = vpack.c.bf16 %v2705, %v2704
          %v2719 = vpack.c.bf16 %v2707, %v2706
          %v2720 = vpack.c.bf16 %v2709, %v2708
          %v2721 = vpack.c.bf16 %v2711, %v2710
          %v2722 = vpack.c.bf16 %v2713, %v2712
          %v2723 = vpack.c.bf16 %v2715, %v2714
          %v2732 = vunpack.c.l.b16 %v2716
          %v2733 = vunpack.c.h.b16 %v2716
          %v2734 = vunpack.c.l.b16 %v2717
          %v2735 = vunpack.c.h.b16 %v2717
          %v2736 = vunpack.c.l.b16 %v2718
          %v2737 = vunpack.c.h.b16 %v2718
          %v2738 = vunpack.c.l.b16 %v2719
          %v2739 = vunpack.c.h.b16 %v2719
          %v2740 = vunpack.c.l.b16 %v2720
          %v2741 = vunpack.c.h.b16 %v2720
          %v2742 = vunpack.c.l.b16 %v2721
          %v2743 = vunpack.c.h.b16 %v2721
          %v2744 = vunpack.c.l.b16 %v2722
          %v2745 = vunpack.c.h.b16 %v2722
          %v2746 = vunpack.c.l.b16 %v2723
          %v2747 = vunpack.c.h.b16 %v2723
          %v2748 = vpack.c.b16 %v2732, %v2732
          %v2749 = vpack.c.b16 %v2733, %v2733
          %v2750 = vpack.c.b16 %v2734, %v2734
          %v2751 = vpack.c.b16 %v2735, %v2735
          %v2752 = vpack.c.b16 %v2736, %v2736
          %v2753 = vpack.c.b16 %v2737, %v2737
          %v2754 = vpack.c.b16 %v2738, %v2738
          %v2755 = vpack.c.b16 %v2739, %v2739
          %v2756 = vpack.c.b16 %v2740, %v2740
          %v2757 = vpack.c.b16 %v2741, %v2741
          %v2758 = vpack.c.b16 %v2742, %v2742
          %v2759 = vpack.c.b16 %v2743, %v2743
          %v2760 = vpack.c.b16 %v2744, %v2744
          %v2761 = vpack.c.b16 %v2745, %v2745
          %v2762 = vpack.c.b16 %v2746, %v2746
          %v2763 = vpack.c.b16 %v2747, %v2747
          %2780 = vst [vmem:[%s231 + $0x24] sm:$0xf] %v2748
          %2781 = vst [vmem:[%s231 + $0x54] sm:$0xf] %v2749
          %2782 = vst [vmem:[%s231 + $0x84] sm:$0xf] %v2750
          %2783 = vst [vmem:[%s231 + $0xb4] sm:$0xf] %v2751
          %2784 = vst [vmem:[%s231 + $0xe4] sm:$0xf] %v2752
          %2785 = vst [vmem:[%s231 + $0x114] sm:$0xf] %v2753
          %2786 = vst [vmem:[%s231 + $0x144] sm:$0xf] %v2754
          %2787 = vst [vmem:[%s231 + $0x174] sm:$0xf] %v2755
          %2788 = vst [vmem:[%s231 + $0x1a4] sm:$0xf] %v2756
          %2789 = vst [vmem:[%s231 + $0x1d4] sm:$0xf] %v2757
          %2790 = vst [vmem:[%s231 + $0x204] sm:$0xf] %v2758
          %2791 = vst [vmem:[%s231 + $0x234] sm:$0xf] %v2759
          %2792 = vst [vmem:[%s231 + $0x264] sm:$0xf] %v2760
          %2793 = vst [vmem:[%s231 + $0x294] sm:$0xf] %v2761
          %2794 = vst [vmem:[%s231 + $0x2c4] sm:$0xf] %v2762
          %2795 = vst [vmem:[%s231 + $0x2f4] sm:$0xf] %v2763
          %s2796 = sld [smem:[#allocation3 + $0x500]]
          %v2797 = vstv %s2796
          %v2798 = vmul.f32 %v2797, %v906
          %v2799 = vmul.f32 %v2797, %v907
          %v2800 = vmul.f32 %v2797, %v908
          %v2801 = vmul.f32 %v2797, %v909
          %v2802 = vmul.f32 %v2797, %v910
          %v2803 = vmul.f32 %v2797, %v911
          %v2804 = vmul.f32 %v2797, %v912
          %v2805 = vmul.f32 %v2797, %v913
          %v2806 = vmul.f32 %v2797, %v914
          %v2807 = vmul.f32 %v2797, %v915
          %v2808 = vmul.f32 %v2797, %v916
          %v2809 = vmul.f32 %v2797, %v917
          %v2810 = vmul.f32 %v2797, %v918
          %v2811 = vmul.f32 %v2797, %v919
          %v2812 = vmul.f32 %v2797, %v920
          %v2813 = vmul.f32 %v2797, %v921
          %s2814 = sld [smem:[#allocation3 + $0x501]]
          %v2815 = vstv %s2814
          %v2816 = vmul.f32 %v2815, %v923
          %v2817 = vmul.f32 %v2815, %v924
          %v2818 = vmul.f32 %v2815, %v925
          %v2819 = vmul.f32 %v2815, %v926
          %v2820 = vmul.f32 %v2815, %v927
          %v2821 = vmul.f32 %v2815, %v928
          %v2822 = vmul.f32 %v2815, %v929
          %v2823 = vmul.f32 %v2815, %v930
          %v2824 = vmul.f32 %v2815, %v931
          %v2825 = vmul.f32 %v2815, %v932
          %v2826 = vmul.f32 %v2815, %v933
          %v2827 = vmul.f32 %v2815, %v934
          %v2828 = vmul.f32 %v2815, %v935
          %v2829 = vmul.f32 %v2815, %v936
          %v2830 = vmul.f32 %v2815, %v937
          %v2831 = vmul.f32 %v2815, %v938
          %v2832 = vadd.f32 %v2798, %v2816
          %v2833 = vadd.f32 %v2799, %v2817
          %v2834 = vadd.f32 %v2800, %v2818
          %v2835 = vadd.f32 %v2801, %v2819
          %v2836 = vadd.f32 %v2802, %v2820
          %v2837 = vadd.f32 %v2803, %v2821
          %v2838 = vadd.f32 %v2804, %v2822
          %v2839 = vadd.f32 %v2805, %v2823
          %v2840 = vadd.f32 %v2806, %v2824
          %v2841 = vadd.f32 %v2807, %v2825
          %v2842 = vadd.f32 %v2808, %v2826
          %v2843 = vadd.f32 %v2809, %v2827
          %v2844 = vadd.f32 %v2810, %v2828
          %v2845 = vadd.f32 %v2811, %v2829
          %v2846 = vadd.f32 %v2812, %v2830
          %v2847 = vadd.f32 %v2813, %v2831
          %s2848 = sld [smem:[#allocation3 + $0x502]]
          %v2849 = vstv %s2848
          %v2850 = vmul.f32 %v2849, %v940
          %v2851 = vmul.f32 %v2849, %v941
          %v2852 = vmul.f32 %v2849, %v942
          %v2853 = vmul.f32 %v2849, %v943
          %v2854 = vmul.f32 %v2849, %v944
          %v2855 = vmul.f32 %v2849, %v945
          %v2856 = vmul.f32 %v2849, %v946
          %v2857 = vmul.f32 %v2849, %v947
          %v2858 = vmul.f32 %v2849, %v948
          %v2859 = vmul.f32 %v2849, %v949
          %v2860 = vmul.f32 %v2849, %v950
          %v2861 = vmul.f32 %v2849, %v951
          %v2862 = vmul.f32 %v2849, %v952
          %v2863 = vmul.f32 %v2849, %v953
          %v2864 = vmul.f32 %v2849, %v954
          %v2865 = vmul.f32 %v2849, %v955
          %v2866 = vadd.f32 %v2832, %v2850
          %v2867 = vadd.f32 %v2833, %v2851
          %v2868 = vadd.f32 %v2834, %v2852
          %v2869 = vadd.f32 %v2835, %v2853
          %v2870 = vadd.f32 %v2836, %v2854
          %v2871 = vadd.f32 %v2837, %v2855
          %v2872 = vadd.f32 %v2838, %v2856
          %v2873 = vadd.f32 %v2839, %v2857
          %v2874 = vadd.f32 %v2840, %v2858
          %v2875 = vadd.f32 %v2841, %v2859
          %v2876 = vadd.f32 %v2842, %v2860
          %v2877 = vadd.f32 %v2843, %v2861
          %v2878 = vadd.f32 %v2844, %v2862
          %v2879 = vadd.f32 %v2845, %v2863
          %v2880 = vadd.f32 %v2846, %v2864
          %v2881 = vadd.f32 %v2847, %v2865
          %s2882 = sld [smem:[#allocation3 + $0x503]]
          %v2883 = vstv %s2882
          %v2884 = vadd.f32 %v2866, %v2883
          %v2885 = vadd.f32 %v2867, %v2883
          %v2886 = vadd.f32 %v2868, %v2883
          %v2887 = vadd.f32 %v2869, %v2883
          %v2888 = vadd.f32 %v2870, %v2883
          %v2889 = vadd.f32 %v2871, %v2883
          %v2890 = vadd.f32 %v2872, %v2883
          %v2891 = vadd.f32 %v2873, %v2883
          %v2892 = vadd.f32 %v2874, %v2883
          %v2893 = vadd.f32 %v2875, %v2883
          %v2894 = vadd.f32 %v2876, %v2883
          %v2895 = vadd.f32 %v2877, %v2883
          %v2896 = vadd.f32 %v2878, %v2883
          %v2897 = vadd.f32 %v2879, %v2883
          %v2898 = vadd.f32 %v2880, %v2883
          %v2899 = vadd.f32 %v2881, %v2883
          %v2900 = vpack.c.bf16 %v2885, %v2884
          %v2901 = vpack.c.bf16 %v2887, %v2886
          %v2902 = vpack.c.bf16 %v2889, %v2888
          %v2903 = vpack.c.bf16 %v2891, %v2890
          %v2904 = vpack.c.bf16 %v2893, %v2892
          %v2905 = vpack.c.bf16 %v2895, %v2894
          %v2906 = vpack.c.bf16 %v2897, %v2896
          %v2907 = vpack.c.bf16 %v2899, %v2898
          %v2916 = vunpack.c.l.b16 %v2900
          %v2917 = vunpack.c.h.b16 %v2900
          %v2918 = vunpack.c.l.b16 %v2901
          %v2919 = vunpack.c.h.b16 %v2901
          %v2920 = vunpack.c.l.b16 %v2902
          %v2921 = vunpack.c.h.b16 %v2902
          %v2922 = vunpack.c.l.b16 %v2903
          %v2923 = vunpack.c.h.b16 %v2903
          %v2924 = vunpack.c.l.b16 %v2904
          %v2925 = vunpack.c.h.b16 %v2904
          %v2926 = vunpack.c.l.b16 %v2905
          %v2927 = vunpack.c.h.b16 %v2905
          %v2928 = vunpack.c.l.b16 %v2906
          %v2929 = vunpack.c.h.b16 %v2906
          %v2930 = vunpack.c.l.b16 %v2907
          %v2931 = vunpack.c.h.b16 %v2907
          %v2932 = vpack.c.b16 %v2916, %v2916
          %v2933 = vpack.c.b16 %v2917, %v2917
          %v2934 = vpack.c.b16 %v2918, %v2918
          %v2935 = vpack.c.b16 %v2919, %v2919
          %v2936 = vpack.c.b16 %v2920, %v2920
          %v2937 = vpack.c.b16 %v2921, %v2921
          %v2938 = vpack.c.b16 %v2922, %v2922
          %v2939 = vpack.c.b16 %v2923, %v2923
          %v2940 = vpack.c.b16 %v2924, %v2924
          %v2941 = vpack.c.b16 %v2925, %v2925
          %v2942 = vpack.c.b16 %v2926, %v2926
          %v2943 = vpack.c.b16 %v2927, %v2927
          %v2944 = vpack.c.b16 %v2928, %v2928
          %v2945 = vpack.c.b16 %v2929, %v2929
          %v2946 = vpack.c.b16 %v2930, %v2930
          %v2947 = vpack.c.b16 %v2931, %v2931
          %2964 = vst [vmem:[%s231 + $0x28] sm:$0xf] %v2932
          %2965 = vst [vmem:[%s231 + $0x58] sm:$0xf] %v2933
          %2966 = vst [vmem:[%s231 + $0x88] sm:$0xf] %v2934
          %2967 = vst [vmem:[%s231 + $0xb8] sm:$0xf] %v2935
          %2968 = vst [vmem:[%s231 + $0xe8] sm:$0xf] %v2936
          %2969 = vst [vmem:[%s231 + $0x118] sm:$0xf] %v2937
          %2970 = vst [vmem:[%s231 + $0x148] sm:$0xf] %v2938
          %2971 = vst [vmem:[%s231 + $0x178] sm:$0xf] %v2939
          %2972 = vst [vmem:[%s231 + $0x1a8] sm:$0xf] %v2940
          %2973 = vst [vmem:[%s231 + $0x1d8] sm:$0xf] %v2941
          %2974 = vst [vmem:[%s231 + $0x208] sm:$0xf] %v2942
          %2975 = vst [vmem:[%s231 + $0x238] sm:$0xf] %v2943
          %2976 = vst [vmem:[%s231 + $0x268] sm:$0xf] %v2944
          %2977 = vst [vmem:[%s231 + $0x298] sm:$0xf] %v2945
          %2978 = vst [vmem:[%s231 + $0x2c8] sm:$0xf] %v2946
          %2979 = vst [vmem:[%s231 + $0x2f8] sm:$0xf] %v2947
          %s2980 = sld [smem:[#allocation3 + $0x580]]
          %v2981 = vstv %s2980
          %v2982 = vmul.f32 %v2981, %v906
          %v2983 = vmul.f32 %v2981, %v907
          %v2984 = vmul.f32 %v2981, %v908
          %v2985 = vmul.f32 %v2981, %v909
          %v2986 = vmul.f32 %v2981, %v910
          %v2987 = vmul.f32 %v2981, %v911
          %v2988 = vmul.f32 %v2981, %v912
          %v2989 = vmul.f32 %v2981, %v913
          %v2990 = vmul.f32 %v2981, %v914
          %v2991 = vmul.f32 %v2981, %v915
          %v2992 = vmul.f32 %v2981, %v916
          %v2993 = vmul.f32 %v2981, %v917
          %v2994 = vmul.f32 %v2981, %v918
          %v2995 = vmul.f32 %v2981, %v919
          %v2996 = vmul.f32 %v2981, %v920
          %v2997 = vmul.f32 %v2981, %v921
          %s2998 = sld [smem:[#allocation3 + $0x581]]
          %v2999 = vstv %s2998
          %v3000 = vmul.f32 %v2999, %v923
          %v3001 = vmul.f32 %v2999, %v924
          %v3002 = vmul.f32 %v2999, %v925
          %v3003 = vmul.f32 %v2999, %v926
          %v3004 = vmul.f32 %v2999, %v927
          %v3005 = vmul.f32 %v2999, %v928
          %v3006 = vmul.f32 %v2999, %v929
          %v3007 = vmul.f32 %v2999, %v930
          %v3008 = vmul.f32 %v2999, %v931
          %v3009 = vmul.f32 %v2999, %v932
          %v3010 = vmul.f32 %v2999, %v933
          %v3011 = vmul.f32 %v2999, %v934
          %v3012 = vmul.f32 %v2999, %v935
          %v3013 = vmul.f32 %v2999, %v936
          %v3014 = vmul.f32 %v2999, %v937
          %v3015 = vmul.f32 %v2999, %v938
          %v3016 = vadd.f32 %v2982, %v3000
          %v3017 = vadd.f32 %v2983, %v3001
          %v3018 = vadd.f32 %v2984, %v3002
          %v3019 = vadd.f32 %v2985, %v3003
          %v3020 = vadd.f32 %v2986, %v3004
          %v3021 = vadd.f32 %v2987, %v3005
          %v3022 = vadd.f32 %v2988, %v3006
          %v3023 = vadd.f32 %v2989, %v3007
          %v3024 = vadd.f32 %v2990, %v3008
          %v3025 = vadd.f32 %v2991, %v3009
          %v3026 = vadd.f32 %v2992, %v3010
          %v3027 = vadd.f32 %v2993, %v3011
          %v3028 = vadd.f32 %v2994, %v3012
          %v3029 = vadd.f32 %v2995, %v3013
          %v3030 = vadd.f32 %v2996, %v3014
          %v3031 = vadd.f32 %v2997, %v3015
          %s3032 = sld [smem:[#allocation3 + $0x582]]
          %v3033 = vstv %s3032
          %v3034 = vmul.f32 %v3033, %v940
          %v3035 = vmul.f32 %v3033, %v941
          %v3036 = vmul.f32 %v3033, %v942
          %v3037 = vmul.f32 %v3033, %v943
          %v3038 = vmul.f32 %v3033, %v944
          %v3039 = vmul.f32 %v3033, %v945
          %v3040 = vmul.f32 %v3033, %v946
          %v3041 = vmul.f32 %v3033, %v947
          %v3042 = vmul.f32 %v3033, %v948
          %v3043 = vmul.f32 %v3033, %v949
          %v3044 = vmul.f32 %v3033, %v950
          %v3045 = vmul.f32 %v3033, %v951
          %v3046 = vmul.f32 %v3033, %v952
          %v3047 = vmul.f32 %v3033, %v953
          %v3048 = vmul.f32 %v3033, %v954
          %v3049 = vmul.f32 %v3033, %v955
          %v3050 = vadd.f32 %v3016, %v3034
          %v3051 = vadd.f32 %v3017, %v3035
          %v3052 = vadd.f32 %v3018, %v3036
          %v3053 = vadd.f32 %v3019, %v3037
          %v3054 = vadd.f32 %v3020, %v3038
          %v3055 = vadd.f32 %v3021, %v3039
          %v3056 = vadd.f32 %v3022, %v3040
          %v3057 = vadd.f32 %v3023, %v3041
          %v3058 = vadd.f32 %v3024, %v3042
          %v3059 = vadd.f32 %v3025, %v3043
          %v3060 = vadd.f32 %v3026, %v3044
          %v3061 = vadd.f32 %v3027, %v3045
          %v3062 = vadd.f32 %v3028, %v3046
          %v3063 = vadd.f32 %v3029, %v3047
          %v3064 = vadd.f32 %v3030, %v3048
          %v3065 = vadd.f32 %v3031, %v3049
          %s3066 = sld [smem:[#allocation3 + $0x583]]
          %v3067 = vstv %s3066
          %v3068 = vadd.f32 %v3050, %v3067
          %v3069 = vadd.f32 %v3051, %v3067
          %v3070 = vadd.f32 %v3052, %v3067
          %v3071 = vadd.f32 %v3053, %v3067
          %v3072 = vadd.f32 %v3054, %v3067
          %v3073 = vadd.f32 %v3055, %v3067
          %v3074 = vadd.f32 %v3056, %v3067
          %v3075 = vadd.f32 %v3057, %v3067
          %v3076 = vadd.f32 %v3058, %v3067
          %v3077 = vadd.f32 %v3059, %v3067
          %v3078 = vadd.f32 %v3060, %v3067
          %v3079 = vadd.f32 %v3061, %v3067
          %v3080 = vadd.f32 %v3062, %v3067
          %v3081 = vadd.f32 %v3063, %v3067
          %v3082 = vadd.f32 %v3064, %v3067
          %v3083 = vadd.f32 %v3065, %v3067
          %v3084 = vpack.c.bf16 %v3069, %v3068
          %v3085 = vpack.c.bf16 %v3071, %v3070
          %v3086 = vpack.c.bf16 %v3073, %v3072
          %v3087 = vpack.c.bf16 %v3075, %v3074
          %v3088 = vpack.c.bf16 %v3077, %v3076
          %v3089 = vpack.c.bf16 %v3079, %v3078
          %v3090 = vpack.c.bf16 %v3081, %v3080
          %v3091 = vpack.c.bf16 %v3083, %v3082
          %v3100 = vunpack.c.l.b16 %v3084
          %v3101 = vunpack.c.h.b16 %v3084
          %v3102 = vunpack.c.l.b16 %v3085
          %v3103 = vunpack.c.h.b16 %v3085
          %v3104 = vunpack.c.l.b16 %v3086
          %v3105 = vunpack.c.h.b16 %v3086
          %v3106 = vunpack.c.l.b16 %v3087
          %v3107 = vunpack.c.h.b16 %v3087
          %v3108 = vunpack.c.l.b16 %v3088
          %v3109 = vunpack.c.h.b16 %v3088
          %v3110 = vunpack.c.l.b16 %v3089
          %v3111 = vunpack.c.h.b16 %v3089
          %v3112 = vunpack.c.l.b16 %v3090
          %v3113 = vunpack.c.h.b16 %v3090
          %v3114 = vunpack.c.l.b16 %v3091
          %v3115 = vunpack.c.h.b16 %v3091
          %v3116 = vpack.c.b16 %v3100, %v3100
          %v3117 = vpack.c.b16 %v3101, %v3101
          %v3118 = vpack.c.b16 %v3102, %v3102
          %v3119 = vpack.c.b16 %v3103, %v3103
          %v3120 = vpack.c.b16 %v3104, %v3104
          %v3121 = vpack.c.b16 %v3105, %v3105
          %v3122 = vpack.c.b16 %v3106, %v3106
          %v3123 = vpack.c.b16 %v3107, %v3107
          %v3124 = vpack.c.b16 %v3108, %v3108
          %v3125 = vpack.c.b16 %v3109, %v3109
          %v3126 = vpack.c.b16 %v3110, %v3110
          %v3127 = vpack.c.b16 %v3111, %v3111
          %v3128 = vpack.c.b16 %v3112, %v3112
          %v3129 = vpack.c.b16 %v3113, %v3113
          %v3130 = vpack.c.b16 %v3114, %v3114
          %v3131 = vpack.c.b16 %v3115, %v3115
          %3148 = vst [vmem:[%s231 + $0x2c] sm:$0xf] %v3116
          %3149 = vst [vmem:[%s231 + $0x5c] sm:$0xf] %v3117
          %3150 = vst [vmem:[%s231 + $0x8c] sm:$0xf] %v3118
          %3151 = vst [vmem:[%s231 + $0xbc] sm:$0xf] %v3119
          %3152 = vst [vmem:[%s231 + $0xec] sm:$0xf] %v3120
          %3153 = vst [vmem:[%s231 + $0x11c] sm:$0xf] %v3121
          %3154 = vst [vmem:[%s231 + $0x14c] sm:$0xf] %v3122
          %3155 = vst [vmem:[%s231 + $0x17c] sm:$0xf] %v3123
          %3156 = vst [vmem:[%s231 + $0x1ac] sm:$0xf] %v3124
          %3157 = vst [vmem:[%s231 + $0x1dc] sm:$0xf] %v3125
          %3158 = vst [vmem:[%s231 + $0x20c] sm:$0xf] %v3126
          %3159 = vst [vmem:[%s231 + $0x23c] sm:$0xf] %v3127
          %3160 = vst [vmem:[%s231 + $0x26c] sm:$0xf] %v3128
          %3161 = vst [vmem:[%s231 + $0x29c] sm:$0xf] %v3129
          %3162 = vst [vmem:[%s231 + $0x2cc] sm:$0xf] %v3130
          %3163 = vst [vmem:[%s231 + $0x2fc] sm:$0xf] %v3131
        $region44: #{zero_net_forward.2} parent=31 // pred_fallthru
          _
        %p3164 = scmp.lt.s32.totalorder %s19, 1
        %s3165 = scalar_select %p3164, %s19, 1
        %s3166 = smul.addr %s3165, 192
        %s3167 = smul.addr %s3166, 4
        %s3168 = scalar_lea.vmem %s3, %s3167
        // Predicated region
        $region45: #{zero_net_forward.2} parent=31 // pred_check
          %p3169 = pneg %p120
        $region46: #{zero_net_forward.2} parent=31 // pred_check_branch
          %3171 = sbr.rel (%p3169) target = $region48
        $region47: #{zero_net_forward.2} parent=31 // pred_region
          _
        $region48: #{zero_net_forward.2} parent=31 // pred_fallthru
          _
      $region32: #{zero_net_forward.2} parent=5 // pred_fallthru
        _
      %p3172 = scmp.le.s32.totalorder 2, %s10
      // Predicated region
      $region49: #{zero_net_forward.2} parent=5 // pred_check
        %p3173 = pneg %p3172
      $region50: #{zero_net_forward.2} parent=5 // pred_check_branch
        %3175 = sbr.rel (%p3173) target = $region52
      $region51: #{zero_net_forward.2} parent=5 // pred_region
        %s3176 = ssub.s32 %s10, 2
        // Predicated region
        $region53: #{zero_net_forward.2} parent=51 // pred_check
          %p3177 = pneg %p126
        $region54: #{zero_net_forward.2} parent=51 // pred_check_branch
          %3179 = sbr.rel (%p3177) target = $region56
        $region55: #{zero_net_forward.2} parent=51 // pred_region
          %p3180 = scmp.lt.s32.totalorder %s21, 1
          %s3181 = scalar_select %p3180, %s21, 1
          %s3182 = smul.addr %s3181, 192
          %s3183 = smul.addr %s3182, 4
          %s3184 = scalar_lea.vmem %s3, %s3183
        $region56: #{zero_net_forward.2} parent=51 // pred_fallthru
          _
      $region52: #{zero_net_forward.2} parent=5 // pred_fallthru
        _
    $region6: #{zero_net_forward.2} parent=1 // loop_footer
      %s14 = sadd.s32 1, %s10
    $region7: #{zero_net_forward.2} parent=1 // loop_footer_branch
      %9 = sbr.rel target = $region3
    $region8: #{zero_net_forward.2} parent=1 // loop_exit
      _
    %3185 = vsyncpa [#allocation4], 1
    %s3186 = scalar_lea.sflag [#allocation4], 1
    %3187 = vsyncpa %s3186, 1

</llo_original>
